<compile_context>
chip_gen: v6e
topology: v6e:2x2x1
jax: 0.10.0
libtpu: 0.0.40
codegen_flags: <defaults>
</compile_context>

<pallas_src>
import jax
import jax.numpy as jnp
from jax.experimental import pallas as pl
from jax.experimental.pallas import tpu as pltpu


# --------------------------------------------------------------------------------------
# Kernel
# --------------------------------------------------------------------------------------
def _res_horizon_kernel(x_ref, xt_ref, xb_ref, w1_ref, w2_ref, w3_ref, shift_ref,
                        o_ref, slab_ref):
    # x_ref    : (1, TH, W, C) f32   rows owned by this tile (also the residual input)
    # xt_ref   : (1, 1,  W, C) f32   row above the tile (clamped at the image edge)
    # xb_ref   : (1, 1,  W, C) f32   row below the tile (clamped at the image edge)
    # w1_ref   : (C, C)   bf16       1x1 conv, BN+bias folded
    # w2_ref   : (9, C, C) bf16      3x3 conv taps (dy*3+dx), BN+bias folded
    # w3_ref   : (C, C)   bf16       1x1 conv, BN+bias folded
    # shift_ref: (3, C)   f32        per-stage additive shift (bias*scale + BN shift)
    # o_ref    : (1, TH, W, C) f32   output rows
    # slab_ref : (3, TH+2, W, C) bf16 scratch: dx-shifted stage-1 activations
    _, TH, W, C = o_ref.shape
    t = pl.program_id(1)
    nt = pl.num_programs(1)

    w1 = w1_ref[...]
    sh1 = shift_ref[0:1, :]
    sh2 = shift_ref[1:2, :]
    sh3 = shift_ref[2:3, :]

    # ---- stage 1: 1x1 conv (+folded BN/bias) + ReLU over rows [row0-1, row0+TH+1)
    #      as ONE matmul (halo rows folded in) ---------------------------------------------
    x_all = jnp.concatenate([xt_ref[0], x_ref[0], xb_ref[0]], axis=0)       # (TH+2, W, C)
    h_all = jnp.dot(x_all.reshape((TH + 2) * W, C).astype(jnp.bfloat16), w1,
                    preferred_element_type=jnp.float32)
    h_all = jnp.maximum(h_all + sh1, 0.0).reshape(TH + 2, W, C)

    # zero halo rows that fall outside the image (implements the 3x3 conv's zero padding)
    rid = jax.lax.broadcasted_iota(jnp.int32, (TH + 2, 1, 1), 0)
    valid = jnp.logical_and(jnp.logical_or(rid != 0, t > 0),
                            jnp.logical_or(rid != TH + 1, t < nt - 1))
    h_b = jnp.where(valid, h_all, 0.0).astype(jnp.bfloat16)                 # (TH+2, W, C)

    # ---- stage 2: 3x3 conv (+folded BN/bias) + ReLU = 3 dx-shifted bf16 slabs,
    #      9 aligned-view MXU matmuls, pure dot-accumulate chain ---------------------------
    zcol = jnp.zeros((TH + 2, 1, C), jnp.bfloat16)
    slab_ref[0] = jnp.concatenate([zcol, h_b[:, :W - 1, :]], axis=1)        # dx = 0
    slab_ref[1] = h_b                                                       # dx = 1
    slab_ref[2] = jnp.concatenate([h_b[:, 1:, :], zcol], axis=1)            # dx = 2

    acc = None
    for dy in range(3):                                                     # static unroll
        for dx in range(3):
            patch = slab_ref[dx, dy:dy + TH, :, :].reshape(TH * W, C)       # aligned view
            part = jnp.dot(patch, w2_ref[dy * 3 + dx],
                           preferred_element_type=jnp.float32)
            acc = part if acc is None else acc + part
    h2 = jnp.maximum(acc + sh2, 0.0)

    # ---- stage 3: 1x1 conv (+folded BN/bias), residual add (re-read x late), ReLU --------
    e1 = jnp.dot(h2.astype(jnp.bfloat16), w3_ref[...],
                 preferred_element_type=jnp.float32) + sh3
    x_res = x_ref[0].reshape(TH * W, C)
    o_ref[0] = jnp.maximum(x_res + e1, 0.0).reshape(TH, W, C)


# --------------------------------------------------------------------------------------
# Host-side parameter folding / packing (bias + BN folded into weights, channel padding)
# --------------------------------------------------------------------------------------
def _fold_and_pack(params, c_pad):
    (w1, b1, s1, t1, w2, b2, s2, t2, w3, b3, s3, t3) = params

    def pad_mat(w):
        return jnp.pad(w, ((0, c_pad - w.shape[0]), (0, c_pad - w.shape[1])))

    def pad_vec(v):
        return jnp.pad(v, (0, c_pad - v.shape[0]))

    w1f = pad_mat(w1 * s1[None, :]).astype(jnp.bfloat16)
    w3f = pad_mat(w3 * s3[None, :]).astype(jnp.bfloat16)
    w2f = w2 * s2[None, None, None, :]
    w2f = jnp.pad(w2f, ((0, 0), (0, 0),
                        (0, c_pad - w2.shape[2]), (0, c_pad - w2.shape[3])))
    w2f = w2f.reshape(9, c_pad, c_pad).astype(jnp.bfloat16)
    shifts = jnp.stack([pad_vec(b1 * s1 + t1),
                        pad_vec(b2 * s2 + t2),
                        pad_vec(b3 * s3 + t3)], axis=0).astype(jnp.float32)
    return w1f, w2f, w3f, shifts


# --------------------------------------------------------------------------------------
# VMEM budgeting / adaptive tile height
# --------------------------------------------------------------------------------------
def _vmem_budget_bytes():
    cap = 64 * 1024 * 1024                      # conservative (v7x per-TC) fallback
    try:
        cap = int(pltpu.get_tpu_info().vmem_capacity_bytes)
    except Exception:
        pass
    return max(32 * 1024 * 1024, min(int(cap * 0.75), 96 * 1024 * 1024))


def _estimate_vmem_bytes(tile_h, W, CP):
    f32, bf16, dbl = 4, 2, 2                    # dbl = Pallas double-buffering per block
    blk = tile_h * W * CP
    x_main = dbl * blk * f32
    x_halo = dbl * 2 * W * CP * f32
    out = dbl * blk * f32
    weights = dbl * (11 * CP * CP * bf16 + 3 * CP * f32)
    slab = 3 * (tile_h + 2) * W * CP * bf16
    temps = 4 * (tile_h + 2) * W * CP * f32     # h_all / acc / concat temps, margin
    return x_main + x_halo + out + weights + slab + temps


def _pick_tile_h(H, W, CP, budget):
    divisors = [d for d in range(1, H + 1) if H % d == 0]
    for th in sorted(divisors, reverse=True):
        if _estimate_vmem_bytes(th, W, CP) <= budget:
            return th
    return divisors[0]


# --------------------------------------------------------------------------------------
# Wrappers
# --------------------------------------------------------------------------------------
def res_horizon_pallas_nhwc(x_nhwc, params, *, tile_h=None, pad_channels=True):
    """Channels-last entry point (preferred: no NCHW<->NHWC HBM round trips)."""
    N, H, W, C = x_nhwc.shape
    assert params[0].shape[1] == C, "residual add requires in_ch == out_ch"

    if pad_channels:
        CP = max(128, ((C + 127) // 128) * 128)   # lane-dense channel width
    else:
        CP = C
    # TODO(synk): at small production C, fuse the pad/slice into adjacent ops (or run at
    # natural C) instead of paying CP/C extra HBM traffic in the wrapper.

    budget = _vmem_budget_bytes()
    if tile_h is None:
        tile_h = _pick_tile_h(H, W, CP, budget)
    assert H % tile_h == 0
    TH = tile_h

    w1p, w2p, w3p, shifts = _fold_and_pack(params, CP)
    xp = x_nhwc if CP == C else jnp.pad(x_nhwc, ((0, 0), (0, 0), (0, 0), (0, CP - C)))

    grid = (N, H // TH)
    in_specs = [
        pl.BlockSpec((1, TH, W, CP), lambda b, t: (b, t, 0, 0)),                           # main rows
        pl.BlockSpec((1, 1, W, CP), lambda b, t: (b, jnp.maximum(t * TH - 1, 0), 0, 0)),   # top halo row
        pl.BlockSpec((1, 1, W, CP), lambda b, t: (b, jnp.minimum(t * TH + TH, H - 1), 0, 0)),  # bottom halo row
        pl.BlockSpec((CP, CP), lambda b, t: (0, 0)),
        pl.BlockSpec((9, CP, CP), lambda b, t: (0, 0, 0)),
        pl.BlockSpec((CP, CP), lambda b, t: (0, 0)),
        pl.BlockSpec((3, CP), lambda b, t: (0, 0)),
    ]
    out_spec = pl.BlockSpec((1, TH, W, CP), lambda b, t: (b, t, 0, 0))

    y = pl.pallas_call(
        _res_horizon_kernel,
        out_shape=jax.ShapeDtypeStruct((N, H, W, CP), jnp.float32),
        grid_spec=pltpu.PrefetchScalarGridSpec(
            num_scalar_prefetch=0,
            grid=grid,
            in_specs=in_specs,
            out_specs=out_spec,
            scratch_shapes=[pltpu.VMEM((3, TH + 2, W, CP), jnp.bfloat16)],
        ),
        compiler_params=pltpu.CompilerParams(
            dimension_semantics=("parallel", "parallel"),
            vmem_limit_bytes=budget,
        ),
    )(xp, xp, xp, w1p, w2p, w3p, shifts)

    return y if CP == C else y[..., :C]


def res_horizon_pallas(x_nchw, params, *, tile_h=None):
    """PyTorch-style NCHW in / NCHW out."""
    x = jnp.transpose(x_nchw, (0, 2, 3, 1))
    y = res_horizon_pallas_nhwc(x, params, tile_h=tile_h)
    return jnp.transpose(y, (0, 3, 1, 2))


# --------------------------------------------------------------------------------------
# Synthetic parameters + pure-JAX f32 reference
# --------------------------------------------------------------------------------------
def make_params(key, in_ch, out_ch, eps=1e-5):
    """Conv weights in (kh,kw,Cin,Cout)/(Cin,Cout) layout; BN folded to scale/shift (inference)."""
    ks = jax.random.split(key, 18)

    def bn_fold(kg, kb, km, kv, c):
        gamma = 1.0 + 0.1 * jax.random.normal(kg, (c,), jnp.float32)
        beta = 0.1 * jax.random.normal(kb, (c,), jnp.float32)
        mean = 0.1 * jax.random.normal(km, (c,), jnp.float32)
        var = 1.0 + 0.1 * jax.random.uniform(kv, (c,), jnp.float32)
        scale = gamma / jnp.sqrt(var + eps)
        shift = beta - mean * scale
        return scale, shift

    w1 = 0.3 * jax.random.normal(ks[0], (in_ch, out_ch), jnp.float32)
    b1 = 0.1 * jax.random.normal(ks[1], (out_ch,), jnp.float32)
    s1, t1 = bn_fold(ks[2], ks[3], ks[4], ks[5], out_ch)

    w2 = 0.1 * jax.random.normal(ks[6], (3, 3, out_ch, out_ch), jnp.float32)
    b2 = 0.1 * jax.random.normal(ks[7], (out_ch,), jnp.float32)
    s2, t2 = bn_fold(ks[8], ks[9], ks[10], ks[11], out_ch)

    w3 = 0.3 * jax.random.normal(ks[12], (out_ch, out_ch), jnp.float32)
    b3 = 0.1 * jax.random.normal(ks[13], (out_ch,), jnp.float32)
    s3, t3 = bn_fold(ks[14], ks[15], ks[16], ks[17], out_ch)

    return (w1, b1, s1, t1, w2, b2, s2, t2, w3, b3, s3, t3)


def res_horizon_reference(x_nchw, params):
    """Pure-JAX f32 reference (same math as the PyTorch module in inference mode)."""
    (w1, b1, s1, t1, w2, b2, s2, t2, w3, b3, s3, t3) = params
    N, C, H, W = x_nchw.shape
    Co = w1.shape[1]
    x = jnp.transpose(x_nchw, (0, 2, 3, 1)).reshape(N, H * W, C)

    h = jnp.maximum((jnp.einsum('npc,cd->npd', x, w1) + b1) * s1 + t1, 0.0)
    hp = jnp.pad(h.reshape(N, H, W, Co), ((0, 0), (1, 1), (1, 1), (0, 0)))
    acc = jnp.zeros((N, H * W, Co), jnp.float32)
    for dy in range(3):
        for dx in range(3):
            patch = hp[:, dy:dy + H, dx:dx + W, :].reshape(N, H * W, Co)
            acc = acc + jnp.einsum('npc,cd->npd', patch, w2[dy, dx])
    acc = jnp.maximum((acc + b2) * s2 + t2, 0.0)
    e1 = (jnp.einsum('npc,cd->npd', acc, w3) + b3) * s3 + t3
    out = jnp.maximum(x + e1, 0.0).reshape(N, H, W, Co)
    return jnp.transpose(out, (0, 3, 1, 2))


# --------------------------------------------------------------------------------------
if __name__ == "__main__":
    key = jax.random.PRNGKey(0)
    k_x, k_p = jax.random.split(key)

    N, C, H, W = 2, 8, 16, 16            # residual add requires in_ch == out_ch
    x = jax.random.normal(k_x, (N, C, H, W), jnp.float32)
    params = make_params(k_p, C, C)

    fwd = jax.jit(res_horizon_pallas)
    y = jax.block_until_ready(fwd(x, params))

    y_ref = res_horizon_reference(x, params)
    assert y.shape == (N, C, H, W)
    # MXU operands are bf16 (f32 accumulate), so tolerance vs the f32 reference is relaxed.
    assert jnp.allclose(y, y_ref, atol=1e-1, rtol=1e-1), "mismatch vs reference"

    print("KERNEL_OK")
</pallas_src>

<mosaic_0001>
module attributes {stable_mosaic.version = 11 : i64} {
  func.func @_res_horizon_kernel(%arg0: i32, %arg1: i32, %arg2: memref<1x16x16x128xf32, #tpu.memory_space<vmem>>, %arg3: memref<1x1x16x128xf32, #tpu.memory_space<vmem>>, %arg4: memref<1x1x16x128xf32, #tpu.memory_space<vmem>>, %arg5: memref<128x128xbf16, #tpu.memory_space<vmem>>, %arg6: memref<9x128x128xbf16, #tpu.memory_space<vmem>>, %arg7: memref<128x128xbf16, #tpu.memory_space<vmem>>, %arg8: memref<3x128xf32, #tpu.memory_space<vmem>>, %arg9: memref<1x16x16x128xf32, #tpu.memory_space<vmem>>, %arg10: memref<3x18x16x128xbf16, #tpu.memory_space<vmem>>) attributes {dimension_semantics = [#tpu.dimension_semantics<parallel>, #tpu.dimension_semantics<parallel>], iteration_bounds = array<i64: 2, 1>, scalar_prefetch = 0 : i64, scratch_operands = 1 : i64, tpu.core_type = #tpu.core_type<tc>, window_params = [{transform_indices = @transform_0, window_bounds = array<i64: 1, 16, 16, 128>}, {transform_indices = @transform_1, window_bounds = array<i64: 1, 1, 16, 128>}, {transform_indices = @transform_2, window_bounds = array<i64: 1, 1, 16, 128>}, {pipeline_mode = #tpu.pipeline_mode<synchronous>, transform_indices = @transform_3, window_bounds = array<i64: 128, 128>}, {pipeline_mode = #tpu.pipeline_mode<synchronous>, transform_indices = @transform_4, window_bounds = array<i64: 9, 128, 128>}, {pipeline_mode = #tpu.pipeline_mode<synchronous>, transform_indices = @transform_5, window_bounds = array<i64: 128, 128>}, {pipeline_mode = #tpu.pipeline_mode<synchronous>, transform_indices = @transform_6, window_bounds = array<i64: 3, 128>}, {transform_indices = @transform_7, window_bounds = array<i64: 1, 16, 16, 128>}]} {
    %c0 = arith.constant 0 : index
    %c0_0 = arith.constant 0 : index
    %0 = vector.load %arg5[%c0, %c0_0] : memref<128x128xbf16, #tpu.memory_space<vmem>>, vector<128x128xbf16>
    %c0_1 = arith.constant 0 : index
    %c0_2 = arith.constant 0 : index
    %1 = vector.load %arg8[%c0_1, %c0_2] : memref<3x128xf32, #tpu.memory_space<vmem>>, vector<1x128xf32>
    %c1 = arith.constant 1 : index
    %c0_3 = arith.constant 0 : index
    %2 = vector.load %arg8[%c1, %c0_3] : memref<3x128xf32, #tpu.memory_space<vmem>>, vector<1x128xf32>
    %c2 = arith.constant 2 : index
    %c0_4 = arith.constant 0 : index
    %3 = vector.load %arg8[%c2, %c0_4] : memref<3x128xf32, #tpu.memory_space<vmem>>, vector<1x128xf32>
    %c0_5 = arith.constant 0 : index
    %c0_6 = arith.constant 0 : index
    %c0_7 = arith.constant 0 : index
    %c0_8 = arith.constant 0 : index
    %4 = vector.load %arg3[%c0_5, %c0_6, %c0_7, %c0_8] : memref<1x1x16x128xf32, #tpu.memory_space<vmem>>, vector<1x1x16x128xf32>
    %5 = vector.shape_cast %4 : vector<1x1x16x128xf32> to vector<1x16x128xf32>
    %c0_9 = arith.constant 0 : index
    %c0_10 = arith.constant 0 : index
    %c0_11 = arith.constant 0 : index
    %c0_12 = arith.constant 0 : index
    %6 = vector.load %arg2[%c0_9, %c0_10, %c0_11, %c0_12] : memref<1x16x16x128xf32, #tpu.memory_space<vmem>>, vector<1x16x16x128xf32>
    %7 = vector.shape_cast %6 : vector<1x16x16x128xf32> to vector<16x16x128xf32>
    %c0_13 = arith.constant 0 : index
    %c0_14 = arith.constant 0 : index
    %c0_15 = arith.constant 0 : index
    %c0_16 = arith.constant 0 : index
    %8 = vector.load %arg4[%c0_13, %c0_14, %c0_15, %c0_16] : memref<1x1x16x128xf32, #tpu.memory_space<vmem>>, vector<1x1x16x128xf32>
    %9 = vector.shape_cast %8 : vector<1x1x16x128xf32> to vector<1x16x128xf32>
    %10 = tpu.concatenate %5, %7, %9 in 0 : vector<1x16x128xf32>, vector<16x16x128xf32>, vector<1x16x128xf32> -> vector<18x16x128xf32>
    %11 = vector.shape_cast %10 : vector<18x16x128xf32> to vector<288x128xf32>
    %12 = arith.truncf %11 : vector<288x128xf32> to vector<288x128xbf16>
    %cst = arith.constant dense<0.000000e+00> : vector<288x128xf32>
    %13 = tpu.matmul %12, %0, %cst {dimension_numbers = #tpu.dot_dimension_numbers<[1], [0], [0], [1], [0, 0, 1, 1], [], []>} : vector<288x128xbf16>, vector<128x128xbf16>, vector<288x128xf32> -> vector<288x128xf32>
    %14 = vector.broadcast %1 : vector<1x128xf32> to vector<288x128xf32>
    %15 = arith.addf %13, %14 : vector<288x128xf32>
    %cst_17 = arith.constant 0.000000e+00 : f32
    %16 = vector.broadcast %cst_17 : f32 to vector<288x128xf32>
    %17 = arith.maximumf %15, %16 : vector<288x128xf32>
    %18 = vector.shape_cast %17 : vector<288x128xf32> to vector<18x16x128xf32>
    %19 = tpu.iota {dimensions = array<i32: 0>} : vector<18x1x1xi32>
    %c0_i32 = arith.constant 0 : i32
    %20 = vector.broadcast %c0_i32 : i32 to vector<18x1x1xi32>
    %21 = arith.cmpi ne, %19, %20 : vector<18x1x1xi32>
    %c0_i32_18 = arith.constant 0 : i32
    %22 = arith.cmpi sgt, %arg1, %c0_i32_18 : i32
    %23 = vector.broadcast %22 : i1 to vector<18x1x1xi1>
    %24 = arith.ori %21, %23 : vector<18x1x1xi1>
    %c17_i32 = arith.constant 17 : i32
    %25 = vector.broadcast %c17_i32 : i32 to vector<18x1x1xi32>
    %26 = arith.cmpi ne, %19, %25 : vector<18x1x1xi32>
    %c0_i32_19 = arith.constant 0 : i32
    %27 = arith.cmpi slt, %arg1, %c0_i32_19 : i32
    %28 = vector.broadcast %27 : i1 to vector<18x1x1xi1>
    %29 = arith.ori %26, %28 : vector<18x1x1xi1>
    %30 = arith.andi %24, %29 : vector<18x1x1xi1>
    %cst_20 = arith.constant 0.000000e+00 : f32
    %31 = vector.shape_cast %30 : vector<18x1x1xi1> to vector<18x1x1xi1>
    %32 = vector.broadcast %31 : vector<18x1x1xi1> to vector<18x16x128xi1>
    %33 = vector.broadcast %cst_20 : f32 to vector<18x16x128xf32>
    %34 = arith.select %32, %18, %33 : vector<18x16x128xi1>, vector<18x16x128xf32>
    %35 = arith.truncf %34 : vector<18x16x128xf32> to vector<18x16x128xbf16>
    %cst_21 = arith.constant 0.000000e+00 : bf16
    %36 = vector.broadcast %cst_21 : bf16 to vector<18x1x128xbf16>
    %37 = vector.extract_strided_slice %35 {offsets = [0, 0, 0], sizes = [18, 15, 128], strides = [1, 1, 1]} : vector<18x16x128xbf16> to vector<18x15x128xbf16>
    %38 = tpu.concatenate %36, %37 in 1 : vector<18x1x128xbf16>, vector<18x15x128xbf16> -> vector<18x16x128xbf16>
    %c0_22 = arith.constant 0 : index
    %c0_23 = arith.constant 0 : index
    %c0_24 = arith.constant 0 : index
    %c0_25 = arith.constant 0 : index
    %39 = vector.load %arg10[%c0_22, %c0_23, %c0_24, %c0_25] : memref<3x18x16x128xbf16, #tpu.memory_space<vmem>>, vector<1x18x16x128xbf16>
    %40 = vector.shape_cast %39 : vector<1x18x16x128xbf16> to vector<18x16x128xbf16>
    %41 = vector.shape_cast %38 : vector<18x16x128xbf16> to vector<1x18x16x128xbf16>
    tpu.vector_store %arg10[%c0_22, %c0_23, %c0_24, %c0_25], %41 {strides = array<i32>} : memref<3x18x16x128xbf16, #tpu.memory_space<vmem>>, vector<1x18x16x128xbf16>,
    %c1_26 = arith.constant 1 : index
    %c0_27 = arith.constant 0 : index
    %c0_28 = arith.constant 0 : index
    %c0_29 = arith.constant 0 : index
    %42 = vector.load %arg10[%c1_26, %c0_27, %c0_28, %c0_29] : memref<3x18x16x128xbf16, #tpu.memory_space<vmem>>, vector<1x18x16x128xbf16>
    %43 = vector.shape_cast %42 : vector<1x18x16x128xbf16> to vector<18x16x128xbf16>
    %44 = vector.shape_cast %35 : vector<18x16x128xbf16> to vector<1x18x16x128xbf16>
    tpu.vector_store %arg10[%c1_26, %c0_27, %c0_28, %c0_29], %44 {strides = array<i32>} : memref<3x18x16x128xbf16, #tpu.memory_space<vmem>>, vector<1x18x16x128xbf16>,
    %45 = vector.extract_strided_slice %35 {offsets = [0, 1, 0], sizes = [18, 15, 128], strides = [1, 1, 1]} : vector<18x16x128xbf16> to vector<18x15x128xbf16>
    %46 = tpu.concatenate %45, %36 in 1 : vector<18x15x128xbf16>, vector<18x1x128xbf16> -> vector<18x16x128xbf16>
    %c2_30 = arith.constant 2 : index
    %c0_31 = arith.constant 0 : index
    %c0_32 = arith.constant 0 : index
    %c0_33 = arith.constant 0 : index
    %47 = vector.load %arg10[%c2_30, %c0_31, %c0_32, %c0_33] : memref<3x18x16x128xbf16, #tpu.memory_space<vmem>>, vector<1x18x16x128xbf16>
    %48 = vector.shape_cast %47 : vector<1x18x16x128xbf16> to vector<18x16x128xbf16>
    %49 = vector.shape_cast %46 : vector<18x16x128xbf16> to vector<1x18x16x128xbf16>
    tpu.vector_store %arg10[%c2_30, %c0_31, %c0_32, %c0_33], %49 {strides = array<i32>} : memref<3x18x16x128xbf16, #tpu.memory_space<vmem>>, vector<1x18x16x128xbf16>,
    %c0_34 = arith.constant 0 : index
    %c0_35 = arith.constant 0 : index
    %c0_36 = arith.constant 0 : index
    %c0_37 = arith.constant 0 : index
    %50 = vector.load %arg10[%c0_34, %c0_35, %c0_36, %c0_37] : memref<3x18x16x128xbf16, #tpu.memory_space<vmem>>, vector<1x16x16x128xbf16>
    %51 = vector.shape_cast %50 : vector<1x16x16x128xbf16> to vector<16x16x128xbf16>
    %52 = vector.shape_cast %51 : vector<16x16x128xbf16> to vector<256x128xbf16>
    %c0_38 = arith.constant 0 : index
    %c0_39 = arith.constant 0 : index
    %c0_40 = arith.constant 0 : index
    %53 = vector.load %arg6[%c0_38, %c0_39, %c0_40] : memref<9x128x128xbf16, #tpu.memory_space<vmem>>, vector<1x128x128xbf16>
    %54 = vector.shape_cast %53 : vector<1x128x128xbf16> to vector<128x128xbf16>
    %cst_41 = arith.constant dense<0.000000e+00> : vector<256x128xf32>
    %55 = tpu.matmul %52, %54, %cst_41 {dimension_numbers = #tpu.dot_dimension_numbers<[1], [0], [0], [1], [0, 0, 1, 1], [], []>} : vector<256x128xbf16>, vector<128x128xbf16>, vector<256x128xf32> -> vector<256x128xf32>
    %c1_42 = arith.constant 1 : index
    %c0_43 = arith.constant 0 : index
    %c0_44 = arith.constant 0 : index
    %c0_45 = arith.constant 0 : index
    %56 = vector.load %arg10[%c1_42, %c0_43, %c0_44, %c0_45] : memref<3x18x16x128xbf16, #tpu.memory_space<vmem>>, vector<1x16x16x128xbf16>
    %57 = vector.shape_cast %56 : vector<1x16x16x128xbf16> to vector<16x16x128xbf16>
    %58 = vector.shape_cast %57 : vector<16x16x128xbf16> to vector<256x128xbf16>
    %c1_46 = arith.constant 1 : index
    %c0_47 = arith.constant 0 : index
    %c0_48 = arith.constant 0 : index
    %59 = vector.load %arg6[%c1_46, %c0_47, %c0_48] : memref<9x128x128xbf16, #tpu.memory_space<vmem>>, vector<1x128x128xbf16>
    %60 = vector.shape_cast %59 : vector<1x128x128xbf16> to vector<128x128xbf16>
    %cst_49 = arith.constant dense<0.000000e+00> : vector<256x128xf32>
    %61 = tpu.matmul %58, %60, %cst_49 {dimension_numbers = #tpu.dot_dimension_numbers<[1], [0], [0], [1], [0, 0, 1, 1], [], []>} : vector<256x128xbf16>, vector<128x128xbf16>, vector<256x128xf32> -> vector<256x128xf32>
    %62 = arith.addf %55, %61 : vector<256x128xf32>
    %c2_50 = arith.constant 2 : index
    %c0_51 = arith.constant 0 : index
    %c0_52 = arith.constant 0 : index
    %c0_53 = arith.constant 0 : index
    %63 = vector.load %arg10[%c2_50, %c0_51, %c0_52, %c0_53] : memref<3x18x16x128xbf16, #tpu.memory_space<vmem>>, vector<1x16x16x128xbf16>
    %64 = vector.shape_cast %63 : vector<1x16x16x128xbf16> to vector<16x16x128xbf16>
    %65 = vector.shape_cast %64 : vector<16x16x128xbf16> to vector<256x128xbf16>
    %c2_54 = arith.constant 2 : index
    %c0_55 = arith.constant 0 : index
    %c0_56 = arith.constant 0 : index
    %66 = vector.load %arg6[%c2_54, %c0_55, %c0_56] : memref<9x128x128xbf16, #tpu.memory_space<vmem>>, vector<1x128x128xbf16>
    %67 = vector.shape_cast %66 : vector<1x128x128xbf16> to vector<128x128xbf16>
    %cst_57 = arith.constant dense<0.000000e+00> : vector<256x128xf32>
    %68 = tpu.matmul %65, %67, %cst_57 {dimension_numbers = #tpu.dot_dimension_numbers<[1], [0], [0], [1], [0, 0, 1, 1], [], []>} : vector<256x128xbf16>, vector<128x128xbf16>, vector<256x128xf32> -> vector<256x128xf32>
    %69 = arith.addf %62, %68 : vector<256x128xf32>
    %c0_58 = arith.constant 0 : index
    %c1_59 = arith.constant 1 : index
    %c0_60 = arith.constant 0 : index
    %c0_61 = arith.constant 0 : index
    %70 = vector.load %arg10[%c0_58, %c1_59, %c0_60, %c0_61] : memref<3x18x16x128xbf16, #tpu.memory_space<vmem>>, vector<1x16x16x128xbf16>
    %71 = vector.shape_cast %70 : vector<1x16x16x128xbf16> to vector<16x16x128xbf16>
    %72 = vector.shape_cast %71 : vector<16x16x128xbf16> to vector<256x128xbf16>
    %c3 = arith.constant 3 : index
    %c0_62 = arith.constant 0 : index
    %c0_63 = arith.constant 0 : index
    %73 = vector.load %arg6[%c3, %c0_62, %c0_63] : memref<9x128x128xbf16, #tpu.memory_space<vmem>>, vector<1x128x128xbf16>
    %74 = vector.shape_cast %73 : vector<1x128x128xbf16> to vector<128x128xbf16>
    %cst_64 = arith.constant dense<0.000000e+00> : vector<256x128xf32>
    %75 = tpu.matmul %72, %74, %cst_64 {dimension_numbers = #tpu.dot_dimension_numbers<[1], [0], [0], [1], [0, 0, 1, 1], [], []>} : vector<256x128xbf16>, vector<128x128xbf16>, vector<256x128xf32> -> vector<256x128xf32>
    %76 = arith.addf %69, %75 : vector<256x128xf32>
    %c1_65 = arith.constant 1 : index
    %c1_66 = arith.constant 1 : index
    %c0_67 = arith.constant 0 : index
    %c0_68 = arith.constant 0 : index
    %77 = vector.load %arg10[%c1_65, %c1_66, %c0_67, %c0_68] : memref<3x18x16x128xbf16, #tpu.memory_space<vmem>>, vector<1x16x16x128xbf16>
    %78 = vector.shape_cast %77 : vector<1x16x16x128xbf16> to vector<16x16x128xbf16>
    %79 = vector.shape_cast %78 : vector<16x16x128xbf16> to vector<256x128xbf16>
    %c4 = arith.constant 4 : index
    %c0_69 = arith.constant 0 : index
    %c0_70 = arith.constant 0 : index
    %80 = vector.load %arg6[%c4, %c0_69, %c0_70] : memref<9x128x128xbf16, #tpu.memory_space<vmem>>, vector<1x128x128xbf16>
    %81 = vector.shape_cast %80 : vector<1x128x128xbf16> to vector<128x128xbf16>
    %cst_71 = arith.constant dense<0.000000e+00> : vector<256x128xf32>
    %82 = tpu.matmul %79, %81, %cst_71 {dimension_numbers = #tpu.dot_dimension_numbers<[1], [0], [0], [1], [0, 0, 1, 1], [], []>} : vector<256x128xbf16>, vector<128x128xbf16>, vector<256x128xf32> -> vector<256x128xf32>
    %83 = arith.addf %76, %82 : vector<256x128xf32>
    %c2_72 = arith.constant 2 : index
    %c1_73 = arith.constant 1 : index
    %c0_74 = arith.constant 0 : index
    %c0_75 = arith.constant 0 : index
    %84 = vector.load %arg10[%c2_72, %c1_73, %c0_74, %c0_75] : memref<3x18x16x128xbf16, #tpu.memory_space<vmem>>, vector<1x16x16x128xbf16>
    %85 = vector.shape_cast %84 : vector<1x16x16x128xbf16> to vector<16x16x128xbf16>
    %86 = vector.shape_cast %85 : vector<16x16x128xbf16> to vector<256x128xbf16>
    %c5 = arith.constant 5 : index
    %c0_76 = arith.constant 0 : index
    %c0_77 = arith.constant 0 : index
    %87 = vector.load %arg6[%c5, %c0_76, %c0_77] : memref<9x128x128xbf16, #tpu.memory_space<vmem>>, vector<1x128x128xbf16>
    %88 = vector.shape_cast %87 : vector<1x128x128xbf16> to vector<128x128xbf16>
    %cst_78 = arith.constant dense<0.000000e+00> : vector<256x128xf32>
    %89 = tpu.matmul %86, %88, %cst_78 {dimension_numbers = #tpu.dot_dimension_numbers<[1], [0], [0], [1], [0, 0, 1, 1], [], []>} : vector<256x128xbf16>, vector<128x128xbf16>, vector<256x128xf32> -> vector<256x128xf32>
    %90 = arith.addf %83, %89 : vector<256x128xf32>
    %c0_79 = arith.constant 0 : index
    %c2_80 = arith.constant 2 : index
    %c0_81 = arith.constant 0 : index
    %c0_82 = arith.constant 0 : index
    %91 = vector.load %arg10[%c0_79, %c2_80, %c0_81, %c0_82] : memref<3x18x16x128xbf16, #tpu.memory_space<vmem>>, vector<1x16x16x128xbf16>
    %92 = vector.shape_cast %91 : vector<1x16x16x128xbf16> to vector<16x16x128xbf16>
    %93 = vector.shape_cast %92 : vector<16x16x128xbf16> to vector<256x128xbf16>
    %c6 = arith.constant 6 : index
    %c0_83 = arith.constant 0 : index
    %c0_84 = arith.constant 0 : index
    %94 = vector.load %arg6[%c6, %c0_83, %c0_84] : memref<9x128x128xbf16, #tpu.memory_space<vmem>>, vector<1x128x128xbf16>
    %95 = vector.shape_cast %94 : vector<1x128x128xbf16> to vector<128x128xbf16>
    %cst_85 = arith.constant dense<0.000000e+00> : vector<256x128xf32>
    %96 = tpu.matmul %93, %95, %cst_85 {dimension_numbers = #tpu.dot_dimension_numbers<[1], [0], [0], [1], [0, 0, 1, 1], [], []>} : vector<256x128xbf16>, vector<128x128xbf16>, vector<256x128xf32> -> vector<256x128xf32>
    %97 = arith.addf %90, %96 : vector<256x128xf32>
    %c1_86 = arith.constant 1 : index
    %c2_87 = arith.constant 2 : index
    %c0_88 = arith.constant 0 : index
    %c0_89 = arith.constant 0 : index
    %98 = vector.load %arg10[%c1_86, %c2_87, %c0_88, %c0_89] : memref<3x18x16x128xbf16, #tpu.memory_space<vmem>>, vector<1x16x16x128xbf16>
    %99 = vector.shape_cast %98 : vector<1x16x16x128xbf16> to vector<16x16x128xbf16>
    %100 = vector.shape_cast %99 : vector<16x16x128xbf16> to vector<256x128xbf16>
    %c7 = arith.constant 7 : index
    %c0_90 = arith.constant 0 : index
    %c0_91 = arith.constant 0 : index
    %101 = vector.load %arg6[%c7, %c0_90, %c0_91] : memref<9x128x128xbf16, #tpu.memory_space<vmem>>, vector<1x128x128xbf16>
    %102 = vector.shape_cast %101 : vector<1x128x128xbf16> to vector<128x128xbf16>
    %cst_92 = arith.constant dense<0.000000e+00> : vector<256x128xf32>
    %103 = tpu.matmul %100, %102, %cst_92 {dimension_numbers = #tpu.dot_dimension_numbers<[1], [0], [0], [1], [0, 0, 1, 1], [], []>} : vector<256x128xbf16>, vector<128x128xbf16>, vector<256x128xf32> -> vector<256x128xf32>
    %104 = arith.addf %97, %103 : vector<256x128xf32>
    %c2_93 = arith.constant 2 : index
    %c2_94 = arith.constant 2 : index
    %c0_95 = arith.constant 0 : index
    %c0_96 = arith.constant 0 : index
    %105 = vector.load %arg10[%c2_93, %c2_94, %c0_95, %c0_96] : memref<3x18x16x128xbf16, #tpu.memory_space<vmem>>, vector<1x16x16x128xbf16>
    %106 = vector.shape_cast %105 : vector<1x16x16x128xbf16> to vector<16x16x128xbf16>
    %107 = vector.shape_cast %106 : vector<16x16x128xbf16> to vector<256x128xbf16>
    %c8 = arith.constant 8 : index
    %c0_97 = arith.constant 0 : index
    %c0_98 = arith.constant 0 : index
    %108 = vector.load %arg6[%c8, %c0_97, %c0_98] : memref<9x128x128xbf16, #tpu.memory_space<vmem>>, vector<1x128x128xbf16>
    %109 = vector.shape_cast %108 : vector<1x128x128xbf16> to vector<128x128xbf16>
    %cst_99 = arith.constant dense<0.000000e+00> : vector<256x128xf32>
    %110 = tpu.matmul %107, %109, %cst_99 {dimension_numbers = #tpu.dot_dimension_numbers<[1], [0], [0], [1], [0, 0, 1, 1], [], []>} : vector<256x128xbf16>, vector<128x128xbf16>, vector<256x128xf32> -> vector<256x128xf32>
    %111 = arith.addf %104, %110 : vector<256x128xf32>
    %112 = vector.broadcast %2 : vector<1x128xf32> to vector<256x128xf32>
    %113 = arith.addf %111, %112 : vector<256x128xf32>
    %cst_100 = arith.constant 0.000000e+00 : f32
    %114 = vector.broadcast %cst_100 : f32 to vector<256x128xf32>
    %115 = arith.maximumf %113, %114 : vector<256x128xf32>
    %116 = arith.truncf %115 : vector<256x128xf32> to vector<256x128xbf16>
    %c0_101 = arith.constant 0 : index
    %c0_102 = arith.constant 0 : index
    %117 = vector.load %arg7[%c0_101, %c0_102] : memref<128x128xbf16, #tpu.memory_space<vmem>>, vector<128x128xbf16>
    %cst_103 = arith.constant dense<0.000000e+00> : vector<256x128xf32>
    %118 = tpu.matmul %116, %117, %cst_103 {dimension_numbers = #tpu.dot_dimension_numbers<[1], [0], [0], [1], [0, 0, 1, 1], [], []>} : vector<256x128xbf16>, vector<128x128xbf16>, vector<256x128xf32> -> vector<256x128xf32>
    %119 = vector.broadcast %3 : vector<1x128xf32> to vector<256x128xf32>
    %120 = arith.addf %118, %119 : vector<256x128xf32>
    %c0_104 = arith.constant 0 : index
    %c0_105 = arith.constant 0 : index
    %c0_106 = arith.constant 0 : index
    %c0_107 = arith.constant 0 : index
    %121 = vector.load %arg2[%c0_104, %c0_105, %c0_106, %c0_107] : memref<1x16x16x128xf32, #tpu.memory_space<vmem>>, vector<1x16x16x128xf32>
    %122 = vector.shape_cast %121 : vector<1x16x16x128xf32> to vector<16x16x128xf32>
    %123 = vector.shape_cast %122 : vector<16x16x128xf32> to vector<256x128xf32>
    %124 = arith.addf %123, %120 : vector<256x128xf32>
    %cst_108 = arith.constant 0.000000e+00 : f32
    %125 = vector.broadcast %cst_108 : f32 to vector<256x128xf32>
    %126 = arith.maximumf %124, %125 : vector<256x128xf32>
    %127 = vector.shape_cast %126 : vector<256x128xf32> to vector<16x16x128xf32>
    %c0_109 = arith.constant 0 : index
    %c0_110 = arith.constant 0 : index
    %c0_111 = arith.constant 0 : index
    %c0_112 = arith.constant 0 : index
    %128 = vector.load %arg9[%c0_109, %c0_110, %c0_111, %c0_112] : memref<1x16x16x128xf32, #tpu.memory_space<vmem>>, vector<1x16x16x128xf32>
    %129 = vector.shape_cast %128 : vector<1x16x16x128xf32> to vector<16x16x128xf32>
    %130 = vector.shape_cast %127 : vector<16x16x128xf32> to vector<1x16x16x128xf32>
    tpu.vector_store %arg9[%c0_109, %c0_110, %c0_111, %c0_112], %130 {strides = array<i32>} : memref<1x16x16x128xf32, #tpu.memory_space<vmem>>, vector<1x16x16x128xf32>,
    return
  }
  func.func @transform_0(%arg0: i32, %arg1: i32) -> (i32, i32, i32, i32) {
    %c0_i32 = arith.constant 0 : i32
    %c0_i32_0 = arith.constant 0 : i32
    %c0_i32_1 = arith.constant 0 : i32
    return %arg0, %arg1, %c0_i32, %c0_i32_0 : i32, i32, i32, i32
  }
  func.func @transform_1(%arg0: i32, %arg1: i32) -> (i32, i32, i32, i32) {
    %c16_i32 = arith.constant 16 : i32
    %0 = arith.muli %arg1, %c16_i32 : i32
    %c1_i32 = arith.constant 1 : i32
    %1 = arith.subi %0, %c1_i32 : i32
    %c0_i32 = arith.constant 0 : i32
    %2 = arith.maxsi %1, %c0_i32 : i32
    %c0_i32_0 = arith.constant 0 : i32
    %c0_i32_1 = arith.constant 0 : i32
    %c0_i32_2 = arith.constant 0 : i32
    return %arg0, %2, %c0_i32_0, %c0_i32_1 : i32, i32, i32, i32
  }
  func.func @transform_2(%arg0: i32, %arg1: i32) -> (i32, i32, i32, i32) {
    %c16_i32 = arith.constant 16 : i32
    %0 = arith.muli %arg1, %c16_i32 : i32
    %c16_i32_0 = arith.constant 16 : i32
    %1 = arith.addi %0, %c16_i32_0 : i32
    %c15_i32 = arith.constant 15 : i32
    %2 = arith.minsi %1, %c15_i32 : i32
    %c0_i32 = arith.constant 0 : i32
    %c0_i32_1 = arith.constant 0 : i32
    %c0_i32_2 = arith.constant 0 : i32
    return %arg0, %2, %c0_i32, %c0_i32_1 : i32, i32, i32, i32
  }
  func.func @transform_3(%arg0: i32, %arg1: i32) -> (i32, i32) {
    %c0_i32 = arith.constant 0 : i32
    %c0_i32_0 = arith.constant 0 : i32
    %c0_i32_1 = arith.constant 0 : i32
    return %c0_i32, %c0_i32_0 : i32, i32
  }
  func.func @transform_4(%arg0: i32, %arg1: i32) -> (i32, i32, i32) {
    %c0_i32 = arith.constant 0 : i32
    %c0_i32_0 = arith.constant 0 : i32
    %c0_i32_1 = arith.constant 0 : i32
    %c0_i32_2 = arith.constant 0 : i32
    return %c0_i32, %c0_i32_0, %c0_i32_1 : i32, i32, i32
  }
  func.func @transform_5(%arg0: i32, %arg1: i32) -> (i32, i32) {
    %c0_i32 = arith.constant 0 : i32
    %c0_i32_0 = arith.constant 0 : i32
    %c0_i32_1 = arith.constant 0 : i32
    return %c0_i32, %c0_i32_0 : i32, i32
  }
  func.func @transform_6(%arg0: i32, %arg1: i32) -> (i32, i32) {
    %c0_i32 = arith.constant 0 : i32
    %c0_i32_0 = arith.constant 0 : i32
    %c0_i32_1 = arith.constant 0 : i32
    return %c0_i32, %c0_i32_0 : i32, i32
  }
  func.func @transform_7(%arg0: i32, %arg1: i32) -> (i32, i32, i32, i32) {
    %c0_i32 = arith.constant 0 : i32
    %c0_i32_0 = arith.constant 0 : i32
    %c0_i32_1 = arith.constant 0 : i32
    return %arg0, %arg1, %c0_i32, %c0_i32_0 : i32, i32, i32, i32
  }
}

</mosaic_0001>

<llo_original>
// kernel: res_horizon_pallas.1
$region0: #{res_horizon_pallas.1}
  #allocation0 [shape = 'u32[]', space=smem, size = 0x4, offset = 0x4, fixed_abs, tag = 'smem constant byte address 0x4 - core index']
  #allocation1 [shape = 'u32[144,128]{1,0:T(1,128)}', space=vmem, size = 0x12000, scoped, tag = 'internal scratch']
  #allocation2 [shape = 'bf16[3,18,16,128]{3,2,1,0:T(8,128)(2,1)}', space=vmem, size = 0x36000, scoped, tag = 'scratch operand']
  %s0 = inlined_call_operand.vmem [shape: f32[2,16,16,128], index: 0, kind: input, shape index: {}, may-alias: {0,1,2}]
  %s1 = inlined_call_operand.vmem [shape: f32[2,16,16,128], index: 1, kind: input, shape index: {}, may-alias: {0,1,2}]
  %s2 = inlined_call_operand.vmem [shape: f32[2,16,16,128], index: 2, kind: input, shape index: {}, may-alias: {0,1,2}]
  %s3 = inlined_call_operand.vmem [shape: bf16[128,128], index: 3, kind: input, shape index: {}]
  %s4 = inlined_call_operand.vmem [shape: bf16[9,128,128], index: 4, kind: input, shape index: {}]
  %s5 = inlined_call_operand.vmem [shape: bf16[128,128], index: 5, kind: input, shape index: {}]
  %s6 = inlined_call_operand.vmem [shape: f32[3,128], index: 6, kind: input, shape index: {}]
  %s7 = inlined_call_operand.vmem [shape: f32[2,16,16,128], index: 7, kind: output, shape index: {}]
  %s8 = sld [smem:[#allocation0]]
  $region61: #{res_horizon_pallas.1} parent=0
    _
  %s10 = ssub.s32 1, %s8
  %s11 = scalar_select 0, %s10, %s8
  loop: start=0, step=1, limit=4
  $region2: #{res_horizon_pallas.1} parent=0 // loop_pre_header
    _
  $region3: #{res_horizon_pallas.1} parent=0 // loop_header
    %s13 = sphi 0, %s17
    %p14 = scmp.ge.s32.totalorder %s13, 4
    %s20 = sphi 0, %s32
    %s21 = sphi 0, %s28
    %s22 = sphi 0, %s20
    %s23 = sphi 0, %s21
    %s24 = sphi 0, %s22
    %s25 = sphi 0, %s23
    %s37 = sphi 0, %s39
    %s40 = sphi 0, %s37
    %s41 = sphi 0, %s40
    %s57 = sphi 0, %s41
    %s73 = sphi 0, %s75
    %s76 = sphi 0, %s73
    %s77 = sphi 0, %s76
    %s93 = sphi 0, %s77
    %s109 = sphi 0, %s111
    %s112 = sphi 0, %s109
    %s113 = sphi 0, %s112
    %s129 = sphi 0, %s113
    %s133 = sphi 0, %s133
    %s135 = sphi 0, %s133
    %s136 = sphi 0, %s135
    %s150 = sphi 0, %s136
    %s154 = sphi 0, %s154
    %s156 = sphi 0, %s154
    %s157 = sphi 0, %s156
    %s171 = sphi 0, %s157
    %s175 = sphi 0, %s175
    %s177 = sphi 0, %s175
    %s178 = sphi 0, %s177
    %s192 = sphi 0, %s178
    %s196 = sphi 0, %s196
    %s198 = sphi 0, %s196
    %s199 = sphi 0, %s198
    %s213 = sphi 0, %s199
    %s221 = sphi 0, %s223
    %s224 = sphi 0, %s221
    %s225 = sphi 0, %s224
    %s241 = sphi 0, %s225
  $region4: #{res_horizon_pallas.1} parent=0 // loop_header_branch
    %16 = sbr.rel (%p14) target = $region8
  $region5: #{res_horizon_pallas.1} parent=0 // loop_body
    %s18 = ssub.s32 %s13, 1
    %s19 = ssub.s32 %s13, 2
    %s26 = sadd.s32 1, %s21
    %p27 = scmp.ge.s32.totalorder %s26, 1
    %s28 = scalar_select %p27, 0, %s26
    %s29 = sadd.s32 1, %s20
    %s30 = scalar_select %p27, %s29, %s20
    %p31 = scmp.ge.s32.totalorder %s30, 2
    %s32 = scalar_select %p31, 0, %s30
    %s33 = ssub.s32 %s20, %s32
    %s34 = ssub.s32 %s21, %s28
    %s35 = sor.u32 %s33, %s34
    %p36 = scmp.eq.s32.totalorder %s35, 0
    %s38 = sadd.s32 %s37, 1
    %s39 = scalar_select %p36, %s37, %s38
    %p42 = pneg %p36
    %p43 = scmp.eq.s32.totalorder %s13, 1
    %p44 = por %p42, %p43
    %p45 = scmp.ne.s32.totalorder %s37, %s40
    %p46 = scmp.eq.s32.totalorder %s13, 0
    %p47 = por %p45, %p46
    %p48 = scmp.ne.s32.totalorder %s37, %s40
    %p49 = scmp.eq.s32.totalorder %s18, 1
    %p50 = por %p48, %p49
    %p51 = scmp.ne.s32.totalorder %s40, %s41
    %p52 = scmp.eq.s32.totalorder %s18, 0
    %p53 = por %p51, %p52
    %p54 = scmp.ne.s32.totalorder %s40, %s41
    %p55 = scmp.eq.s32.totalorder %s19, 1
    %p56 = por %p54, %p55
    %p58 = scmp.ne.s32.totalorder %s41, %s57
    %p59 = scmp.eq.s32.totalorder %s19, 0
    %p60 = por %p58, %p59
    %s61 = smul.u32 %s21, 16
    %s62 = ssub.s32 %s61, 1
    %p63 = scmp.gt.s32.totalorder %s62, 0
    %s64 = scalar_select %p63, %s62, 0
    %s65 = smul.u32 %s28, 16
    %s66 = ssub.s32 %s65, 1
    %p67 = scmp.gt.s32.totalorder %s66, 0
    %s68 = scalar_select %p67, %s66, 0
    %s69 = ssub.s32 %s20, %s32
    %s70 = ssub.s32 %s64, %s68
    %s71 = sor.u32 %s69, %s70
    %p72 = scmp.eq.s32.totalorder %s71, 0
    %s74 = sadd.s32 %s73, 1
    %s75 = scalar_select %p72, %s73, %s74
    %p78 = pneg %p72
    %p79 = scmp.eq.s32.totalorder %s13, 1
    %p80 = por %p78, %p79
    %p81 = scmp.ne.s32.totalorder %s73, %s76
    %p82 = scmp.eq.s32.totalorder %s13, 0
    %p83 = por %p81, %p82
    %p84 = scmp.ne.s32.totalorder %s73, %s76
    %p85 = scmp.eq.s32.totalorder %s18, 1
    %p86 = por %p84, %p85
    %p87 = scmp.ne.s32.totalorder %s76, %s77
    %p88 = scmp.eq.s32.totalorder %s18, 0
    %p89 = por %p87, %p88
    %p90 = scmp.ne.s32.totalorder %s76, %s77
    %p91 = scmp.eq.s32.totalorder %s19, 1
    %p92 = por %p90, %p91
    %p94 = scmp.ne.s32.totalorder %s77, %s93
    %p95 = scmp.eq.s32.totalorder %s19, 0
    %p96 = por %p94, %p95
    %s97 = smul.u32 %s21, 16
    %s98 = sadd.s32 %s97, 16
    %p99 = scmp.lt.s32.totalorder %s98, 15
    %s100 = scalar_select %p99, %s98, 15
    %s101 = smul.u32 %s28, 16
    %s102 = sadd.s32 %s101, 16
    %p103 = scmp.lt.s32.totalorder %s102, 15
    %s104 = scalar_select %p103, %s102, 15
    %s105 = ssub.s32 %s20, %s32
    %s106 = ssub.s32 %s100, %s104
    %s107 = sor.u32 %s105, %s106
    %p108 = scmp.eq.s32.totalorder %s107, 0
    %s110 = sadd.s32 %s109, 1
    %s111 = scalar_select %p108, %s109, %s110
    %p114 = pneg %p108
    %p115 = scmp.eq.s32.totalorder %s13, 1
    %p116 = por %p114, %p115
    %p117 = scmp.ne.s32.totalorder %s109, %s112
    %p118 = scmp.eq.s32.totalorder %s13, 0
    %p119 = por %p117, %p118
    %p120 = scmp.ne.s32.totalorder %s109, %s112
    %p121 = scmp.eq.s32.totalorder %s18, 1
    %p122 = por %p120, %p121
    %p123 = scmp.ne.s32.totalorder %s112, %s113
    %p124 = scmp.eq.s32.totalorder %s18, 0
    %p125 = por %p123, %p124
    %p126 = scmp.ne.s32.totalorder %s112, %s113
    %p127 = scmp.eq.s32.totalorder %s19, 1
    %p128 = por %p126, %p127
    %p130 = scmp.ne.s32.totalorder %s113, %s129
    %p131 = scmp.eq.s32.totalorder %s19, 0
    %p132 = por %p130, %p131
    %s134 = sadd.s32 %s133, 1
    %p137 = scmp.eq.s32.totalorder %s13, 1
    %p138 = scmp.ne.s32.totalorder %s133, %s135
    %p139 = scmp.eq.s32.totalorder %s13, 0
    %p140 = por %p138, %p139
    %p141 = scmp.ne.s32.totalorder %s133, %s135
    %p142 = scmp.eq.s32.totalorder %s18, 1
    %p143 = por %p141, %p142
    %p144 = scmp.ne.s32.totalorder %s135, %s136
    %p145 = scmp.eq.s32.totalorder %s18, 0
    %p146 = por %p144, %p145
    %p147 = scmp.ne.s32.totalorder %s135, %s136
    %p148 = scmp.eq.s32.totalorder %s19, 1
    %p149 = por %p147, %p148
    %p151 = scmp.ne.s32.totalorder %s136, %s150
    %p152 = scmp.eq.s32.totalorder %s19, 0
    %p153 = por %p151, %p152
    %s155 = sadd.s32 %s154, 1
    %p158 = scmp.eq.s32.totalorder %s13, 1
    %p159 = scmp.ne.s32.totalorder %s154, %s156
    %p160 = scmp.eq.s32.totalorder %s13, 0
    %p161 = por %p159, %p160
    %p162 = scmp.ne.s32.totalorder %s154, %s156
    %p163 = scmp.eq.s32.totalorder %s18, 1
    %p164 = por %p162, %p163
    %p165 = scmp.ne.s32.totalorder %s156, %s157
    %p166 = scmp.eq.s32.totalorder %s18, 0
    %p167 = por %p165, %p166
    %p168 = scmp.ne.s32.totalorder %s156, %s157
    %p169 = scmp.eq.s32.totalorder %s19, 1
    %p170 = por %p168, %p169
    %p172 = scmp.ne.s32.totalorder %s157, %s171
    %p173 = scmp.eq.s32.totalorder %s19, 0
    %p174 = por %p172, %p173
    %s176 = sadd.s32 %s175, 1
    %p179 = scmp.eq.s32.totalorder %s13, 1
    %p180 = scmp.ne.s32.totalorder %s175, %s177
    %p181 = scmp.eq.s32.totalorder %s13, 0
    %p182 = por %p180, %p181
    %p183 = scmp.ne.s32.totalorder %s175, %s177
    %p184 = scmp.eq.s32.totalorder %s18, 1
    %p185 = por %p183, %p184
    %p186 = scmp.ne.s32.totalorder %s177, %s178
    %p187 = scmp.eq.s32.totalorder %s18, 0
    %p188 = por %p186, %p187
    %p189 = scmp.ne.s32.totalorder %s177, %s178
    %p190 = scmp.eq.s32.totalorder %s19, 1
    %p191 = por %p189, %p190
    %p193 = scmp.ne.s32.totalorder %s178, %s192
    %p194 = scmp.eq.s32.totalorder %s19, 0
    %p195 = por %p193, %p194
    %s197 = sadd.s32 %s196, 1
    %p200 = scmp.eq.s32.totalorder %s13, 1
    %p201 = scmp.ne.s32.totalorder %s196, %s198
    %p202 = scmp.eq.s32.totalorder %s13, 0
    %p203 = por %p201, %p202
    %p204 = scmp.ne.s32.totalorder %s196, %s198
    %p205 = scmp.eq.s32.totalorder %s18, 1
    %p206 = por %p204, %p205
    %p207 = scmp.ne.s32.totalorder %s198, %s199
    %p208 = scmp.eq.s32.totalorder %s18, 0
    %p209 = por %p207, %p208
    %p210 = scmp.ne.s32.totalorder %s198, %s199
    %p211 = scmp.eq.s32.totalorder %s19, 1
    %p212 = por %p210, %p211
    %p214 = scmp.ne.s32.totalorder %s199, %s213
    %p215 = scmp.eq.s32.totalorder %s19, 0
    %p216 = por %p214, %p215
    %s217 = ssub.s32 %s20, %s32
    %s218 = ssub.s32 %s21, %s28
    %s219 = sor.u32 %s217, %s218
    %p220 = scmp.eq.s32.totalorder %s219, 0
    %s222 = sadd.s32 %s221, 1
    %s223 = scalar_select %p220, %s221, %s222
    %p226 = pneg %p220
    %p227 = scmp.eq.s32.totalorder %s13, 1
    %p228 = por %p226, %p227
    %p229 = scmp.ne.s32.totalorder %s221, %s224
    %p230 = scmp.eq.s32.totalorder %s13, 0
    %p231 = por %p229, %p230
    %p232 = scmp.ne.s32.totalorder %s221, %s224
    %p233 = scmp.eq.s32.totalorder %s18, 1
    %p234 = por %p232, %p233
    %p235 = scmp.ne.s32.totalorder %s224, %s225
    %p236 = scmp.eq.s32.totalorder %s18, 0
    %p237 = por %p235, %p236
    %p238 = scmp.ne.s32.totalorder %s224, %s225
    %p239 = scmp.eq.s32.totalorder %s19, 1
    %p240 = por %p238, %p239
    %p242 = scmp.ne.s32.totalorder %s225, %s241
    %p243 = scmp.eq.s32.totalorder %s19, 0
    %p244 = por %p242, %p243
    %p245 = scmp.le.s32.totalorder 1, %s13
    %p246 = scmp.lt.s32.totalorder %s13, 3
    %p247 = pnand %p245, %p246
    %p248 = pneg %p247
    // Predicated region
    $region9: #{res_horizon_pallas.1} parent=5 // pred_check
      _
    $region10: #{res_horizon_pallas.1} parent=5 // pred_check_branch
      %250 = sbr.rel (%p247) target = $region12
    $region11: #{res_horizon_pallas.1} parent=5 // pred_region
      %s251 = ssub.s32 %s13, 1
      // Predicated region
      $region13: #{res_horizon_pallas.1} parent=11 // pred_check
        %p252 = pneg %p146
      $region14: #{res_horizon_pallas.1} parent=11 // pred_check_branch
        %254 = sbr.rel (%p252) target = $region16
      $region15: #{res_horizon_pallas.1} parent=11 // pred_region
        _
      $region16: #{res_horizon_pallas.1} parent=11 // pred_fallthru
        _
      // Predicated region
      $region17: #{res_horizon_pallas.1} parent=11 // pred_check
        %p255 = pneg %p167
      $region18: #{res_horizon_pallas.1} parent=11 // pred_check_branch
        %257 = sbr.rel (%p255) target = $region20
      $region19: #{res_horizon_pallas.1} parent=11 // pred_region
        _
      $region20: #{res_horizon_pallas.1} parent=11 // pred_fallthru
        _
      // Predicated region
      $region21: #{res_horizon_pallas.1} parent=11 // pred_check
        %p258 = pneg %p188
      $region22: #{res_horizon_pallas.1} parent=11 // pred_check_branch
        %260 = sbr.rel (%p258) target = $region24
      $region23: #{res_horizon_pallas.1} parent=11 // pred_region
        _
      $region24: #{res_horizon_pallas.1} parent=11 // pred_fallthru
        _
      // Predicated region
      $region25: #{res_horizon_pallas.1} parent=11 // pred_check
        %p261 = pneg %p209
      $region26: #{res_horizon_pallas.1} parent=11 // pred_check_branch
        %263 = sbr.rel (%p261) target = $region28
      $region27: #{res_horizon_pallas.1} parent=11 // pred_region
        _
      $region28: #{res_horizon_pallas.1} parent=11 // pred_fallthru
        _
    $region12: #{res_horizon_pallas.1} parent=5 // pred_fallthru
      _
    %p264 = scmp.lt.s32.totalorder %s13, 2
    // Predicated region
    $region29: #{res_horizon_pallas.1} parent=5 // pred_check
      %p265 = pneg %p264
    $region30: #{res_horizon_pallas.1} parent=5 // pred_check_branch
      %267 = sbr.rel (%p265) target = $region32
    $region31: #{res_horizon_pallas.1} parent=5 // pred_region
      // Predicated region
      $region33: #{res_horizon_pallas.1} parent=31 // pred_check
        %p268 = pneg %p47
      $region34: #{res_horizon_pallas.1} parent=31 // pred_check_branch
        %270 = sbr.rel (%p268) target = $region36
      $region35: #{res_horizon_pallas.1} parent=31 // pred_region
        %s271 = smul.u32 16, %s21
        %p272 = scmp.lt.s32.totalorder %s20, 1
        %s273 = scalar_select %p272, %s20, 1
        %p274 = scmp.lt.s32.totalorder %s271, 15
        %s275 = scalar_select %p274, %s271, 15
        %s276 = smul.addr %s275, 2
        %s277 = smul.addr %s273, 32
        %s278 = sadd.s32 %s276, %s277
        %s279 = smul.addr %s278, 8
        %s280 = scalar_lea.vmem %s0, %s279
        %s281 = smul.u32 16, %s21
      $region36: #{res_horizon_pallas.1} parent=31 // pred_fallthru
        _
      // Predicated region
      $region37: #{res_horizon_pallas.1} parent=31 // pred_check
        %p282 = pneg %p83
      $region38: #{res_horizon_pallas.1} parent=31 // pred_check_branch
        %284 = sbr.rel (%p282) target = $region40
      $region39: #{res_horizon_pallas.1} parent=31 // pred_region
        %s285 = smul.u32 %s21, 16
        %s286 = ssub.s32 %s285, 1
        %p287 = scmp.gt.s32.totalorder %s286, 0
        %s288 = scalar_select %p287, %s286, 0
        %p289 = scmp.lt.s32.totalorder %s20, 1
        %s290 = scalar_select %p289, %s20, 1
        %p291 = scmp.lt.s32.totalorder %s288, 15
        %s292 = scalar_select %p291, %s288, 15
        %s293 = smul.addr %s292, 2
        %s294 = smul.addr %s290, 32
        %s295 = sadd.s32 %s293, %s294
        %s296 = smul.addr %s295, 8
        %s297 = scalar_lea.vmem %s1, %s296
        %s298 = smul.u32 %s21, 16
        %s299 = ssub.s32 %s298, 1
        %p300 = scmp.gt.s32.totalorder %s299, 0
        %s301 = scalar_select %p300, %s299, 0
      $region40: #{res_horizon_pallas.1} parent=31 // pred_fallthru
        _
      // Predicated region
      $region41: #{res_horizon_pallas.1} parent=31 // pred_check
        %p302 = pneg %p119
      $region42: #{res_horizon_pallas.1} parent=31 // pred_check_branch
        %304 = sbr.rel (%p302) target = $region44
      $region43: #{res_horizon_pallas.1} parent=31 // pred_region
        %s305 = smul.u32 %s21, 16
        %s306 = sadd.s32 %s305, 16
        %p307 = scmp.lt.s32.totalorder %s306, 15
        %s308 = scalar_select %p307, %s306, 15
        %p309 = scmp.lt.s32.totalorder %s20, 1
        %s310 = scalar_select %p309, %s20, 1
        %p311 = scmp.lt.s32.totalorder %s308, 15
        %s312 = scalar_select %p311, %s308, 15
        %s313 = smul.addr %s312, 2
        %s314 = smul.addr %s310, 32
        %s315 = sadd.s32 %s313, %s314
        %s316 = smul.addr %s315, 8
        %s317 = scalar_lea.vmem %s2, %s316
        %s318 = smul.u32 %s21, 16
        %s319 = sadd.s32 %s318, 16
        %p320 = scmp.lt.s32.totalorder %s319, 15
        %s321 = scalar_select %p320, %s319, 15
      $region44: #{res_horizon_pallas.1} parent=31 // pred_fallthru
        _
    $region32: #{res_horizon_pallas.1} parent=5 // pred_fallthru
      _
    %p322 = scmp.le.s32.totalorder 1, %s13
    %p323 = scmp.lt.s32.totalorder %s13, 3
    %p324 = pnand %p322, %p323
    %p325 = pneg %p324
    // Predicated region
    $region45: #{res_horizon_pallas.1} parent=5 // pred_check
      _
    $region46: #{res_horizon_pallas.1} parent=5 // pred_check_branch
      %327 = sbr.rel (%p324) target = $region48
    $region47: #{res_horizon_pallas.1} parent=5 // pred_region
      %s328 = ssub.s32 %s13, 1
      %s329 = smul.u32 16, %s23
      %p330 = scmp.lt.s32.totalorder %s22, 1
      %s331 = scalar_select %p330, %s22, 1
      %p332 = scmp.lt.s32.totalorder %s329, 15
      %s333 = scalar_select %p332, %s329, 15
      %s334 = smul.addr %s333, 2
      %s335 = smul.addr %s331, 32
      %s336 = sadd.s32 %s334, %s335
      %s337 = smul.addr %s336, 8
      %s338 = scalar_lea.vmem %s0, %s337
      %p339 = pneg %p53
      %p340 = pneg %p50
      %s341 = smul.u32 %s23, 16
      %s342 = ssub.s32 %s341, 1
      %p343 = scmp.gt.s32.totalorder %s342, 0
      %s344 = scalar_select %p343, %s342, 0
      %p345 = scmp.lt.s32.totalorder %s22, 1
      %s346 = scalar_select %p345, %s22, 1
      %p347 = scmp.lt.s32.totalorder %s344, 15
      %s348 = scalar_select %p347, %s344, 15
      %s349 = smul.addr %s348, 2
      %s350 = smul.addr %s346, 32
      %s351 = sadd.s32 %s349, %s350
      %s352 = smul.addr %s351, 8
      %s353 = scalar_lea.vmem %s1, %s352
      %p354 = pneg %p89
      %p355 = pneg %p86
      %s356 = smul.u32 %s23, 16
      %s357 = sadd.s32 %s356, 16
      %p358 = scmp.lt.s32.totalorder %s357, 15
      %s359 = scalar_select %p358, %s357, 15
      %p360 = scmp.lt.s32.totalorder %s22, 1
      %s361 = scalar_select %p360, %s22, 1
      %p362 = scmp.lt.s32.totalorder %s359, 15
      %s363 = scalar_select %p362, %s359, 15
      %s364 = smul.addr %s363, 2
      %s365 = smul.addr %s361, 32
      %s366 = sadd.s32 %s364, %s365
      %s367 = smul.addr %s366, 8
      %s368 = scalar_lea.vmem %s2, %s367
      %p369 = pneg %p125
      %p370 = pneg %p122
      %p371 = pneg %p146
      %p372 = pneg %p143
      %p373 = pneg %p167
      %p374 = pneg %p164
      %p375 = pneg %p188
      %p376 = pneg %p185
      %p377 = pneg %p209
      %p378 = pneg %p206
      %p379 = pneg %p237
      %p380 = pneg %p234
      %s381 = smul.u32 16, %s23
      %p382 = scmp.lt.s32.totalorder %s22, 1
      %s383 = scalar_select %p382, %s22, 1
      %p384 = scmp.lt.s32.totalorder %s381, 15
      %s385 = scalar_select %p384, %s381, 15
      %s386 = smul.addr %s385, 2
      %s387 = smul.addr %s383, 32
      %s388 = sadd.s32 %s386, %s387
      %s389 = smul.addr %s388, 8
      %s390 = scalar_lea.vmem %s7, %s389
      %s391 = smul.u32 16, %s23
      %p392 = scmp.lt.s32.totalorder %s22, 1
      %s393 = scalar_select %p392, %s22, 1
      %p394 = scmp.lt.s32.totalorder %s391, 15
      %s395 = scalar_select %p394, %s391, 15
      %s396 = smul.addr %s395, 2
      %s397 = smul.addr %s393, 32
      %s398 = sadd.s32 %s396, %s397
      %s399 = smul.addr %s398, 8
      %s400 = scalar_lea.vmem %s0, %s399
      %s401 = smul.u32 16, %s23
      %s402 = smul.u32 %s23, 16
      %s403 = ssub.s32 %s402, 1
      %p404 = scmp.gt.s32.totalorder %s403, 0
      %s405 = scalar_select %p404, %s403, 0
      %p406 = scmp.lt.s32.totalorder %s22, 1
      %s407 = scalar_select %p406, %s22, 1
      %p408 = scmp.lt.s32.totalorder %s405, 15
      %s409 = scalar_select %p408, %s405, 15
      %s410 = smul.addr %s409, 2
      %s411 = smul.addr %s407, 32
      %s412 = sadd.s32 %s410, %s411
      %s413 = smul.addr %s412, 8
      %s414 = scalar_lea.vmem %s1, %s413
      %s415 = smul.u32 %s23, 16
      %s416 = ssub.s32 %s415, 1
      %p417 = scmp.gt.s32.totalorder %s416, 0
      %s418 = scalar_select %p417, %s416, 0
      %s419 = smul.u32 %s23, 16
      %s420 = sadd.s32 %s419, 16
      %p421 = scmp.lt.s32.totalorder %s420, 15
      %s422 = scalar_select %p421, %s420, 15
      %p423 = scmp.lt.s32.totalorder %s22, 1
      %s424 = scalar_select %p423, %s22, 1
      %p425 = scmp.lt.s32.totalorder %s422, 15
      %s426 = scalar_select %p425, %s422, 15
      %s427 = smul.addr %s426, 2
      %s428 = smul.addr %s424, 32
      %s429 = sadd.s32 %s427, %s428
      %s430 = smul.addr %s429, 8
      %s431 = scalar_lea.vmem %s2, %s430
      %s432 = smul.u32 %s23, 16
      %s433 = sadd.s32 %s432, 16
      %p434 = scmp.lt.s32.totalorder %s433, 15
      %s435 = scalar_select %p434, %s433, 15
      %s436 = smul.u32 16, %s23
      %p437 = scmp.lt.s32.totalorder %s22, 1
      %s438 = scalar_select %p437, %s22, 1
      %p439 = scmp.lt.s32.totalorder %s436, 15
      %s440 = scalar_select %p439, %s436, 15
      %s441 = smul.addr %s440, 2
      %s442 = smul.addr %s438, 32
      %s443 = sadd.s32 %s441, %s442
      %s444 = smul.addr %s443, 8
      %s445 = scalar_lea.vmem %s7, %s444
      %s446 = smul.u32 16, %s23
      %v448 = vld [vmem:[%s3] sm:$0xf]
      %v449 = vld [vmem:[%s3 + $0x4] sm:$0xf]
      %v450 = vld [vmem:[%s3 + $0x8] sm:$0xf]
      %v451 = vld [vmem:[%s3 + $0xc] sm:$0xf]
      %v452 = vld [vmem:[%s3 + $0x10] sm:$0xf]
      %v453 = vld [vmem:[%s3 + $0x14] sm:$0xf]
      %v454 = vld [vmem:[%s3 + $0x18] sm:$0xf]
      %v455 = vld [vmem:[%s3 + $0x1c] sm:$0xf]
      %v456 = vld [vmem:[%s3 + $0x20] sm:$0xf]
      %v457 = vld [vmem:[%s3 + $0x24] sm:$0xf]
      %v458 = vld [vmem:[%s3 + $0x28] sm:$0xf]
      %v459 = vld [vmem:[%s3 + $0x2c] sm:$0xf]
      %v460 = vld [vmem:[%s3 + $0x30] sm:$0xf]
      %v461 = vld [vmem:[%s3 + $0x34] sm:$0xf]
      %v462 = vld [vmem:[%s3 + $0x38] sm:$0xf]
      %v463 = vld [vmem:[%s3 + $0x3c] sm:$0xf]
      %v464 = vld [vmem:[%s6] sm:$0x1]
      %v465 = vld [vmem:[%s6 + $0x1] sm:$0x1]
      %v466 = vld [vmem:[%s6 + $0x2] sm:$0x1]
      %v467 = vld [vmem:[%s414] sm:$0xff]
      %v468 = vld [vmem:[%s414 + $0x8] sm:$0xff]
      %v469 = vld [vmem:[%s400] sm:$0xff]
      %v470 = vld [vmem:[%s400 + $0x8] sm:$0xff]
      %v471 = vld [vmem:[%s400 + $0x10] sm:$0xff]
      %v472 = vld [vmem:[%s400 + $0x18] sm:$0xff]
      %v473 = vld [vmem:[%s400 + $0x20] sm:$0xff]
      %v474 = vld [vmem:[%s400 + $0x28] sm:$0xff]
      %v475 = vld [vmem:[%s400 + $0x30] sm:$0xff]
      %v476 = vld [vmem:[%s400 + $0x38] sm:$0xff]
      %v477 = vld [vmem:[%s400 + $0x40] sm:$0xff]
      %v478 = vld [vmem:[%s400 + $0x48] sm:$0xff]
      %v479 = vld [vmem:[%s400 + $0x50] sm:$0xff]
      %v480 = vld [vmem:[%s400 + $0x58] sm:$0xff]
      %v481 = vld [vmem:[%s400 + $0x60] sm:$0xff]
      %v482 = vld [vmem:[%s400 + $0x68] sm:$0xff]
      %v483 = vld [vmem:[%s400 + $0x70] sm:$0xff]
      %v484 = vld [vmem:[%s400 + $0x78] sm:$0xff]
      %v485 = vld [vmem:[%s400 + $0x80] sm:$0xff]
      %v486 = vld [vmem:[%s400 + $0x88] sm:$0xff]
      %v487 = vld [vmem:[%s400 + $0x90] sm:$0xff]
      %v488 = vld [vmem:[%s400 + $0x98] sm:$0xff]
      %v489 = vld [vmem:[%s400 + $0xa0] sm:$0xff]
      %v490 = vld [vmem:[%s400 + $0xa8] sm:$0xff]
      %v491 = vld [vmem:[%s400 + $0xb0] sm:$0xff]
      %v492 = vld [vmem:[%s400 + $0xb8] sm:$0xff]
      %v493 = vld [vmem:[%s400 + $0xc0] sm:$0xff]
      %v494 = vld [vmem:[%s400 + $0xc8] sm:$0xff]
      %v495 = vld [vmem:[%s400 + $0xd0] sm:$0xff]
      %v496 = vld [vmem:[%s400 + $0xd8] sm:$0xff]
      %v497 = vld [vmem:[%s400 + $0xe0] sm:$0xff]
      %v498 = vld [vmem:[%s400 + $0xe8] sm:$0xff]
      %v499 = vld [vmem:[%s400 + $0xf0] sm:$0xff]
      %v500 = vld [vmem:[%s400 + $0xf8] sm:$0xff]
      %v501 = vld [vmem:[%s431] sm:$0xff]
      %v502 = vld [vmem:[%s431 + $0x8] sm:$0xff]
      %v503 = vpack.c.bf16 %v468, %v467
      %v504 = vpack.c.bf16 %v470, %v469
      %v505 = vpack.c.bf16 %v472, %v471
      %v506 = vpack.c.bf16 %v474, %v473
      %v507 = vpack.c.bf16 %v476, %v475
      %v508 = vpack.c.bf16 %v478, %v477
      %v509 = vpack.c.bf16 %v480, %v479
      %v510 = vpack.c.bf16 %v482, %v481
      %v511 = vpack.c.bf16 %v484, %v483
      %v512 = vpack.c.bf16 %v486, %v485
      %v513 = vpack.c.bf16 %v488, %v487
      %v514 = vpack.c.bf16 %v490, %v489
      %v515 = vpack.c.bf16 %v492, %v491
      %v516 = vpack.c.bf16 %v494, %v493
      %v517 = vpack.c.bf16 %v496, %v495
      %v518 = vpack.c.bf16 %v498, %v497
      %v519 = vpack.c.bf16 %v500, %v499
      %v520 = vpack.c.bf16 %v502, %v501
      %v521 = vlaneseq
      %v522 = vshrl.u32 %v521, 7
      %v523 = vsub.s32 0, %v522
      %v524 = vrot.slane %v464, %v523
      %v541 = vunpack.c.l.b16 %v448
      %v542 = vunpack.c.l.b16 %v449
      %v543 = vunpack.c.l.b16 %v450
      %v544 = vunpack.c.l.b16 %v451
      %v545 = vunpack.c.l.b16 %v452
      %v546 = vunpack.c.l.b16 %v453
      %v547 = vunpack.c.l.b16 %v454
      %v548 = vunpack.c.l.b16 %v455
      %v549 = vunpack.c.l.b16 %v456
      %v550 = vunpack.c.l.b16 %v457
      %v551 = vunpack.c.l.b16 %v458
      %v552 = vunpack.c.l.b16 %v459
      %v553 = vunpack.c.l.b16 %v460
      %v554 = vunpack.c.l.b16 %v461
      %v555 = vunpack.c.l.b16 %v462
      %v556 = vunpack.c.l.b16 %v463
      %v557 = vpack.c.b16 %v542, %v541
      %v558 = vpack.c.b16 %v544, %v543
      %v559 = vpack.c.b16 %v546, %v545
      %v560 = vpack.c.b16 %v548, %v547
      %v561 = vpack.c.b16 %v550, %v549
      %v562 = vpack.c.b16 %v552, %v551
      %v563 = vpack.c.b16 %v554, %v553
      %v564 = vpack.c.b16 %v556, %v555
      %573 = vmatprep.subr.bf16.mxu0 0
      %574 = vmatpush1.bf16.msra.mxu0 %v564
      %575 = vmatprep.subr.bf16.mxu0 0
      %576 = vmatpush1.bf16.msra.mxu0 %v563
      %577 = vmatprep.subr.bf16.mxu0 0
      %578 = vmatpush1.bf16.msra.mxu0 %v562
      %579 = vmatprep.subr.bf16.mxu0 0
      %580 = vmatpush1.bf16.msra.mxu0 %v561
      %581 = vmatprep.subr.bf16.mxu0 0
      %582 = vmatpush1.bf16.msra.mxu0 %v560
      %583 = vmatprep.subr.bf16.mxu0 0
      %584 = vmatpush1.bf16.msra.mxu0 %v559
      %585 = vmatprep.subr.bf16.mxu0 0
      %586 = vmatpush1.bf16.msra.mxu0 %v558
      %587 = vmatprep.subr.bf16.mxu0 0
      %588 = vmatpush1.bf16.msra.mxu0 %v557
      %589 = vmatprep.subr.bf16.mxu0 0
      %590 = vmatpush2.bf16.msra.mxu0 0
      %591 = vmatprep.subr.bf16.mxu0 0
      %592 = vmatpush2.bf16.msra.mxu0 0
      %593 = vmatprep.subr.bf16.mxu0 0
      %594 = vmatpush2.bf16.msra.mxu0 0
      %595 = vmatprep.subr.bf16.mxu0 0
      %596 = vmatpush2.bf16.msra.mxu0 0
      %597 = vmatprep.subr.bf16.mxu0 0
      %598 = vmatpush2.bf16.msra.mxu0 0
      %599 = vmatprep.subr.bf16.mxu0 0
      %600 = vmatpush2.bf16.msra.mxu0 0
      %601 = vmatprep.subr.bf16.mxu0 0
      %602 = vmatpush2.bf16.msra.mxu0 0
      %603 = vmatprep.subr.bf16.mxu0 0
      %604 = vmatpush2.bf16.msra.mxu0 0
      %605 = vmatprep.mubr.bf16.mxu0 0
      %606 = vmatmul.mubr.bf16.gmra.mxu0 %v503
      %v607 = vpop.f32.mrf.mxu0
      %v608 = vadd.f32 %v524, %v607
      %v609 = vpop.f32.mrf.mxu0
      %v610 = vpop.f32.mrf.mxu0
      %v611 = vadd.f32 %v524, %v610
      %v612 = vpop.f32.mrf.mxu0
      %613 = vmatprep.mubr.bf16.mxu0 0
      %614 = vmatmul.mubr.bf16.gmra.mxu0 %v504
      %v615 = vpop.f32.mrf.mxu0
      %v616 = vadd.f32 %v524, %v615
      %v617 = vpop.f32.mrf.mxu0
      %v618 = vpop.f32.mrf.mxu0
      %v619 = vadd.f32 %v524, %v618
      %v620 = vpop.f32.mrf.mxu0
      %621 = vmatprep.mubr.bf16.mxu0 0
      %622 = vmatmul.mubr.bf16.gmra.mxu0 %v505
      %v623 = vpop.f32.mrf.mxu0
      %v624 = vadd.f32 %v524, %v623
      %v625 = vpop.f32.mrf.mxu0
      %v626 = vpop.f32.mrf.mxu0
      %v627 = vadd.f32 %v524, %v626
      %v628 = vpop.f32.mrf.mxu0
      %629 = vmatprep.mubr.bf16.mxu0 0
      %630 = vmatmul.mubr.bf16.gmra.mxu0 %v506
      %v631 = vpop.f32.mrf.mxu0
      %v632 = vadd.f32 %v524, %v631
      %v633 = vpop.f32.mrf.mxu0
      %v634 = vpop.f32.mrf.mxu0
      %v635 = vadd.f32 %v524, %v634
      %v636 = vpop.f32.mrf.mxu0
      %637 = vmatprep.mubr.bf16.mxu0 0
      %638 = vmatmul.mubr.bf16.gmra.mxu0 %v507
      %v639 = vpop.f32.mrf.mxu0
      %v640 = vadd.f32 %v524, %v639
      %v641 = vpop.f32.mrf.mxu0
      %v642 = vpop.f32.mrf.mxu0
      %v643 = vadd.f32 %v524, %v642
      %v644 = vpop.f32.mrf.mxu0
      %645 = vmatprep.mubr.bf16.mxu0 0
      %646 = vmatmul.mubr.bf16.gmra.mxu0 %v508
      %v647 = vpop.f32.mrf.mxu0
      %v648 = vadd.f32 %v524, %v647
      %v649 = vpop.f32.mrf.mxu0
      %v650 = vpop.f32.mrf.mxu0
      %v651 = vadd.f32 %v524, %v650
      %v652 = vpop.f32.mrf.mxu0
      %653 = vmatprep.mubr.bf16.mxu0 0
      %654 = vmatmul.mubr.bf16.gmra.mxu0 %v509
      %v655 = vpop.f32.mrf.mxu0
      %v656 = vadd.f32 %v524, %v655
      %v657 = vpop.f32.mrf.mxu0
      %v658 = vpop.f32.mrf.mxu0
      %v659 = vadd.f32 %v524, %v658
      %v660 = vpop.f32.mrf.mxu0
      %661 = vmatprep.mubr.bf16.mxu0 0
      %662 = vmatmul.mubr.bf16.gmra.mxu0 %v510
      %v663 = vpop.f32.mrf.mxu0
      %v664 = vadd.f32 %v524, %v663
      %v665 = vpop.f32.mrf.mxu0
      %v666 = vpop.f32.mrf.mxu0
      %v667 = vadd.f32 %v524, %v666
      %v668 = vpop.f32.mrf.mxu0
      %669 = vmatprep.mubr.bf16.mxu0 0
      %670 = vmatmul.mubr.bf16.gmra.mxu0 %v511
      %v671 = vpop.f32.mrf.mxu0
      %v672 = vadd.f32 %v524, %v671
      %v673 = vpop.f32.mrf.mxu0
      %v674 = vpop.f32.mrf.mxu0
      %v675 = vadd.f32 %v524, %v674
      %v676 = vpop.f32.mrf.mxu0
      %677 = vmatprep.mubr.bf16.mxu0 0
      %678 = vmatmul.mubr.bf16.gmra.mxu0 %v512
      %v679 = vpop.f32.mrf.mxu0
      %v680 = vadd.f32 %v524, %v679
      %v681 = vpop.f32.mrf.mxu0
      %v682 = vpop.f32.mrf.mxu0
      %v683 = vadd.f32 %v524, %v682
      %v684 = vpop.f32.mrf.mxu0
      %685 = vmatprep.mubr.bf16.mxu0 0
      %686 = vmatmul.mubr.bf16.gmra.mxu0 %v513
      %v687 = vpop.f32.mrf.mxu0
      %v688 = vadd.f32 %v524, %v687
      %v689 = vpop.f32.mrf.mxu0
      %v690 = vpop.f32.mrf.mxu0
      %v691 = vadd.f32 %v524, %v690
      %v692 = vpop.f32.mrf.mxu0
      %693 = vmatprep.mubr.bf16.mxu0 0
      %694 = vmatmul.mubr.bf16.gmra.mxu0 %v514
      %v695 = vpop.f32.mrf.mxu0
      %v696 = vadd.f32 %v524, %v695
      %v697 = vpop.f32.mrf.mxu0
      %v698 = vpop.f32.mrf.mxu0
      %v699 = vadd.f32 %v524, %v698
      %v700 = vpop.f32.mrf.mxu0
      %701 = vmatprep.mubr.bf16.mxu0 0
      %702 = vmatmul.mubr.bf16.gmra.mxu0 %v515
      %v703 = vpop.f32.mrf.mxu0
      %v704 = vadd.f32 %v524, %v703
      %v705 = vpop.f32.mrf.mxu0
      %v706 = vpop.f32.mrf.mxu0
      %v707 = vadd.f32 %v524, %v706
      %v708 = vpop.f32.mrf.mxu0
      %709 = vmatprep.mubr.bf16.mxu0 0
      %710 = vmatmul.mubr.bf16.gmra.mxu0 %v516
      %v711 = vpop.f32.mrf.mxu0
      %v712 = vadd.f32 %v524, %v711
      %v713 = vpop.f32.mrf.mxu0
      %v714 = vpop.f32.mrf.mxu0
      %v715 = vadd.f32 %v524, %v714
      %v716 = vpop.f32.mrf.mxu0
      %717 = vmatprep.mubr.bf16.mxu0 0
      %718 = vmatmul.mubr.bf16.gmra.mxu0 %v517
      %v719 = vpop.f32.mrf.mxu0
      %v720 = vadd.f32 %v524, %v719
      %v721 = vpop.f32.mrf.mxu0
      %v722 = vpop.f32.mrf.mxu0
      %v723 = vadd.f32 %v524, %v722
      %v724 = vpop.f32.mrf.mxu0
      %725 = vmatprep.mubr.bf16.mxu0 0
      %726 = vmatmul.mubr.bf16.gmra.mxu0 %v518
      %v727 = vpop.f32.mrf.mxu0
      %v728 = vadd.f32 %v524, %v727
      %v729 = vpop.f32.mrf.mxu0
      %v730 = vpop.f32.mrf.mxu0
      %v731 = vadd.f32 %v524, %v730
      %v732 = vpop.f32.mrf.mxu0
      %733 = vmatprep.mubr.bf16.mxu0 0
      %734 = vmatmul.mubr.bf16.gmra.mxu0 %v519
      %v735 = vpop.f32.mrf.mxu0
      %v736 = vadd.f32 %v524, %v735
      %v737 = vpop.f32.mrf.mxu0
      %v738 = vpop.f32.mrf.mxu0
      %v739 = vadd.f32 %v524, %v738
      %v740 = vpop.f32.mrf.mxu0
      %741 = vmatprep.mubr.bf16.mxu0 0
      %742 = vmatmul.mubr.bf16.gmra.mxu0 %v520
      %v743 = vpop.f32.mrf.mxu0
      %v744 = vadd.f32 %v524, %v743
      %v745 = vpop.f32.mrf.mxu0
      %v746 = vpop.f32.mrf.mxu0
      %v747 = vadd.f32 %v524, %v746
      %v748 = vpop.f32.mrf.mxu0
      %749 = vdwg.mxu0
      %v750 = vmax.f32 %v608, 0.0
      %v751 = vmax.f32 %v611, 0.0
      %v752 = vmax.f32 %v616, 0.0
      %v753 = vmax.f32 %v619, 0.0
      %v754 = vmax.f32 %v624, 0.0
      %v755 = vmax.f32 %v627, 0.0
      %v756 = vmax.f32 %v632, 0.0
      %v757 = vmax.f32 %v635, 0.0
      %v758 = vmax.f32 %v640, 0.0
      %v759 = vmax.f32 %v643, 0.0
      %v760 = vmax.f32 %v648, 0.0
      %v761 = vmax.f32 %v651, 0.0
      %v762 = vmax.f32 %v656, 0.0
      %v763 = vmax.f32 %v659, 0.0
      %v764 = vmax.f32 %v664, 0.0
      %v765 = vmax.f32 %v667, 0.0
      %v766 = vmax.f32 %v672, 0.0
      %v767 = vmax.f32 %v675, 0.0
      %v768 = vmax.f32 %v680, 0.0
      %v769 = vmax.f32 %v683, 0.0
      %v770 = vmax.f32 %v688, 0.0
      %v771 = vmax.f32 %v691, 0.0
      %v772 = vmax.f32 %v696, 0.0
      %v773 = vmax.f32 %v699, 0.0
      %v774 = vmax.f32 %v704, 0.0
      %v775 = vmax.f32 %v707, 0.0
      %v776 = vmax.f32 %v712, 0.0
      %v777 = vmax.f32 %v715, 0.0
      %v778 = vmax.f32 %v720, 0.0
      %v779 = vmax.f32 %v723, 0.0
      %v780 = vmax.f32 %v728, 0.0
      %v781 = vmax.f32 %v731, 0.0
      %v782 = vmax.f32 %v736, 0.0
      %v783 = vmax.f32 %v739, 0.0
      %v784 = vmax.f32 %v744, 0.0
      %v785 = vmax.f32 %v747, 0.0
      %p786 = scmp.gt.s32.totalorder %s23, 0
      %s787 = scalar_select %p786, 1, 0
      %v788 = vstv %s787
      %vm789 = vcmp.eq.s32.totalorder %v788, 1
      %p790 = scmp.lt.s32.totalorder %s23, 0
      %s791 = scalar_select %p790, 1, 0
      %v792 = vstv %s791
      %vm793 = vcmp.eq.s32.totalorder %v792, 1
      %v794 = vsel %vm789, 1, 0
      %v795 = vsel %vm793, 1, 0
      %vm796 = vcmp.eq.s32.totalorder %v794, 1
      %vm797 = vcmp.eq.s32.totalorder %v795, 1
      %v798 = vsel %vm796, %v750, 0.0
      %v799 = vsel %vm796, %v751, 0.0
      %v800 = vsel 1, %v752, 0.0
      %v801 = vsel 1, %v753, 0.0
      %v802 = vsel 1, %v754, 0.0
      %v803 = vsel 1, %v755, 0.0
      %v804 = vsel 1, %v756, 0.0
      %v805 = vsel 1, %v757, 0.0
      %v806 = vsel 1, %v758, 0.0
      %v807 = vsel 1, %v759, 0.0
      %v808 = vsel 1, %v760, 0.0
      %v809 = vsel 1, %v761, 0.0
      %v810 = vsel 1, %v762, 0.0
      %v811 = vsel 1, %v763, 0.0
      %v812 = vsel 1, %v764, 0.0
      %v813 = vsel 1, %v765, 0.0
      %v814 = vsel 1, %v766, 0.0
      %v815 = vsel 1, %v767, 0.0
      %v816 = vsel 1, %v768, 0.0
      %v817 = vsel 1, %v769, 0.0
      %v818 = vsel 1, %v770, 0.0
      %v819 = vsel 1, %v771, 0.0
      %v820 = vsel 1, %v772, 0.0
      %v821 = vsel 1, %v773, 0.0
      %v822 = vsel 1, %v774, 0.0
      %v823 = vsel 1, %v775, 0.0
      %v824 = vsel 1, %v776, 0.0
      %v825 = vsel 1, %v777, 0.0
      %v826 = vsel 1, %v778, 0.0
      %v827 = vsel 1, %v779, 0.0
      %v828 = vsel 1, %v780, 0.0
      %v829 = vsel 1, %v781, 0.0
      %v830 = vsel 1, %v782, 0.0
      %v831 = vsel 1, %v783, 0.0
      %v832 = vsel %vm797, %v784, 0.0
      %v833 = vsel %vm797, %v785, 0.0
      %v834 = vpack.c.bf16 %v799, %v798
      %v835 = vpack.c.bf16 %v801, %v800
      %v836 = vpack.c.bf16 %v803, %v802
      %v837 = vpack.c.bf16 %v805, %v804
      %v838 = vpack.c.bf16 %v807, %v806
      %v839 = vpack.c.bf16 %v809, %v808
      %v840 = vpack.c.bf16 %v811, %v810
      %v841 = vpack.c.bf16 %v813, %v812
      %v842 = vpack.c.bf16 %v815, %v814
      %v843 = vpack.c.bf16 %v817, %v816
      %v844 = vpack.c.bf16 %v819, %v818
      %v845 = vpack.c.bf16 %v821, %v820
      %v846 = vpack.c.bf16 %v823, %v822
      %v847 = vpack.c.bf16 %v825, %v824
      %v848 = vpack.c.bf16 %v827, %v826
      %v849 = vpack.c.bf16 %v829, %v828
      %v850 = vpack.c.bf16 %v831, %v830
      %v851 = vpack.c.bf16 %v833, %v832
      %v853 = vshrl.u32 %v834, 16
      %v855 = vrot.slane %v853, 7
      %v856 = vshll.u32 %v834, 16
      %v858 = vor.u32 %v855, %v856
      %v860 = vshrl.u32 %v835, 16
      %v862 = vrot.slane %v860, 7
      %v863 = vshll.u32 %v835, 16
      %v865 = vor.u32 %v862, %v863
      %v867 = vshrl.u32 %v836, 16
      %v869 = vrot.slane %v867, 7
      %v870 = vshll.u32 %v836, 16
      %v872 = vor.u32 %v869, %v870
      %v874 = vshrl.u32 %v837, 16
      %v876 = vrot.slane %v874, 7
      %v877 = vshll.u32 %v837, 16
      %v879 = vor.u32 %v876, %v877
      %v881 = vshrl.u32 %v838, 16
      %v883 = vrot.slane %v881, 7
      %v884 = vshll.u32 %v838, 16
      %v886 = vor.u32 %v883, %v884
      %v888 = vshrl.u32 %v839, 16
      %v890 = vrot.slane %v888, 7
      %v891 = vshll.u32 %v839, 16
      %v893 = vor.u32 %v890, %v891
      %v895 = vshrl.u32 %v840, 16
      %v897 = vrot.slane %v895, 7
      %v898 = vshll.u32 %v840, 16
      %v900 = vor.u32 %v897, %v898
      %v902 = vshrl.u32 %v841, 16
      %v904 = vrot.slane %v902, 7
      %v905 = vshll.u32 %v841, 16
      %v907 = vor.u32 %v904, %v905
      %v909 = vshrl.u32 %v842, 16
      %v911 = vrot.slane %v909, 7
      %v912 = vshll.u32 %v842, 16
      %v914 = vor.u32 %v911, %v912
      %v916 = vshrl.u32 %v843, 16
      %v918 = vrot.slane %v916, 7
      %v919 = vshll.u32 %v843, 16
      %v921 = vor.u32 %v918, %v919
      %v923 = vshrl.u32 %v844, 16
      %v925 = vrot.slane %v923, 7
      %v926 = vshll.u32 %v844, 16
      %v928 = vor.u32 %v925, %v926
      %v930 = vshrl.u32 %v845, 16
      %v932 = vrot.slane %v930, 7
      %v933 = vshll.u32 %v845, 16
      %v935 = vor.u32 %v932, %v933
      %v937 = vshrl.u32 %v846, 16
      %v939 = vrot.slane %v937, 7
      %v940 = vshll.u32 %v846, 16
      %v942 = vor.u32 %v939, %v940
      %v944 = vshrl.u32 %v847, 16
      %v946 = vrot.slane %v944, 7
      %v947 = vshll.u32 %v847, 16
      %v949 = vor.u32 %v946, %v947
      %v951 = vshrl.u32 %v848, 16
      %v953 = vrot.slane %v951, 7
      %v954 = vshll.u32 %v848, 16
      %v956 = vor.u32 %v953, %v954
      %v958 = vshrl.u32 %v849, 16
      %v960 = vrot.slane %v958, 7
      %v961 = vshll.u32 %v849, 16
      %v963 = vor.u32 %v960, %v961
      %v965 = vshrl.u32 %v850, 16
      %v967 = vrot.slane %v965, 7
      %v968 = vshll.u32 %v850, 16
      %v970 = vor.u32 %v967, %v968
      %v972 = vshrl.u32 %v851, 16
      %v974 = vrot.slane %v972, 7
      %v975 = vshll.u32 %v851, 16
      %v977 = vor.u32 %v974, %v975
      %vm996 = vcmask 1040384
      %vm997 = vsmask.f32 256
      %vm998 = vmand %vm996, %vm997
      %v999 = vsel %vm998, 0, %v858
      %v1000 = vsel %vm998, 0, %v865
      %v1001 = vsel %vm998, 0, %v872
      %v1002 = vsel %vm998, 0, %v879
      %v1003 = vsel %vm998, 0, %v886
      %v1004 = vsel %vm998, 0, %v893
      %v1005 = vsel %vm998, 0, %v900
      %v1006 = vsel %vm998, 0, %v907
      %v1007 = vsel %vm998, 0, %v914
      %v1008 = vsel %vm998, 0, %v921
      %v1009 = vsel %vm998, 0, %v928
      %v1010 = vsel %vm998, 0, %v935
      %v1011 = vsel %vm998, 0, %v942
      %v1012 = vsel %vm998, 0, %v949
      %v1013 = vsel %vm998, 0, %v956
      %v1014 = vsel %vm998, 0, %v963
      %v1015 = vsel %vm998, 0, %v970
      %v1016 = vsel %vm998, 0, %v977
      %v1035 = vunpack.c.l.b16 %v999
      %v1036 = vunpack.c.h.b16 %v999
      %v1037 = vunpack.c.l.b16 %v1000
      %v1038 = vunpack.c.h.b16 %v1000
      %v1039 = vunpack.c.l.b16 %v1001
      %v1040 = vunpack.c.h.b16 %v1001
      %v1041 = vunpack.c.l.b16 %v1002
      %v1042 = vunpack.c.h.b16 %v1002
      %v1043 = vunpack.c.l.b16 %v1003
      %v1044 = vunpack.c.h.b16 %v1003
      %v1045 = vunpack.c.l.b16 %v1004
      %v1046 = vunpack.c.h.b16 %v1004
      %v1047 = vunpack.c.l.b16 %v1005
      %v1048 = vunpack.c.h.b16 %v1005
      %v1049 = vunpack.c.l.b16 %v1006
      %v1050 = vunpack.c.h.b16 %v1006
      %v1051 = vunpack.c.l.b16 %v1007
      %v1052 = vunpack.c.h.b16 %v1007
      %v1053 = vunpack.c.l.b16 %v1008
      %v1054 = vunpack.c.h.b16 %v1008
      %v1055 = vunpack.c.l.b16 %v1009
      %v1056 = vunpack.c.h.b16 %v1009
      %v1057 = vunpack.c.l.b16 %v1010
      %v1058 = vunpack.c.h.b16 %v1010
      %v1059 = vunpack.c.l.b16 %v1011
      %v1060 = vunpack.c.h.b16 %v1011
      %v1061 = vunpack.c.l.b16 %v1012
      %v1062 = vunpack.c.h.b16 %v1012
      %v1063 = vunpack.c.l.b16 %v1013
      %v1064 = vunpack.c.h.b16 %v1013
      %v1065 = vunpack.c.l.b16 %v1014
      %v1066 = vunpack.c.h.b16 %v1014
      %v1067 = vunpack.c.l.b16 %v1015
      %v1068 = vunpack.c.h.b16 %v1015
      %v1069 = vunpack.c.l.b16 %v1016
      %v1070 = vunpack.c.h.b16 %v1016
      %v1071 = vpack.c.b16 %v1035, %v1035
      %v1072 = vpack.c.b16 %v1036, %v1036
      %v1073 = vpack.c.b16 %v1037, %v1037
      %v1074 = vpack.c.b16 %v1038, %v1038
      %v1075 = vpack.c.b16 %v1039, %v1039
      %v1076 = vpack.c.b16 %v1040, %v1040
      %v1077 = vpack.c.b16 %v1041, %v1041
      %v1078 = vpack.c.b16 %v1042, %v1042
      %v1079 = vpack.c.b16 %v1043, %v1043
      %v1080 = vpack.c.b16 %v1044, %v1044
      %v1081 = vpack.c.b16 %v1045, %v1045
      %v1082 = vpack.c.b16 %v1046, %v1046
      %v1083 = vpack.c.b16 %v1047, %v1047
      %v1084 = vpack.c.b16 %v1048, %v1048
      %v1085 = vpack.c.b16 %v1049, %v1049
      %v1086 = vpack.c.b16 %v1050, %v1050
      %v1087 = vpack.c.b16 %v1051, %v1051
      %v1088 = vpack.c.b16 %v1052, %v1052
      %v1089 = vpack.c.b16 %v1053, %v1053
      %v1090 = vpack.c.b16 %v1054, %v1054
      %v1091 = vpack.c.b16 %v1055, %v1055
      %v1092 = vpack.c.b16 %v1056, %v1056
      %v1093 = vpack.c.b16 %v1057, %v1057
      %v1094 = vpack.c.b16 %v1058, %v1058
      %v1095 = vpack.c.b16 %v1059, %v1059
      %v1096 = vpack.c.b16 %v1060, %v1060
      %v1097 = vpack.c.b16 %v1061, %v1061
      %v1098 = vpack.c.b16 %v1062, %v1062
      %v1099 = vpack.c.b16 %v1063, %v1063
      %v1100 = vpack.c.b16 %v1064, %v1064
      %v1101 = vpack.c.b16 %v1065, %v1065
      %v1102 = vpack.c.b16 %v1066, %v1066
      %v1103 = vpack.c.b16 %v1067, %v1067
      %v1104 = vpack.c.b16 %v1068, %v1068
      %v1105 = vpack.c.b16 %v1069, %v1069
      %v1106 = vpack.c.b16 %v1070, %v1070
      %1143 = vst [vmem:[#allocation2] sm:$0xf] %v1071
      %1144 = vst [vmem:[#allocation2 + $0x4] sm:$0xf] %v1072
      %1145 = vst [vmem:[#allocation2 + $0x8] sm:$0xf] %v1073
      %1146 = vst [vmem:[#allocation2 + $0xc] sm:$0xf] %v1074
      %1147 = vst [vmem:[#allocation2 + $0x10] sm:$0xf] %v1075
      %1148 = vst [vmem:[#allocation2 + $0x14] sm:$0xf] %v1076
      %1149 = vst [vmem:[#allocation2 + $0x18] sm:$0xf] %v1077
      %1150 = vst [vmem:[#allocation2 + $0x1c] sm:$0xf] %v1078
      %1151 = vst [vmem:[#allocation2 + $0x20] sm:$0xf] %v1079
      %1152 = vst [vmem:[#allocation2 + $0x24] sm:$0xf] %v1080
      %1153 = vst [vmem:[#allocation2 + $0x28] sm:$0xf] %v1081
      %1154 = vst [vmem:[#allocation2 + $0x2c] sm:$0xf] %v1082
      %1155 = vst [vmem:[#allocation2 + $0x30] sm:$0xf] %v1083
      %1156 = vst [vmem:[#allocation2 + $0x34] sm:$0xf] %v1084
      %1157 = vst [vmem:[#allocation2 + $0x38] sm:$0xf] %v1085
      %1158 = vst [vmem:[#allocation2 + $0x3c] sm:$0xf] %v1086
      %1159 = vst [vmem:[#allocation2 + $0x40] sm:$0xf] %v1087
      %1160 = vst [vmem:[#allocation2 + $0x44] sm:$0xf] %v1088
      %1161 = vst [vmem:[#allocation2 + $0x48] sm:$0xf] %v1089
      %1162 = vst [vmem:[#allocation2 + $0x4c] sm:$0xf] %v1090
      %1163 = vst [vmem:[#allocation2 + $0x50] sm:$0xf] %v1091
      %1164 = vst [vmem:[#allocation2 + $0x54] sm:$0xf] %v1092
      %1165 = vst [vmem:[#allocation2 + $0x58] sm:$0xf] %v1093
      %1166 = vst [vmem:[#allocation2 + $0x5c] sm:$0xf] %v1094
      %1167 = vst [vmem:[#allocation2 + $0x60] sm:$0xf] %v1095
      %1168 = vst [vmem:[#allocation2 + $0x64] sm:$0xf] %v1096
      %1169 = vst [vmem:[#allocation2 + $0x68] sm:$0xf] %v1097
      %1170 = vst [vmem:[#allocation2 + $0x6c] sm:$0xf] %v1098
      %1171 = vst [vmem:[#allocation2 + $0x70] sm:$0xf] %v1099
      %1172 = vst [vmem:[#allocation2 + $0x74] sm:$0xf] %v1100
      %1173 = vst [vmem:[#allocation2 + $0x78] sm:$0xf] %v1101
      %1174 = vst [vmem:[#allocation2 + $0x7c] sm:$0xf] %v1102
      %1175 = vst [vmem:[#allocation2 + $0x80] sm:$0xf] %v1103
      %1176 = vst [vmem:[#allocation2 + $0x84] sm:$0xf] %v1104
      %1177 = vst [vmem:[#allocation2 + $0x88] sm:$0xf] %v1105
      %1178 = vst [vmem:[#allocation2 + $0x8c] sm:$0xf] %v1106
      %v1197 = vunpack.c.l.b16 %v834
      %v1198 = vunpack.c.h.b16 %v834
      %v1199 = vunpack.c.l.b16 %v835
      %v1200 = vunpack.c.h.b16 %v835
      %v1201 = vunpack.c.l.b16 %v836
      %v1202 = vunpack.c.h.b16 %v836
      %v1203 = vunpack.c.l.b16 %v837
      %v1204 = vunpack.c.h.b16 %v837
      %v1205 = vunpack.c.l.b16 %v838
      %v1206 = vunpack.c.h.b16 %v838
      %v1207 = vunpack.c.l.b16 %v839
      %v1208 = vunpack.c.h.b16 %v839
      %v1209 = vunpack.c.l.b16 %v840
      %v1210 = vunpack.c.h.b16 %v840
      %v1211 = vunpack.c.l.b16 %v841
      %v1212 = vunpack.c.h.b16 %v841
      %v1213 = vunpack.c.l.b16 %v842
      %v1214 = vunpack.c.h.b16 %v842
      %v1215 = vunpack.c.l.b16 %v843
      %v1216 = vunpack.c.h.b16 %v843
      %v1217 = vunpack.c.l.b16 %v844
      %v1218 = vunpack.c.h.b16 %v844
      %v1219 = vunpack.c.l.b16 %v845
      %v1220 = vunpack.c.h.b16 %v845
      %v1221 = vunpack.c.l.b16 %v846
      %v1222 = vunpack.c.h.b16 %v846
      %v1223 = vunpack.c.l.b16 %v847
      %v1224 = vunpack.c.h.b16 %v847
      %v1225 = vunpack.c.l.b16 %v848
      %v1226 = vunpack.c.h.b16 %v848
      %v1227 = vunpack.c.l.b16 %v849
      %v1228 = vunpack.c.h.b16 %v849
      %v1229 = vunpack.c.l.b16 %v850
      %v1230 = vunpack.c.h.b16 %v850
      %v1231 = vunpack.c.l.b16 %v851
      %v1232 = vunpack.c.h.b16 %v851
      %v1233 = vpack.c.b16 %v1197, %v1197
      %v1234 = vpack.c.b16 %v1198, %v1198
      %v1235 = vpack.c.b16 %v1199, %v1199
      %v1236 = vpack.c.b16 %v1200, %v1200
      %v1237 = vpack.c.b16 %v1201, %v1201
      %v1238 = vpack.c.b16 %v1202, %v1202
      %v1239 = vpack.c.b16 %v1203, %v1203
      %v1240 = vpack.c.b16 %v1204, %v1204
      %v1241 = vpack.c.b16 %v1205, %v1205
      %v1242 = vpack.c.b16 %v1206, %v1206
      %v1243 = vpack.c.b16 %v1207, %v1207
      %v1244 = vpack.c.b16 %v1208, %v1208
      %v1245 = vpack.c.b16 %v1209, %v1209
      %v1246 = vpack.c.b16 %v1210, %v1210
      %v1247 = vpack.c.b16 %v1211, %v1211
      %v1248 = vpack.c.b16 %v1212, %v1212
      %v1249 = vpack.c.b16 %v1213, %v1213
      %v1250 = vpack.c.b16 %v1214, %v1214
      %v1251 = vpack.c.b16 %v1215, %v1215
      %v1252 = vpack.c.b16 %v1216, %v1216
      %v1253 = vpack.c.b16 %v1217, %v1217
      %v1254 = vpack.c.b16 %v1218, %v1218
      %v1255 = vpack.c.b16 %v1219, %v1219
      %v1256 = vpack.c.b16 %v1220, %v1220
      %v1257 = vpack.c.b16 %v1221, %v1221
      %v1258 = vpack.c.b16 %v1222, %v1222
      %v1259 = vpack.c.b16 %v1223, %v1223
      %v1260 = vpack.c.b16 %v1224, %v1224
      %v1261 = vpack.c.b16 %v1225, %v1225
      %v1262 = vpack.c.b16 %v1226, %v1226
      %v1263 = vpack.c.b16 %v1227, %v1227
      %v1264 = vpack.c.b16 %v1228, %v1228
      %v1265 = vpack.c.b16 %v1229, %v1229
      %v1266 = vpack.c.b16 %v1230, %v1230
      %v1267 = vpack.c.b16 %v1231, %v1231
      %v1268 = vpack.c.b16 %v1232, %v1232
      %s1305 = scalar_lea.vmem [#allocation2], 144
      %1306 = vst [vmem:[%s1305] sm:$0xf] %v1233
      %1307 = vst [vmem:[%s1305 + $0x4] sm:$0xf] %v1234
      %1308 = vst [vmem:[%s1305 + $0x8] sm:$0xf] %v1235
      %1309 = vst [vmem:[%s1305 + $0xc] sm:$0xf] %v1236
      %1310 = vst [vmem:[%s1305 + $0x10] sm:$0xf] %v1237
      %1311 = vst [vmem:[%s1305 + $0x14] sm:$0xf] %v1238
      %1312 = vst [vmem:[%s1305 + $0x18] sm:$0xf] %v1239
      %1313 = vst [vmem:[%s1305 + $0x1c] sm:$0xf] %v1240
      %1314 = vst [vmem:[%s1305 + $0x20] sm:$0xf] %v1241
      %1315 = vst [vmem:[%s1305 + $0x24] sm:$0xf] %v1242
      %1316 = vst [vmem:[%s1305 + $0x28] sm:$0xf] %v1243
      %1317 = vst [vmem:[%s1305 + $0x2c] sm:$0xf] %v1244
      %1318 = vst [vmem:[%s1305 + $0x30] sm:$0xf] %v1245
      %1319 = vst [vmem:[%s1305 + $0x34] sm:$0xf] %v1246
      %1320 = vst [vmem:[%s1305 + $0x38] sm:$0xf] %v1247
      %1321 = vst [vmem:[%s1305 + $0x3c] sm:$0xf] %v1248
      %1322 = vst [vmem:[%s1305 + $0x40] sm:$0xf] %v1249
      %1323 = vst [vmem:[%s1305 + $0x44] sm:$0xf] %v1250
      %1324 = vst [vmem:[%s1305 + $0x48] sm:$0xf] %v1251
      %1325 = vst [vmem:[%s1305 + $0x4c] sm:$0xf] %v1252
      %1326 = vst [vmem:[%s1305 + $0x50] sm:$0xf] %v1253
      %1327 = vst [vmem:[%s1305 + $0x54] sm:$0xf] %v1254
      %1328 = vst [vmem:[%s1305 + $0x58] sm:$0xf] %v1255
      %1329 = vst [vmem:[%s1305 + $0x5c] sm:$0xf] %v1256
      %1330 = vst [vmem:[%s1305 + $0x60] sm:$0xf] %v1257
      %1331 = vst [vmem:[%s1305 + $0x64] sm:$0xf] %v1258
      %1332 = vst [vmem:[%s1305 + $0x68] sm:$0xf] %v1259
      %1333 = vst [vmem:[%s1305 + $0x6c] sm:$0xf] %v1260
      %1334 = vst [vmem:[%s1305 + $0x70] sm:$0xf] %v1261
      %1335 = vst [vmem:[%s1305 + $0x74] sm:$0xf] %v1262
      %1336 = vst [vmem:[%s1305 + $0x78] sm:$0xf] %v1263
      %1337 = vst [vmem:[%s1305 + $0x7c] sm:$0xf] %v1264
      %1338 = vst [vmem:[%s1305 + $0x80] sm:$0xf] %v1265
      %1339 = vst [vmem:[%s1305 + $0x84] sm:$0xf] %v1266
      %1340 = vst [vmem:[%s1305 + $0x88] sm:$0xf] %v1267
      %1341 = vst [vmem:[%s1305 + $0x8c] sm:$0xf] %v1268
      %v1342 = vrot.slane %v856, 1
      %v1343 = vor.u32 %v853, %v1342
      %v1344 = vrot.slane %v863, 1
      %v1345 = vor.u32 %v860, %v1344
      %v1346 = vrot.slane %v870, 1
      %v1347 = vor.u32 %v867, %v1346
      %v1348 = vrot.slane %v877, 1
      %v1349 = vor.u32 %v874, %v1348
      %v1350 = vrot.slane %v884, 1
      %v1351 = vor.u32 %v881, %v1350
      %v1352 = vrot.slane %v891, 1
      %v1353 = vor.u32 %v888, %v1352
      %v1354 = vrot.slane %v898, 1
      %v1355 = vor.u32 %v895, %v1354
      %v1356 = vrot.slane %v905, 1
      %v1357 = vor.u32 %v902, %v1356
      %v1358 = vrot.slane %v912, 1
      %v1359 = vor.u32 %v909, %v1358
      %v1360 = vrot.slane %v919, 1
      %v1361 = vor.u32 %v916, %v1360
      %v1362 = vrot.slane %v926, 1
      %v1363 = vor.u32 %v923, %v1362
      %v1364 = vrot.slane %v933, 1
      %v1365 = vor.u32 %v930, %v1364
      %v1366 = vrot.slane %v940, 1
      %v1367 = vor.u32 %v937, %v1366
      %v1368 = vrot.slane %v947, 1
      %v1369 = vor.u32 %v944, %v1368
      %v1370 = vrot.slane %v954, 1
      %v1371 = vor.u32 %v951, %v1370
      %v1372 = vrot.slane %v961, 1
      %v1373 = vor.u32 %v958, %v1372
      %v1374 = vrot.slane %v968, 1
      %v1375 = vor.u32 %v965, %v1374
      %v1376 = vrot.slane %v975, 1
      %v1377 = vor.u32 %v972, %v1376
      %vm1396 = vcmask 1047552
      %vm1397 = vsmask.f32 7424
      %vm1398 = vmand %vm1396, %vm1397
      %v1399 = vsel %vm1398, %v1343, 0
      %v1400 = vsel %vm1398, %v1345, 0
      %v1401 = vsel %vm1398, %v1347, 0
      %v1402 = vsel %vm1398, %v1349, 0
      %v1403 = vsel %vm1398, %v1351, 0
      %v1404 = vsel %vm1398, %v1353, 0
      %v1405 = vsel %vm1398, %v1355, 0
      %v1406 = vsel %vm1398, %v1357, 0
      %v1407 = vsel %vm1398, %v1359, 0
      %v1408 = vsel %vm1398, %v1361, 0
      %v1409 = vsel %vm1398, %v1363, 0
      %v1410 = vsel %vm1398, %v1365, 0
      %v1411 = vsel %vm1398, %v1367, 0
      %v1412 = vsel %vm1398, %v1369, 0
      %v1413 = vsel %vm1398, %v1371, 0
      %v1414 = vsel %vm1398, %v1373, 0
      %v1415 = vsel %vm1398, %v1375, 0
      %v1416 = vsel %vm1398, %v1377, 0
      %v1435 = vunpack.c.l.b16 %v1399
      %v1436 = vunpack.c.h.b16 %v1399
      %v1437 = vunpack.c.l.b16 %v1400
      %v1438 = vunpack.c.h.b16 %v1400
      %v1439 = vunpack.c.l.b16 %v1401
      %v1440 = vunpack.c.h.b16 %v1401
      %v1441 = vunpack.c.l.b16 %v1402
      %v1442 = vunpack.c.h.b16 %v1402
      %v1443 = vunpack.c.l.b16 %v1403
      %v1444 = vunpack.c.h.b16 %v1403
      %v1445 = vunpack.c.l.b16 %v1404
      %v1446 = vunpack.c.h.b16 %v1404
      %v1447 = vunpack.c.l.b16 %v1405
      %v1448 = vunpack.c.h.b16 %v1405
      %v1449 = vunpack.c.l.b16 %v1406
      %v1450 = vunpack.c.h.b16 %v1406
      %v1451 = vunpack.c.l.b16 %v1407
      %v1452 = vunpack.c.h.b16 %v1407
      %v1453 = vunpack.c.l.b16 %v1408
      %v1454 = vunpack.c.h.b16 %v1408
      %v1455 = vunpack.c.l.b16 %v1409
      %v1456 = vunpack.c.h.b16 %v1409
      %v1457 = vunpack.c.l.b16 %v1410
      %v1458 = vunpack.c.h.b16 %v1410
      %v1459 = vunpack.c.l.b16 %v1411
      %v1460 = vunpack.c.h.b16 %v1411
      %v1461 = vunpack.c.l.b16 %v1412
      %v1462 = vunpack.c.h.b16 %v1412
      %v1463 = vunpack.c.l.b16 %v1413
      %v1464 = vunpack.c.h.b16 %v1413
      %v1465 = vunpack.c.l.b16 %v1414
      %v1466 = vunpack.c.h.b16 %v1414
      %v1467 = vunpack.c.l.b16 %v1415
      %v1468 = vunpack.c.h.b16 %v1415
      %v1469 = vunpack.c.l.b16 %v1416
      %v1470 = vunpack.c.h.b16 %v1416
      %v1471 = vpack.c.b16 %v1435, %v1435
      %v1472 = vpack.c.b16 %v1436, %v1436
      %v1473 = vpack.c.b16 %v1437, %v1437
      %v1474 = vpack.c.b16 %v1438, %v1438
      %v1475 = vpack.c.b16 %v1439, %v1439
      %v1476 = vpack.c.b16 %v1440, %v1440
      %v1477 = vpack.c.b16 %v1441, %v1441
      %v1478 = vpack.c.b16 %v1442, %v1442
      %v1479 = vpack.c.b16 %v1443, %v1443
      %v1480 = vpack.c.b16 %v1444, %v1444
      %v1481 = vpack.c.b16 %v1445, %v1445
      %v1482 = vpack.c.b16 %v1446, %v1446
      %v1483 = vpack.c.b16 %v1447, %v1447
      %v1484 = vpack.c.b16 %v1448, %v1448
      %v1485 = vpack.c.b16 %v1449, %v1449
      %v1486 = vpack.c.b16 %v1450, %v1450
      %v1487 = vpack.c.b16 %v1451, %v1451
      %v1488 = vpack.c.b16 %v1452, %v1452
      %v1489 = vpack.c.b16 %v1453, %v1453
      %v1490 = vpack.c.b16 %v1454, %v1454
      %v1491 = vpack.c.b16 %v1455, %v1455
      %v1492 = vpack.c.b16 %v1456, %v1456
      %v1493 = vpack.c.b16 %v1457, %v1457
      %v1494 = vpack.c.b16 %v1458, %v1458
      %v1495 = vpack.c.b16 %v1459, %v1459
      %v1496 = vpack.c.b16 %v1460, %v1460
      %v1497 = vpack.c.b16 %v1461, %v1461
      %v1498 = vpack.c.b16 %v1462, %v1462
      %v1499 = vpack.c.b16 %v1463, %v1463
      %v1500 = vpack.c.b16 %v1464, %v1464
      %v1501 = vpack.c.b16 %v1465, %v1465
      %v1502 = vpack.c.b16 %v1466, %v1466
      %v1503 = vpack.c.b16 %v1467, %v1467
      %v1504 = vpack.c.b16 %v1468, %v1468
      %v1505 = vpack.c.b16 %v1469, %v1469
      %v1506 = vpack.c.b16 %v1470, %v1470
      %s1543 = scalar_lea.vmem [#allocation2], 288
      %1544 = vst [vmem:[%s1543] sm:$0xf] %v1471
      %1545 = vst [vmem:[%s1543 + $0x4] sm:$0xf] %v1472
      %1546 = vst [vmem:[%s1543 + $0x8] sm:$0xf] %v1473
      %1547 = vst [vmem:[%s1543 + $0xc] sm:$0xf] %v1474
      %1548 = vst [vmem:[%s1543 + $0x10] sm:$0xf] %v1475
      %1549 = vst [vmem:[%s1543 + $0x14] sm:$0xf] %v1476
      %1550 = vst [vmem:[%s1543 + $0x18] sm:$0xf] %v1477
      %1551 = vst [vmem:[%s1543 + $0x1c] sm:$0xf] %v1478
      %1552 = vst [vmem:[%s1543 + $0x20] sm:$0xf] %v1479
      %1553 = vst [vmem:[%s1543 + $0x24] sm:$0xf] %v1480
      %1554 = vst [vmem:[%s1543 + $0x28] sm:$0xf] %v1481
      %1555 = vst [vmem:[%s1543 + $0x2c] sm:$0xf] %v1482
      %1556 = vst [vmem:[%s1543 + $0x30] sm:$0xf] %v1483
      %1557 = vst [vmem:[%s1543 + $0x34] sm:$0xf] %v1484
      %1558 = vst [vmem:[%s1543 + $0x38] sm:$0xf] %v1485
      %1559 = vst [vmem:[%s1543 + $0x3c] sm:$0xf] %v1486
      %1560 = vst [vmem:[%s1543 + $0x40] sm:$0xf] %v1487
      %1561 = vst [vmem:[%s1543 + $0x44] sm:$0xf] %v1488
      %1562 = vst [vmem:[%s1543 + $0x48] sm:$0xf] %v1489
      %1563 = vst [vmem:[%s1543 + $0x4c] sm:$0xf] %v1490
      %1564 = vst [vmem:[%s1543 + $0x50] sm:$0xf] %v1491
      %1565 = vst [vmem:[%s1543 + $0x54] sm:$0xf] %v1492
      %1566 = vst [vmem:[%s1543 + $0x58] sm:$0xf] %v1493
      %1567 = vst [vmem:[%s1543 + $0x5c] sm:$0xf] %v1494
      %1568 = vst [vmem:[%s1543 + $0x60] sm:$0xf] %v1495
      %1569 = vst [vmem:[%s1543 + $0x64] sm:$0xf] %v1496
      %1570 = vst [vmem:[%s1543 + $0x68] sm:$0xf] %v1497
      %1571 = vst [vmem:[%s1543 + $0x6c] sm:$0xf] %v1498
      %1572 = vst [vmem:[%s1543 + $0x70] sm:$0xf] %v1499
      %1573 = vst [vmem:[%s1543 + $0x74] sm:$0xf] %v1500
      %1574 = vst [vmem:[%s1543 + $0x78] sm:$0xf] %v1501
      %1575 = vst [vmem:[%s1543 + $0x7c] sm:$0xf] %v1502
      %1576 = vst [vmem:[%s1543 + $0x80] sm:$0xf] %v1503
      %1577 = vst [vmem:[%s1543 + $0x84] sm:$0xf] %v1504
      %1578 = vst [vmem:[%s1543 + $0x88] sm:$0xf] %v1505
      %1579 = vst [vmem:[%s1543 + $0x8c] sm:$0xf] %v1506
      %v1580 = vld [vmem:[#allocation2] sm:$0xf]
      %v1581 = vld [vmem:[#allocation2 + $0x4] sm:$0xf]
      %v1582 = vld [vmem:[#allocation2 + $0x8] sm:$0xf]
      %v1583 = vld [vmem:[#allocation2 + $0xc] sm:$0xf]
      %v1584 = vld [vmem:[#allocation2 + $0x10] sm:$0xf]
      %v1585 = vld [vmem:[#allocation2 + $0x14] sm:$0xf]
      %v1586 = vld [vmem:[#allocation2 + $0x18] sm:$0xf]
      %v1587 = vld [vmem:[#allocation2 + $0x1c] sm:$0xf]
      %v1588 = vld [vmem:[#allocation2 + $0x20] sm:$0xf]
      %v1589 = vld [vmem:[#allocation2 + $0x24] sm:$0xf]
      %v1590 = vld [vmem:[#allocation2 + $0x28] sm:$0xf]
      %v1591 = vld [vmem:[#allocation2 + $0x2c] sm:$0xf]
      %v1592 = vld [vmem:[#allocation2 + $0x30] sm:$0xf]
      %v1593 = vld [vmem:[#allocation2 + $0x34] sm:$0xf]
      %v1594 = vld [vmem:[#allocation2 + $0x38] sm:$0xf]
      %v1595 = vld [vmem:[#allocation2 + $0x3c] sm:$0xf]
      %v1596 = vld [vmem:[#allocation2 + $0x40] sm:$0xf]
      %v1597 = vld [vmem:[#allocation2 + $0x44] sm:$0xf]
      %v1598 = vld [vmem:[#allocation2 + $0x48] sm:$0xf]
      %v1599 = vld [vmem:[#allocation2 + $0x4c] sm:$0xf]
      %v1600 = vld [vmem:[#allocation2 + $0x50] sm:$0xf]
      %v1601 = vld [vmem:[#allocation2 + $0x54] sm:$0xf]
      %v1602 = vld [vmem:[#allocation2 + $0x58] sm:$0xf]
      %v1603 = vld [vmem:[#allocation2 + $0x5c] sm:$0xf]
      %v1604 = vld [vmem:[#allocation2 + $0x60] sm:$0xf]
      %v1605 = vld [vmem:[#allocation2 + $0x64] sm:$0xf]
      %v1606 = vld [vmem:[#allocation2 + $0x68] sm:$0xf]
      %v1607 = vld [vmem:[#allocation2 + $0x6c] sm:$0xf]
      %v1608 = vld [vmem:[#allocation2 + $0x70] sm:$0xf]
      %v1609 = vld [vmem:[#allocation2 + $0x74] sm:$0xf]
      %v1610 = vld [vmem:[#allocation2 + $0x78] sm:$0xf]
      %v1611 = vld [vmem:[#allocation2 + $0x7c] sm:$0xf]
      %v1612 = vld [vmem:[%s4] sm:$0xf]
      %v1613 = vld [vmem:[%s4 + $0x4] sm:$0xf]
      %v1614 = vld [vmem:[%s4 + $0x8] sm:$0xf]
      %v1615 = vld [vmem:[%s4 + $0xc] sm:$0xf]
      %v1616 = vld [vmem:[%s4 + $0x10] sm:$0xf]
      %v1617 = vld [vmem:[%s4 + $0x14] sm:$0xf]
      %v1618 = vld [vmem:[%s4 + $0x18] sm:$0xf]
      %v1619 = vld [vmem:[%s4 + $0x1c] sm:$0xf]
      %v1620 = vld [vmem:[%s4 + $0x20] sm:$0xf]
      %v1621 = vld [vmem:[%s4 + $0x24] sm:$0xf]
      %v1622 = vld [vmem:[%s4 + $0x28] sm:$0xf]
      %v1623 = vld [vmem:[%s4 + $0x2c] sm:$0xf]
      %v1624 = vld [vmem:[%s4 + $0x30] sm:$0xf]
      %v1625 = vld [vmem:[%s4 + $0x34] sm:$0xf]
      %v1626 = vld [vmem:[%s4 + $0x38] sm:$0xf]
      %v1627 = vld [vmem:[%s4 + $0x3c] sm:$0xf]
      %v1628 = vld [vmem:[%s1305] sm:$0xf]
      %v1629 = vld [vmem:[%s1305 + $0x4] sm:$0xf]
      %v1630 = vld [vmem:[%s1305 + $0x8] sm:$0xf]
      %v1631 = vld [vmem:[%s1305 + $0xc] sm:$0xf]
      %v1632 = vld [vmem:[%s1305 + $0x10] sm:$0xf]
      %v1633 = vld [vmem:[%s1305 + $0x14] sm:$0xf]
      %v1634 = vld [vmem:[%s1305 + $0x18] sm:$0xf]
      %v1635 = vld [vmem:[%s1305 + $0x1c] sm:$0xf]
      %v1636 = vld [vmem:[%s1305 + $0x20] sm:$0xf]
      %v1637 = vld [vmem:[%s1305 + $0x24] sm:$0xf]
      %v1638 = vld [vmem:[%s1305 + $0x28] sm:$0xf]
      %v1639 = vld [vmem:[%s1305 + $0x2c] sm:$0xf]
      %v1640 = vld [vmem:[%s1305 + $0x30] sm:$0xf]
      %v1641 = vld [vmem:[%s1305 + $0x34] sm:$0xf]
      %v1642 = vld [vmem:[%s1305 + $0x38] sm:$0xf]
      %v1643 = vld [vmem:[%s1305 + $0x3c] sm:$0xf]
      %v1644 = vld [vmem:[%s1305 + $0x40] sm:$0xf]
      %v1645 = vld [vmem:[%s1305 + $0x44] sm:$0xf]
      %v1646 = vld [vmem:[%s1305 + $0x48] sm:$0xf]
      %v1647 = vld [vmem:[%s1305 + $0x4c] sm:$0xf]
      %v1648 = vld [vmem:[%s1305 + $0x50] sm:$0xf]
      %v1649 = vld [vmem:[%s1305 + $0x54] sm:$0xf]
      %v1650 = vld [vmem:[%s1305 + $0x58] sm:$0xf]
      %v1651 = vld [vmem:[%s1305 + $0x5c] sm:$0xf]
      %v1652 = vld [vmem:[%s1305 + $0x60] sm:$0xf]
      %v1653 = vld [vmem:[%s1305 + $0x64] sm:$0xf]
      %v1654 = vld [vmem:[%s1305 + $0x68] sm:$0xf]
      %v1655 = vld [vmem:[%s1305 + $0x6c] sm:$0xf]
      %v1656 = vld [vmem:[%s1305 + $0x70] sm:$0xf]
      %v1657 = vld [vmem:[%s1305 + $0x74] sm:$0xf]
      %v1658 = vld [vmem:[%s1305 + $0x78] sm:$0xf]
      %v1659 = vld [vmem:[%s1305 + $0x7c] sm:$0xf]
      %s1660 = scalar_lea.vmem %s4, 64
      %v1661 = vld [vmem:[%s1660] sm:$0xf]
      %v1662 = vld [vmem:[%s1660 + $0x4] sm:$0xf]
      %v1663 = vld [vmem:[%s1660 + $0x8] sm:$0xf]
      %v1664 = vld [vmem:[%s1660 + $0xc] sm:$0xf]
      %v1665 = vld [vmem:[%s1660 + $0x10] sm:$0xf]
      %v1666 = vld [vmem:[%s1660 + $0x14] sm:$0xf]
      %v1667 = vld [vmem:[%s1660 + $0x18] sm:$0xf]
      %v1668 = vld [vmem:[%s1660 + $0x1c] sm:$0xf]
      %v1669 = vld [vmem:[%s1660 + $0x20] sm:$0xf]
      %v1670 = vld [vmem:[%s1660 + $0x24] sm:$0xf]
      %v1671 = vld [vmem:[%s1660 + $0x28] sm:$0xf]
      %v1672 = vld [vmem:[%s1660 + $0x2c] sm:$0xf]
      %v1673 = vld [vmem:[%s1660 + $0x30] sm:$0xf]
      %v1674 = vld [vmem:[%s1660 + $0x34] sm:$0xf]
      %v1675 = vld [vmem:[%s1660 + $0x38] sm:$0xf]
      %v1676 = vld [vmem:[%s1660 + $0x3c] sm:$0xf]
      %v1709 = vunpack.c.l.b16 %v1628
      %v1710 = vunpack.c.l.b16 %v1629
      %v1711 = vunpack.c.l.b16 %v1630
      %v1712 = vunpack.c.l.b16 %v1631
      %v1713 = vunpack.c.l.b16 %v1632
      %v1714 = vunpack.c.l.b16 %v1633
      %v1715 = vunpack.c.l.b16 %v1634
      %v1716 = vunpack.c.l.b16 %v1635
      %v1717 = vunpack.c.l.b16 %v1636
      %v1718 = vunpack.c.l.b16 %v1637
      %v1719 = vunpack.c.l.b16 %v1638
      %v1720 = vunpack.c.l.b16 %v1639
      %v1721 = vunpack.c.l.b16 %v1640
      %v1722 = vunpack.c.l.b16 %v1641
      %v1723 = vunpack.c.l.b16 %v1642
      %v1724 = vunpack.c.l.b16 %v1643
      %v1725 = vunpack.c.l.b16 %v1644
      %v1726 = vunpack.c.l.b16 %v1645
      %v1727 = vunpack.c.l.b16 %v1646
      %v1728 = vunpack.c.l.b16 %v1647
      %v1729 = vunpack.c.l.b16 %v1648
      %v1730 = vunpack.c.l.b16 %v1649
      %v1731 = vunpack.c.l.b16 %v1650
      %v1732 = vunpack.c.l.b16 %v1651
      %v1733 = vunpack.c.l.b16 %v1652
      %v1734 = vunpack.c.l.b16 %v1653
      %v1735 = vunpack.c.l.b16 %v1654
      %v1736 = vunpack.c.l.b16 %v1655
      %v1737 = vunpack.c.l.b16 %v1656
      %v1738 = vunpack.c.l.b16 %v1657
      %v1739 = vunpack.c.l.b16 %v1658
      %v1740 = vunpack.c.l.b16 %v1659
      %v1741 = vpack.c.b16 %v1710, %v1709
      %v1742 = vpack.c.b16 %v1712, %v1711
      %v1743 = vpack.c.b16 %v1714, %v1713
      %v1744 = vpack.c.b16 %v1716, %v1715
      %v1745 = vpack.c.b16 %v1718, %v1717
      %v1746 = vpack.c.b16 %v1720, %v1719
      %v1747 = vpack.c.b16 %v1722, %v1721
      %v1748 = vpack.c.b16 %v1724, %v1723
      %v1749 = vpack.c.b16 %v1726, %v1725
      %v1750 = vpack.c.b16 %v1728, %v1727
      %v1751 = vpack.c.b16 %v1730, %v1729
      %v1752 = vpack.c.b16 %v1732, %v1731
      %v1753 = vpack.c.b16 %v1734, %v1733
      %v1754 = vpack.c.b16 %v1736, %v1735
      %v1755 = vpack.c.b16 %v1738, %v1737
      %v1756 = vpack.c.b16 %v1740, %v1739
      %v1789 = vunpack.c.l.b16 %v1661
      %v1790 = vunpack.c.l.b16 %v1662
      %v1791 = vunpack.c.l.b16 %v1663
      %v1792 = vunpack.c.l.b16 %v1664
      %v1793 = vunpack.c.l.b16 %v1665
      %v1794 = vunpack.c.l.b16 %v1666
      %v1795 = vunpack.c.l.b16 %v1667
      %v1796 = vunpack.c.l.b16 %v1668
      %v1797 = vunpack.c.l.b16 %v1669
      %v1798 = vunpack.c.l.b16 %v1670
      %v1799 = vunpack.c.l.b16 %v1671
      %v1800 = vunpack.c.l.b16 %v1672
      %v1801 = vunpack.c.l.b16 %v1673
      %v1802 = vunpack.c.l.b16 %v1674
      %v1803 = vunpack.c.l.b16 %v1675
      %v1804 = vunpack.c.l.b16 %v1676
      %v1805 = vpack.c.b16 %v1790, %v1789
      %v1806 = vpack.c.b16 %v1792, %v1791
      %v1807 = vpack.c.b16 %v1794, %v1793
      %v1808 = vpack.c.b16 %v1796, %v1795
      %v1809 = vpack.c.b16 %v1798, %v1797
      %v1810 = vpack.c.b16 %v1800, %v1799
      %v1811 = vpack.c.b16 %v1802, %v1801
      %v1812 = vpack.c.b16 %v1804, %v1803
      %1821 = vmatprep.subr.bf16.mxu0 0
      %1822 = vmatpush1.bf16.msra.mxu0 %v1812
      %1823 = vmatprep.subr.bf16.mxu0 0
      %1824 = vmatpush1.bf16.msra.mxu0 %v1811
      %1825 = vmatprep.subr.bf16.mxu0 0
      %1826 = vmatpush1.bf16.msra.mxu0 %v1810
      %1827 = vmatprep.subr.bf16.mxu0 0
      %1828 = vmatpush1.bf16.msra.mxu0 %v1809
      %1829 = vmatprep.subr.bf16.mxu0 0
      %1830 = vmatpush1.bf16.msra.mxu0 %v1808
      %1831 = vmatprep.subr.bf16.mxu0 0
      %1832 = vmatpush1.bf16.msra.mxu0 %v1807
      %1833 = vmatprep.subr.bf16.mxu0 0
      %1834 = vmatpush1.bf16.msra.mxu0 %v1806
      %1835 = vmatprep.subr.bf16.mxu0 0
      %1836 = vmatpush1.bf16.msra.mxu0 %v1805
      %1837 = vmatprep.subr.bf16.mxu0 0
      %1838 = vmatpush2.bf16.msra.mxu0 0
      %1839 = vmatprep.subr.bf16.mxu0 0
      %1840 = vmatpush2.bf16.msra.mxu0 0
      %1841 = vmatprep.subr.bf16.mxu0 0
      %1842 = vmatpush2.bf16.msra.mxu0 0
      %1843 = vmatprep.subr.bf16.mxu0 0
      %1844 = vmatpush2.bf16.msra.mxu0 0
      %1845 = vmatprep.subr.bf16.mxu0 0
      %1846 = vmatpush2.bf16.msra.mxu0 0
      %1847 = vmatprep.subr.bf16.mxu0 0
      %1848 = vmatpush2.bf16.msra.mxu0 0
      %1849 = vmatprep.subr.bf16.mxu0 0
      %1850 = vmatpush2.bf16.msra.mxu0 0
      %1851 = vmatprep.subr.bf16.mxu0 0
      %1852 = vmatpush2.bf16.msra.mxu0 0
      %1853 = vmatprep.mubr.bf16.mxu0 0
      %1854 = vmatmul.mubr.bf16.gmra.mxu0 %v1741
      %v1855 = vpop.f32.mrf.mxu0
      %v1856 = vadd.f32 0.0, %v1855
      %v1857 = vpop.f32.mrf.mxu0
      %v1858 = vpop.f32.mrf.mxu0
      %v1859 = vadd.f32 0.0, %v1858
      %v1860 = vpop.f32.mrf.mxu0
      %1861 = vmatprep.mubr.bf16.mxu0 0
      %1862 = vmatmul.mubr.bf16.gmra.mxu0 %v1742
      %v1863 = vpop.f32.mrf.mxu0
      %v1864 = vadd.f32 0.0, %v1863
      %v1865 = vpop.f32.mrf.mxu0
      %v1866 = vpop.f32.mrf.mxu0
      %v1867 = vadd.f32 0.0, %v1866
      %v1868 = vpop.f32.mrf.mxu0
      %1869 = vmatprep.mubr.bf16.mxu0 0
      %1870 = vmatmul.mubr.bf16.gmra.mxu0 %v1743
      %v1871 = vpop.f32.mrf.mxu0
      %v1872 = vadd.f32 0.0, %v1871
      %v1873 = vpop.f32.mrf.mxu0
      %v1874 = vpop.f32.mrf.mxu0
      %v1875 = vadd.f32 0.0, %v1874
      %v1876 = vpop.f32.mrf.mxu0
      %1877 = vmatprep.mubr.bf16.mxu0 0
      %1878 = vmatmul.mubr.bf16.gmra.mxu0 %v1744
      %v1879 = vpop.f32.mrf.mxu0
      %v1880 = vadd.f32 0.0, %v1879
      %v1881 = vpop.f32.mrf.mxu0
      %v1882 = vpop.f32.mrf.mxu0
      %v1883 = vadd.f32 0.0, %v1882
      %v1884 = vpop.f32.mrf.mxu0
      %1885 = vmatprep.mubr.bf16.mxu0 0
      %1886 = vmatmul.mubr.bf16.gmra.mxu0 %v1745
      %v1887 = vpop.f32.mrf.mxu0
      %v1888 = vadd.f32 0.0, %v1887
      %v1889 = vpop.f32.mrf.mxu0
      %v1890 = vpop.f32.mrf.mxu0
      %v1891 = vadd.f32 0.0, %v1890
      %v1892 = vpop.f32.mrf.mxu0
      %1893 = vmatprep.mubr.bf16.mxu0 0
      %1894 = vmatmul.mubr.bf16.gmra.mxu0 %v1746
      %v1895 = vpop.f32.mrf.mxu0
      %v1896 = vadd.f32 0.0, %v1895
      %v1897 = vpop.f32.mrf.mxu0
      %v1898 = vpop.f32.mrf.mxu0
      %v1899 = vadd.f32 0.0, %v1898
      %v1900 = vpop.f32.mrf.mxu0
      %1901 = vmatprep.mubr.bf16.mxu0 0
      %1902 = vmatmul.mubr.bf16.gmra.mxu0 %v1747
      %v1903 = vpop.f32.mrf.mxu0
      %v1904 = vadd.f32 0.0, %v1903
      %v1905 = vpop.f32.mrf.mxu0
      %v1906 = vpop.f32.mrf.mxu0
      %v1907 = vadd.f32 0.0, %v1906
      %v1908 = vpop.f32.mrf.mxu0
      %1909 = vmatprep.mubr.bf16.mxu0 0
      %1910 = vmatmul.mubr.bf16.gmra.mxu0 %v1748
      %v1911 = vpop.f32.mrf.mxu0
      %v1912 = vadd.f32 0.0, %v1911
      %v1913 = vpop.f32.mrf.mxu0
      %v1914 = vpop.f32.mrf.mxu0
      %v1915 = vadd.f32 0.0, %v1914
      %v1916 = vpop.f32.mrf.mxu0
      %1917 = vmatprep.mubr.bf16.mxu0 0
      %1918 = vmatmul.mubr.bf16.gmra.mxu0 %v1749
      %v1919 = vpop.f32.mrf.mxu0
      %v1920 = vadd.f32 0.0, %v1919
      %v1921 = vpop.f32.mrf.mxu0
      %v1922 = vpop.f32.mrf.mxu0
      %v1923 = vadd.f32 0.0, %v1922
      %v1924 = vpop.f32.mrf.mxu0
      %1925 = vmatprep.mubr.bf16.mxu0 0
      %1926 = vmatmul.mubr.bf16.gmra.mxu0 %v1750
      %v1927 = vpop.f32.mrf.mxu0
      %v1928 = vadd.f32 0.0, %v1927
      %v1929 = vpop.f32.mrf.mxu0
      %v1930 = vpop.f32.mrf.mxu0
      %v1931 = vadd.f32 0.0, %v1930
      %v1932 = vpop.f32.mrf.mxu0
      %1933 = vmatprep.mubr.bf16.mxu0 0
      %1934 = vmatmul.mubr.bf16.gmra.mxu0 %v1751
      %v1935 = vpop.f32.mrf.mxu0
      %v1936 = vadd.f32 0.0, %v1935
      %v1937 = vpop.f32.mrf.mxu0
      %v1938 = vpop.f32.mrf.mxu0
      %v1939 = vadd.f32 0.0, %v1938
      %v1940 = vpop.f32.mrf.mxu0
      %1941 = vmatprep.mubr.bf16.mxu0 0
      %1942 = vmatmul.mubr.bf16.gmra.mxu0 %v1752
      %v1943 = vpop.f32.mrf.mxu0
      %v1944 = vadd.f32 0.0, %v1943
      %v1945 = vpop.f32.mrf.mxu0
      %v1946 = vpop.f32.mrf.mxu0
      %v1947 = vadd.f32 0.0, %v1946
      %v1948 = vpop.f32.mrf.mxu0
      %1949 = vmatprep.mubr.bf16.mxu0 0
      %1950 = vmatmul.mubr.bf16.gmra.mxu0 %v1753
      %v1951 = vpop.f32.mrf.mxu0
      %v1952 = vadd.f32 0.0, %v1951
      %v1953 = vpop.f32.mrf.mxu0
      %v1954 = vpop.f32.mrf.mxu0
      %v1955 = vadd.f32 0.0, %v1954
      %v1956 = vpop.f32.mrf.mxu0
      %1957 = vmatprep.mubr.bf16.mxu0 0
      %1958 = vmatmul.mubr.bf16.gmra.mxu0 %v1754
      %v1959 = vpop.f32.mrf.mxu0
      %v1960 = vadd.f32 0.0, %v1959
      %v1961 = vpop.f32.mrf.mxu0
      %v1962 = vpop.f32.mrf.mxu0
      %v1963 = vadd.f32 0.0, %v1962
      %v1964 = vpop.f32.mrf.mxu0
      %1965 = vmatprep.mubr.bf16.mxu0 0
      %1966 = vmatmul.mubr.bf16.gmra.mxu0 %v1755
      %v1967 = vpop.f32.mrf.mxu0
      %v1968 = vadd.f32 0.0, %v1967
      %v1969 = vpop.f32.mrf.mxu0
      %v1970 = vpop.f32.mrf.mxu0
      %v1971 = vadd.f32 0.0, %v1970
      %v1972 = vpop.f32.mrf.mxu0
      %1973 = vmatprep.mubr.bf16.mxu0 0
      %1974 = vmatmul.mubr.bf16.gmra.mxu0 %v1756
      %v1975 = vpop.f32.mrf.mxu0
      %v1976 = vadd.f32 0.0, %v1975
      %v1977 = vpop.f32.mrf.mxu0
      %v1978 = vpop.f32.mrf.mxu0
      %v1979 = vadd.f32 0.0, %v1978
      %v1980 = vpop.f32.mrf.mxu0
      %1981 = vdwg.mxu0
      %v2014 = vunpack.c.l.b16 %v1580
      %v2015 = vunpack.c.l.b16 %v1581
      %v2016 = vunpack.c.l.b16 %v1582
      %v2017 = vunpack.c.l.b16 %v1583
      %v2018 = vunpack.c.l.b16 %v1584
      %v2019 = vunpack.c.l.b16 %v1585
      %v2020 = vunpack.c.l.b16 %v1586
      %v2021 = vunpack.c.l.b16 %v1587
      %v2022 = vunpack.c.l.b16 %v1588
      %v2023 = vunpack.c.l.b16 %v1589
      %v2024 = vunpack.c.l.b16 %v1590
      %v2025 = vunpack.c.l.b16 %v1591
      %v2026 = vunpack.c.l.b16 %v1592
      %v2027 = vunpack.c.l.b16 %v1593
      %v2028 = vunpack.c.l.b16 %v1594
      %v2029 = vunpack.c.l.b16 %v1595
      %v2030 = vunpack.c.l.b16 %v1596
      %v2031 = vunpack.c.l.b16 %v1597
      %v2032 = vunpack.c.l.b16 %v1598
      %v2033 = vunpack.c.l.b16 %v1599
      %v2034 = vunpack.c.l.b16 %v1600
      %v2035 = vunpack.c.l.b16 %v1601
      %v2036 = vunpack.c.l.b16 %v1602
      %v2037 = vunpack.c.l.b16 %v1603
      %v2038 = vunpack.c.l.b16 %v1604
      %v2039 = vunpack.c.l.b16 %v1605
      %v2040 = vunpack.c.l.b16 %v1606
      %v2041 = vunpack.c.l.b16 %v1607
      %v2042 = vunpack.c.l.b16 %v1608
      %v2043 = vunpack.c.l.b16 %v1609
      %v2044 = vunpack.c.l.b16 %v1610
      %v2045 = vunpack.c.l.b16 %v1611
      %v2046 = vpack.c.b16 %v2015, %v2014
      %v2047 = vpack.c.b16 %v2017, %v2016
      %v2048 = vpack.c.b16 %v2019, %v2018
      %v2049 = vpack.c.b16 %v2021, %v2020
      %v2050 = vpack.c.b16 %v2023, %v2022
      %v2051 = vpack.c.b16 %v2025, %v2024
      %v2052 = vpack.c.b16 %v2027, %v2026
      %v2053 = vpack.c.b16 %v2029, %v2028
      %v2054 = vpack.c.b16 %v2031, %v2030
      %v2055 = vpack.c.b16 %v2033, %v2032
      %v2056 = vpack.c.b16 %v2035, %v2034
      %v2057 = vpack.c.b16 %v2037, %v2036
      %v2058 = vpack.c.b16 %v2039, %v2038
      %v2059 = vpack.c.b16 %v2041, %v2040
      %v2060 = vpack.c.b16 %v2043, %v2042
      %v2061 = vpack.c.b16 %v2045, %v2044
      %v2094 = vunpack.c.l.b16 %v1612
      %v2095 = vunpack.c.l.b16 %v1613
      %v2096 = vunpack.c.l.b16 %v1614
      %v2097 = vunpack.c.l.b16 %v1615
      %v2098 = vunpack.c.l.b16 %v1616
      %v2099 = vunpack.c.l.b16 %v1617
      %v2100 = vunpack.c.l.b16 %v1618
      %v2101 = vunpack.c.l.b16 %v1619
      %v2102 = vunpack.c.l.b16 %v1620
      %v2103 = vunpack.c.l.b16 %v1621
      %v2104 = vunpack.c.l.b16 %v1622
      %v2105 = vunpack.c.l.b16 %v1623
      %v2106 = vunpack.c.l.b16 %v1624
      %v2107 = vunpack.c.l.b16 %v1625
      %v2108 = vunpack.c.l.b16 %v1626
      %v2109 = vunpack.c.l.b16 %v1627
      %v2110 = vpack.c.b16 %v2095, %v2094
      %v2111 = vpack.c.b16 %v2097, %v2096
      %v2112 = vpack.c.b16 %v2099, %v2098
      %v2113 = vpack.c.b16 %v2101, %v2100
      %v2114 = vpack.c.b16 %v2103, %v2102
      %v2115 = vpack.c.b16 %v2105, %v2104
      %v2116 = vpack.c.b16 %v2107, %v2106
      %v2117 = vpack.c.b16 %v2109, %v2108
      %2126 = vmatprep.subr.bf16.mxu0 0
      %2127 = vmatpush1.bf16.msra.mxu0 %v2117
      %2128 = vmatprep.subr.bf16.mxu0 0
      %2129 = vmatpush1.bf16.msra.mxu0 %v2116
      %2130 = vmatprep.subr.bf16.mxu0 0
      %2131 = vmatpush1.bf16.msra.mxu0 %v2115
      %2132 = vmatprep.subr.bf16.mxu0 0
      %2133 = vmatpush1.bf16.msra.mxu0 %v2114
      %2134 = vmatprep.subr.bf16.mxu0 0
      %2135 = vmatpush1.bf16.msra.mxu0 %v2113
      %2136 = vmatprep.subr.bf16.mxu0 0
      %2137 = vmatpush1.bf16.msra.mxu0 %v2112
      %2138 = vmatprep.subr.bf16.mxu0 0
      %2139 = vmatpush1.bf16.msra.mxu0 %v2111
      %2140 = vmatprep.subr.bf16.mxu0 0
      %2141 = vmatpush1.bf16.msra.mxu0 %v2110
      %2142 = vmatprep.subr.bf16.mxu0 0
      %2143 = vmatpush2.bf16.msra.mxu0 0
      %2144 = vmatprep.subr.bf16.mxu0 0
      %2145 = vmatpush2.bf16.msra.mxu0 0
      %2146 = vmatprep.subr.bf16.mxu0 0
      %2147 = vmatpush2.bf16.msra.mxu0 0
      %2148 = vmatprep.subr.bf16.mxu0 0
      %2149 = vmatpush2.bf16.msra.mxu0 0
      %2150 = vmatprep.subr.bf16.mxu0 0
      %2151 = vmatpush2.bf16.msra.mxu0 0
      %2152 = vmatprep.subr.bf16.mxu0 0
      %2153 = vmatpush2.bf16.msra.mxu0 0
      %2154 = vmatprep.subr.bf16.mxu0 0
      %2155 = vmatpush2.bf16.msra.mxu0 0
      %2156 = vmatprep.subr.bf16.mxu0 0
      %2157 = vmatpush2.bf16.msra.mxu0 0
      %2158 = vmatprep.mubr.bf16.mxu0 0
      %2159 = vmatmul.mubr.bf16.gmra.mxu0 %v2046
      %v2160 = vpop.f32.mrf.mxu0
      %v2161 = vadd.f32 %v1856, %v2160
      %v2162 = vpop.f32.mrf.mxu0
      %v2163 = vpop.f32.mrf.mxu0
      %v2164 = vadd.f32 %v1859, %v2163
      %v2165 = vpop.f32.mrf.mxu0
      %2166 = vmatprep.mubr.bf16.mxu0 0
      %2167 = vmatmul.mubr.bf16.gmra.mxu0 %v2047
      %v2168 = vpop.f32.mrf.mxu0
      %v2169 = vadd.f32 %v1864, %v2168
      %v2170 = vpop.f32.mrf.mxu0
      %v2171 = vpop.f32.mrf.mxu0
      %v2172 = vadd.f32 %v1867, %v2171
      %v2173 = vpop.f32.mrf.mxu0
      %2174 = vmatprep.mubr.bf16.mxu0 0
      %2175 = vmatmul.mubr.bf16.gmra.mxu0 %v2048
      %v2176 = vpop.f32.mrf.mxu0
      %v2177 = vadd.f32 %v1872, %v2176
      %v2178 = vpop.f32.mrf.mxu0
      %v2179 = vpop.f32.mrf.mxu0
      %v2180 = vadd.f32 %v1875, %v2179
      %v2181 = vpop.f32.mrf.mxu0
      %2182 = vmatprep.mubr.bf16.mxu0 0
      %2183 = vmatmul.mubr.bf16.gmra.mxu0 %v2049
      %v2184 = vpop.f32.mrf.mxu0
      %v2185 = vadd.f32 %v1880, %v2184
      %v2186 = vpop.f32.mrf.mxu0
      %v2187 = vpop.f32.mrf.mxu0
      %v2188 = vadd.f32 %v1883, %v2187
      %v2189 = vpop.f32.mrf.mxu0
      %2190 = vmatprep.mubr.bf16.mxu0 0
      %2191 = vmatmul.mubr.bf16.gmra.mxu0 %v2050
      %v2192 = vpop.f32.mrf.mxu0
      %v2193 = vadd.f32 %v1888, %v2192
      %v2194 = vpop.f32.mrf.mxu0
      %v2195 = vpop.f32.mrf.mxu0
      %v2196 = vadd.f32 %v1891, %v2195
      %v2197 = vpop.f32.mrf.mxu0
      %2198 = vmatprep.mubr.bf16.mxu0 0
      %2199 = vmatmul.mubr.bf16.gmra.mxu0 %v2051
      %v2200 = vpop.f32.mrf.mxu0
      %v2201 = vadd.f32 %v1896, %v2200
      %v2202 = vpop.f32.mrf.mxu0
      %v2203 = vpop.f32.mrf.mxu0
      %v2204 = vadd.f32 %v1899, %v2203
      %v2205 = vpop.f32.mrf.mxu0
      %2206 = vmatprep.mubr.bf16.mxu0 0
      %2207 = vmatmul.mubr.bf16.gmra.mxu0 %v2052
      %v2208 = vpop.f32.mrf.mxu0
      %v2209 = vadd.f32 %v1904, %v2208
      %v2210 = vpop.f32.mrf.mxu0
      %v2211 = vpop.f32.mrf.mxu0
      %v2212 = vadd.f32 %v1907, %v2211
      %v2213 = vpop.f32.mrf.mxu0
      %2214 = vmatprep.mubr.bf16.mxu0 0
      %2215 = vmatmul.mubr.bf16.gmra.mxu0 %v2053
      %v2216 = vpop.f32.mrf.mxu0
      %v2217 = vadd.f32 %v1912, %v2216
      %v2218 = vpop.f32.mrf.mxu0
      %v2219 = vpop.f32.mrf.mxu0
      %v2220 = vadd.f32 %v1915, %v2219
      %v2221 = vpop.f32.mrf.mxu0
      %2222 = vmatprep.mubr.bf16.mxu0 0
      %2223 = vmatmul.mubr.bf16.gmra.mxu0 %v2054
      %v2224 = vpop.f32.mrf.mxu0
      %v2225 = vadd.f32 %v1920, %v2224
      %v2226 = vpop.f32.mrf.mxu0
      %v2227 = vpop.f32.mrf.mxu0
      %v2228 = vadd.f32 %v1923, %v2227
      %v2229 = vpop.f32.mrf.mxu0
      %2230 = vmatprep.mubr.bf16.mxu0 0
      %2231 = vmatmul.mubr.bf16.gmra.mxu0 %v2055
      %v2232 = vpop.f32.mrf.mxu0
      %v2233 = vadd.f32 %v1928, %v2232
      %v2234 = vpop.f32.mrf.mxu0
      %v2235 = vpop.f32.mrf.mxu0
      %v2236 = vadd.f32 %v1931, %v2235
      %v2237 = vpop.f32.mrf.mxu0
      %2238 = vmatprep.mubr.bf16.mxu0 0
      %2239 = vmatmul.mubr.bf16.gmra.mxu0 %v2056
      %v2240 = vpop.f32.mrf.mxu0
      %v2241 = vadd.f32 %v1936, %v2240
      %v2242 = vpop.f32.mrf.mxu0
      %v2243 = vpop.f32.mrf.mxu0
      %v2244 = vadd.f32 %v1939, %v2243
      %v2245 = vpop.f32.mrf.mxu0
      %2246 = vmatprep.mubr.bf16.mxu0 0
      %2247 = vmatmul.mubr.bf16.gmra.mxu0 %v2057
      %v2248 = vpop.f32.mrf.mxu0
      %v2249 = vadd.f32 %v1944, %v2248
      %v2250 = vpop.f32.mrf.mxu0
      %v2251 = vpop.f32.mrf.mxu0
      %v2252 = vadd.f32 %v1947, %v2251
      %v2253 = vpop.f32.mrf.mxu0
      %2254 = vmatprep.mubr.bf16.mxu0 0
      %2255 = vmatmul.mubr.bf16.gmra.mxu0 %v2058
      %v2256 = vpop.f32.mrf.mxu0
      %v2257 = vadd.f32 %v1952, %v2256
      %v2258 = vpop.f32.mrf.mxu0
      %v2259 = vpop.f32.mrf.mxu0
      %v2260 = vadd.f32 %v1955, %v2259
      %v2261 = vpop.f32.mrf.mxu0
      %2262 = vmatprep.mubr.bf16.mxu0 0
      %2263 = vmatmul.mubr.bf16.gmra.mxu0 %v2059
      %v2264 = vpop.f32.mrf.mxu0
      %v2265 = vadd.f32 %v1960, %v2264
      %v2266 = vpop.f32.mrf.mxu0
      %v2267 = vpop.f32.mrf.mxu0
      %v2268 = vadd.f32 %v1963, %v2267
      %v2269 = vpop.f32.mrf.mxu0
      %2270 = vmatprep.mubr.bf16.mxu0 0
      %2271 = vmatmul.mubr.bf16.gmra.mxu0 %v2060
      %v2272 = vpop.f32.mrf.mxu0
      %v2273 = vadd.f32 %v1968, %v2272
      %v2274 = vpop.f32.mrf.mxu0
      %v2275 = vpop.f32.mrf.mxu0
      %v2276 = vadd.f32 %v1971, %v2275
      %v2277 = vpop.f32.mrf.mxu0
      %2278 = vmatprep.mubr.bf16.mxu0 0
      %2279 = vmatmul.mubr.bf16.gmra.mxu0 %v2061
      %v2280 = vpop.f32.mrf.mxu0
      %v2281 = vadd.f32 %v1976, %v2280
      %v2282 = vpop.f32.mrf.mxu0
      %v2283 = vpop.f32.mrf.mxu0
      %v2284 = vadd.f32 %v1979, %v2283
      %v2285 = vpop.f32.mrf.mxu0
      %2286 = vdwg.mxu0
      %v2287 = vld [vmem:[%s1543] sm:$0xf]
      %v2288 = vld [vmem:[%s1543 + $0x4] sm:$0xf]
      %v2289 = vld [vmem:[%s1543 + $0x8] sm:$0xf]
      %v2290 = vld [vmem:[%s1543 + $0xc] sm:$0xf]
      %v2291 = vld [vmem:[%s1543 + $0x10] sm:$0xf]
      %v2292 = vld [vmem:[%s1543 + $0x14] sm:$0xf]
      %v2293 = vld [vmem:[%s1543 + $0x18] sm:$0xf]
      %v2294 = vld [vmem:[%s1543 + $0x1c] sm:$0xf]
      %v2295 = vld [vmem:[%s1543 + $0x20] sm:$0xf]
      %v2296 = vld [vmem:[%s1543 + $0x24] sm:$0xf]
      %v2297 = vld [vmem:[%s1543 + $0x28] sm:$0xf]
      %v2298 = vld [vmem:[%s1543 + $0x2c] sm:$0xf]
      %v2299 = vld [vmem:[%s1543 + $0x30] sm:$0xf]
      %v2300 = vld [vmem:[%s1543 + $0x34] sm:$0xf]
      %v2301 = vld [vmem:[%s1543 + $0x38] sm:$0xf]
      %v2302 = vld [vmem:[%s1543 + $0x3c] sm:$0xf]
      %v2303 = vld [vmem:[%s1543 + $0x40] sm:$0xf]
      %v2304 = vld [vmem:[%s1543 + $0x44] sm:$0xf]
      %v2305 = vld [vmem:[%s1543 + $0x48] sm:$0xf]
      %v2306 = vld [vmem:[%s1543 + $0x4c] sm:$0xf]
      %v2307 = vld [vmem:[%s1543 + $0x50] sm:$0xf]
      %v2308 = vld [vmem:[%s1543 + $0x54] sm:$0xf]
      %v2309 = vld [vmem:[%s1543 + $0x58] sm:$0xf]
      %v2310 = vld [vmem:[%s1543 + $0x5c] sm:$0xf]
      %v2311 = vld [vmem:[%s1543 + $0x60] sm:$0xf]
      %v2312 = vld [vmem:[%s1543 + $0x64] sm:$0xf]
      %v2313 = vld [vmem:[%s1543 + $0x68] sm:$0xf]
      %v2314 = vld [vmem:[%s1543 + $0x6c] sm:$0xf]
      %v2315 = vld [vmem:[%s1543 + $0x70] sm:$0xf]
      %v2316 = vld [vmem:[%s1543 + $0x74] sm:$0xf]
      %v2317 = vld [vmem:[%s1543 + $0x78] sm:$0xf]
      %v2318 = vld [vmem:[%s1543 + $0x7c] sm:$0xf]
      %s2319 = scalar_lea.vmem %s4, 128
      %v2320 = vld [vmem:[%s2319] sm:$0xf]
      %v2321 = vld [vmem:[%s2319 + $0x4] sm:$0xf]
      %v2322 = vld [vmem:[%s2319 + $0x8] sm:$0xf]
      %v2323 = vld [vmem:[%s2319 + $0xc] sm:$0xf]
      %v2324 = vld [vmem:[%s2319 + $0x10] sm:$0xf]
      %v2325 = vld [vmem:[%s2319 + $0x14] sm:$0xf]
      %v2326 = vld [vmem:[%s2319 + $0x18] sm:$0xf]
      %v2327 = vld [vmem:[%s2319 + $0x1c] sm:$0xf]
      %v2328 = vld [vmem:[%s2319 + $0x20] sm:$0xf]
      %v2329 = vld [vmem:[%s2319 + $0x24] sm:$0xf]
      %v2330 = vld [vmem:[%s2319 + $0x28] sm:$0xf]
      %v2331 = vld [vmem:[%s2319 + $0x2c] sm:$0xf]
      %v2332 = vld [vmem:[%s2319 + $0x30] sm:$0xf]
      %v2333 = vld [vmem:[%s2319 + $0x34] sm:$0xf]
      %v2334 = vld [vmem:[%s2319 + $0x38] sm:$0xf]
      %v2335 = vld [vmem:[%s2319 + $0x3c] sm:$0xf]
      %v2368 = vunpack.c.l.b16 %v2287
      %v2369 = vunpack.c.l.b16 %v2288
      %v2370 = vunpack.c.l.b16 %v2289
      %v2371 = vunpack.c.l.b16 %v2290
      %v2372 = vunpack.c.l.b16 %v2291
      %v2373 = vunpack.c.l.b16 %v2292
      %v2374 = vunpack.c.l.b16 %v2293
      %v2375 = vunpack.c.l.b16 %v2294
      %v2376 = vunpack.c.l.b16 %v2295
      %v2377 = vunpack.c.l.b16 %v2296
      %v2378 = vunpack.c.l.b16 %v2297
      %v2379 = vunpack.c.l.b16 %v2298
      %v2380 = vunpack.c.l.b16 %v2299
      %v2381 = vunpack.c.l.b16 %v2300
      %v2382 = vunpack.c.l.b16 %v2301
      %v2383 = vunpack.c.l.b16 %v2302
      %v2384 = vunpack.c.l.b16 %v2303
      %v2385 = vunpack.c.l.b16 %v2304
      %v2386 = vunpack.c.l.b16 %v2305
      %v2387 = vunpack.c.l.b16 %v2306
      %v2388 = vunpack.c.l.b16 %v2307
      %v2389 = vunpack.c.l.b16 %v2308
      %v2390 = vunpack.c.l.b16 %v2309
      %v2391 = vunpack.c.l.b16 %v2310
      %v2392 = vunpack.c.l.b16 %v2311
      %v2393 = vunpack.c.l.b16 %v2312
      %v2394 = vunpack.c.l.b16 %v2313
      %v2395 = vunpack.c.l.b16 %v2314
      %v2396 = vunpack.c.l.b16 %v2315
      %v2397 = vunpack.c.l.b16 %v2316
      %v2398 = vunpack.c.l.b16 %v2317
      %v2399 = vunpack.c.l.b16 %v2318
      %v2400 = vpack.c.b16 %v2369, %v2368
      %v2401 = vpack.c.b16 %v2371, %v2370
      %v2402 = vpack.c.b16 %v2373, %v2372
      %v2403 = vpack.c.b16 %v2375, %v2374
      %v2404 = vpack.c.b16 %v2377, %v2376
      %v2405 = vpack.c.b16 %v2379, %v2378
      %v2406 = vpack.c.b16 %v2381, %v2380
      %v2407 = vpack.c.b16 %v2383, %v2382
      %v2408 = vpack.c.b16 %v2385, %v2384
      %v2409 = vpack.c.b16 %v2387, %v2386
      %v2410 = vpack.c.b16 %v2389, %v2388
      %v2411 = vpack.c.b16 %v2391, %v2390
      %v2412 = vpack.c.b16 %v2393, %v2392
      %v2413 = vpack.c.b16 %v2395, %v2394
      %v2414 = vpack.c.b16 %v2397, %v2396
      %v2415 = vpack.c.b16 %v2399, %v2398
      %v2448 = vunpack.c.l.b16 %v2320
      %v2449 = vunpack.c.l.b16 %v2321
      %v2450 = vunpack.c.l.b16 %v2322
      %v2451 = vunpack.c.l.b16 %v2323
      %v2452 = vunpack.c.l.b16 %v2324
      %v2453 = vunpack.c.l.b16 %v2325
      %v2454 = vunpack.c.l.b16 %v2326
      %v2455 = vunpack.c.l.b16 %v2327
      %v2456 = vunpack.c.l.b16 %v2328
      %v2457 = vunpack.c.l.b16 %v2329
      %v2458 = vunpack.c.l.b16 %v2330
      %v2459 = vunpack.c.l.b16 %v2331
      %v2460 = vunpack.c.l.b16 %v2332
      %v2461 = vunpack.c.l.b16 %v2333
      %v2462 = vunpack.c.l.b16 %v2334
      %v2463 = vunpack.c.l.b16 %v2335
      %v2464 = vpack.c.b16 %v2449, %v2448
      %v2465 = vpack.c.b16 %v2451, %v2450
      %v2466 = vpack.c.b16 %v2453, %v2452
      %v2467 = vpack.c.b16 %v2455, %v2454
      %v2468 = vpack.c.b16 %v2457, %v2456
      %v2469 = vpack.c.b16 %v2459, %v2458
      %v2470 = vpack.c.b16 %v2461, %v2460
      %v2471 = vpack.c.b16 %v2463, %v2462
      %2480 = vmatprep.subr.bf16.mxu0 0
      %2481 = vmatpush1.bf16.msra.mxu0 %v2471
      %2482 = vmatprep.subr.bf16.mxu0 0
      %2483 = vmatpush1.bf16.msra.mxu0 %v2470
      %2484 = vmatprep.subr.bf16.mxu0 0
      %2485 = vmatpush1.bf16.msra.mxu0 %v2469
      %2486 = vmatprep.subr.bf16.mxu0 0
      %2487 = vmatpush1.bf16.msra.mxu0 %v2468
      %2488 = vmatprep.subr.bf16.mxu0 0
      %2489 = vmatpush1.bf16.msra.mxu0 %v2467
      %2490 = vmatprep.subr.bf16.mxu0 0
      %2491 = vmatpush1.bf16.msra.mxu0 %v2466
      %2492 = vmatprep.subr.bf16.mxu0 0
      %2493 = vmatpush1.bf16.msra.mxu0 %v2465
      %2494 = vmatprep.subr.bf16.mxu0 0
      %2495 = vmatpush1.bf16.msra.mxu0 %v2464
      %2496 = vmatprep.subr.bf16.mxu0 0
      %2497 = vmatpush2.bf16.msra.mxu0 0
      %2498 = vmatprep.subr.bf16.mxu0 0
      %2499 = vmatpush2.bf16.msra.mxu0 0
      %2500 = vmatprep.subr.bf16.mxu0 0
      %2501 = vmatpush2.bf16.msra.mxu0 0
      %2502 = vmatprep.subr.bf16.mxu0 0
      %2503 = vmatpush2.bf16.msra.mxu0 0
      %2504 = vmatprep.subr.bf16.mxu0 0
      %2505 = vmatpush2.bf16.msra.mxu0 0
      %2506 = vmatprep.subr.bf16.mxu0 0
      %2507 = vmatpush2.bf16.msra.mxu0 0
      %2508 = vmatprep.subr.bf16.mxu0 0
      %2509 = vmatpush2.bf16.msra.mxu0 0
      %2510 = vmatprep.subr.bf16.mxu0 0
      %2511 = vmatpush2.bf16.msra.mxu0 0
      %2512 = vmatprep.mubr.bf16.mxu0 0
      %2513 = vmatmul.mubr.bf16.gmra.mxu0 %v2400
      %v2514 = vpop.f32.mrf.mxu0
      %v2515 = vadd.f32 0.0, %v2514
      %v2516 = vpop.f32.mrf.mxu0
      %v2517 = vpop.f32.mrf.mxu0
      %v2518 = vadd.f32 0.0, %v2517
      %v2519 = vpop.f32.mrf.mxu0
      %2520 = vmatprep.mubr.bf16.mxu0 0
      %2521 = vmatmul.mubr.bf16.gmra.mxu0 %v2401
      %v2522 = vpop.f32.mrf.mxu0
      %v2523 = vadd.f32 0.0, %v2522
      %v2524 = vpop.f32.mrf.mxu0
      %v2525 = vpop.f32.mrf.mxu0
      %v2526 = vadd.f32 0.0, %v2525
      %v2527 = vpop.f32.mrf.mxu0
      %2528 = vmatprep.mubr.bf16.mxu0 0
      %2529 = vmatmul.mubr.bf16.gmra.mxu0 %v2402
      %v2530 = vpop.f32.mrf.mxu0
      %v2531 = vadd.f32 0.0, %v2530
      %v2532 = vpop.f32.mrf.mxu0
      %v2533 = vpop.f32.mrf.mxu0
      %v2534 = vadd.f32 0.0, %v2533
      %v2535 = vpop.f32.mrf.mxu0
      %2536 = vmatprep.mubr.bf16.mxu0 0
      %2537 = vmatmul.mubr.bf16.gmra.mxu0 %v2403
      %v2538 = vpop.f32.mrf.mxu0
      %v2539 = vadd.f32 0.0, %v2538
      %v2540 = vpop.f32.mrf.mxu0
      %v2541 = vpop.f32.mrf.mxu0
      %v2542 = vadd.f32 0.0, %v2541
      %v2543 = vpop.f32.mrf.mxu0
      %2544 = vmatprep.mubr.bf16.mxu0 0
      %2545 = vmatmul.mubr.bf16.gmra.mxu0 %v2404
      %v2546 = vpop.f32.mrf.mxu0
      %v2547 = vadd.f32 0.0, %v2546
      %v2548 = vpop.f32.mrf.mxu0
      %v2549 = vpop.f32.mrf.mxu0
      %v2550 = vadd.f32 0.0, %v2549
      %v2551 = vpop.f32.mrf.mxu0
      %2552 = vmatprep.mubr.bf16.mxu0 0
      %2553 = vmatmul.mubr.bf16.gmra.mxu0 %v2405
      %v2554 = vpop.f32.mrf.mxu0
      %v2555 = vadd.f32 0.0, %v2554
      %v2556 = vpop.f32.mrf.mxu0
      %v2557 = vpop.f32.mrf.mxu0
      %v2558 = vadd.f32 0.0, %v2557
      %v2559 = vpop.f32.mrf.mxu0
      %2560 = vmatprep.mubr.bf16.mxu0 0
      %2561 = vmatmul.mubr.bf16.gmra.mxu0 %v2406
      %v2562 = vpop.f32.mrf.mxu0
      %v2563 = vadd.f32 0.0, %v2562
      %v2564 = vpop.f32.mrf.mxu0
      %v2565 = vpop.f32.mrf.mxu0
      %v2566 = vadd.f32 0.0, %v2565
      %v2567 = vpop.f32.mrf.mxu0
      %2568 = vmatprep.mubr.bf16.mxu0 0
      %2569 = vmatmul.mubr.bf16.gmra.mxu0 %v2407
      %v2570 = vpop.f32.mrf.mxu0
      %v2571 = vadd.f32 0.0, %v2570
      %v2572 = vpop.f32.mrf.mxu0
      %v2573 = vpop.f32.mrf.mxu0
      %v2574 = vadd.f32 0.0, %v2573
      %v2575 = vpop.f32.mrf.mxu0
      %2576 = vmatprep.mubr.bf16.mxu0 0
      %2577 = vmatmul.mubr.bf16.gmra.mxu0 %v2408
      %v2578 = vpop.f32.mrf.mxu0
      %v2579 = vadd.f32 0.0, %v2578
      %v2580 = vpop.f32.mrf.mxu0
      %v2581 = vpop.f32.mrf.mxu0
      %v2582 = vadd.f32 0.0, %v2581
      %v2583 = vpop.f32.mrf.mxu0
      %2584 = vmatprep.mubr.bf16.mxu0 0
      %2585 = vmatmul.mubr.bf16.gmra.mxu0 %v2409
      %v2586 = vpop.f32.mrf.mxu0
      %v2587 = vadd.f32 0.0, %v2586
      %v2588 = vpop.f32.mrf.mxu0
      %v2589 = vpop.f32.mrf.mxu0
      %v2590 = vadd.f32 0.0, %v2589
      %v2591 = vpop.f32.mrf.mxu0
      %2592 = vmatprep.mubr.bf16.mxu0 0
      %2593 = vmatmul.mubr.bf16.gmra.mxu0 %v2410
      %v2594 = vpop.f32.mrf.mxu0
      %v2595 = vadd.f32 0.0, %v2594
      %v2596 = vpop.f32.mrf.mxu0
      %v2597 = vpop.f32.mrf.mxu0
      %v2598 = vadd.f32 0.0, %v2597
      %v2599 = vpop.f32.mrf.mxu0
      %2600 = vmatprep.mubr.bf16.mxu0 0
      %2601 = vmatmul.mubr.bf16.gmra.mxu0 %v2411
      %v2602 = vpop.f32.mrf.mxu0
      %v2603 = vadd.f32 0.0, %v2602
      %v2604 = vpop.f32.mrf.mxu0
      %v2605 = vpop.f32.mrf.mxu0
      %v2606 = vadd.f32 0.0, %v2605
      %v2607 = vpop.f32.mrf.mxu0
      %2608 = vmatprep.mubr.bf16.mxu0 0
      %2609 = vmatmul.mubr.bf16.gmra.mxu0 %v2412
      %v2610 = vpop.f32.mrf.mxu0
      %v2611 = vadd.f32 0.0, %v2610
      %v2612 = vpop.f32.mrf.mxu0
      %v2613 = vpop.f32.mrf.mxu0
      %v2614 = vadd.f32 0.0, %v2613
      %v2615 = vpop.f32.mrf.mxu0
      %2616 = vmatprep.mubr.bf16.mxu0 0
      %2617 = vmatmul.mubr.bf16.gmra.mxu0 %v2413
      %v2618 = vpop.f32.mrf.mxu0
      %v2619 = vadd.f32 0.0, %v2618
      %v2620 = vpop.f32.mrf.mxu0
      %v2621 = vpop.f32.mrf.mxu0
      %v2622 = vadd.f32 0.0, %v2621
      %v2623 = vpop.f32.mrf.mxu0
      %2624 = vmatprep.mubr.bf16.mxu0 0
      %2625 = vmatmul.mubr.bf16.gmra.mxu0 %v2414
      %v2626 = vpop.f32.mrf.mxu0
      %v2627 = vadd.f32 0.0, %v2626
      %v2628 = vpop.f32.mrf.mxu0
      %v2629 = vpop.f32.mrf.mxu0
      %v2630 = vadd.f32 0.0, %v2629
      %v2631 = vpop.f32.mrf.mxu0
      %2632 = vmatprep.mubr.bf16.mxu0 0
      %2633 = vmatmul.mubr.bf16.gmra.mxu0 %v2415
      %v2634 = vpop.f32.mrf.mxu0
      %v2635 = vadd.f32 0.0, %v2634
      %v2636 = vpop.f32.mrf.mxu0
      %v2637 = vpop.f32.mrf.mxu0
      %v2638 = vadd.f32 0.0, %v2637
      %v2639 = vpop.f32.mrf.mxu0
      %2640 = vdwg.mxu0
      %v2641 = vadd.f32 %v2161, %v2515
      %v2642 = vadd.f32 %v2164, %v2518
      %v2643 = vadd.f32 %v2169, %v2523
      %v2644 = vadd.f32 %v2172, %v2526
      %v2645 = vadd.f32 %v2177, %v2531
      %v2646 = vadd.f32 %v2180, %v2534
      %v2647 = vadd.f32 %v2185, %v2539
      %v2648 = vadd.f32 %v2188, %v2542
      %v2649 = vadd.f32 %v2193, %v2547
      %v2650 = vadd.f32 %v2196, %v2550
      %v2651 = vadd.f32 %v2201, %v2555
      %v2652 = vadd.f32 %v2204, %v2558
      %v2653 = vadd.f32 %v2209, %v2563
      %v2654 = vadd.f32 %v2212, %v2566
      %v2655 = vadd.f32 %v2217, %v2571
      %v2656 = vadd.f32 %v2220, %v2574
      %v2657 = vadd.f32 %v2225, %v2579
      %v2658 = vadd.f32 %v2228, %v2582
      %v2659 = vadd.f32 %v2233, %v2587
      %v2660 = vadd.f32 %v2236, %v2590
      %v2661 = vadd.f32 %v2241, %v2595
      %v2662 = vadd.f32 %v2244, %v2598
      %v2663 = vadd.f32 %v2249, %v2603
      %v2664 = vadd.f32 %v2252, %v2606
      %v2665 = vadd.f32 %v2257, %v2611
      %v2666 = vadd.f32 %v2260, %v2614
      %v2667 = vadd.f32 %v2265, %v2619
      %v2668 = vadd.f32 %v2268, %v2622
      %v2669 = vadd.f32 %v2273, %v2627
      %v2670 = vadd.f32 %v2276, %v2630
      %v2671 = vadd.f32 %v2281, %v2635
      %v2672 = vadd.f32 %v2284, %v2638
      %s2673 = scalar_lea.vmem [#allocation2], 8
      %v2674 = vld [vmem:[%s2673] sm:$0xf]
      %v2675 = vld [vmem:[%s2673 + $0x4] sm:$0xf]
      %v2676 = vld [vmem:[%s2673 + $0x8] sm:$0xf]
      %v2677 = vld [vmem:[%s2673 + $0xc] sm:$0xf]
      %v2678 = vld [vmem:[%s2673 + $0x10] sm:$0xf]
      %v2679 = vld [vmem:[%s2673 + $0x14] sm:$0xf]
      %v2680 = vld [vmem:[%s2673 + $0x18] sm:$0xf]
      %v2681 = vld [vmem:[%s2673 + $0x1c] sm:$0xf]
      %v2682 = vld [vmem:[%s2673 + $0x20] sm:$0xf]
      %v2683 = vld [vmem:[%s2673 + $0x24] sm:$0xf]
      %v2684 = vld [vmem:[%s2673 + $0x28] sm:$0xf]
      %v2685 = vld [vmem:[%s2673 + $0x2c] sm:$0xf]
      %v2686 = vld [vmem:[%s2673 + $0x30] sm:$0xf]
      %v2687 = vld [vmem:[%s2673 + $0x34] sm:$0xf]
      %v2688 = vld [vmem:[%s2673 + $0x38] sm:$0xf]
      %v2689 = vld [vmem:[%s2673 + $0x3c] sm:$0xf]
      %v2690 = vld [vmem:[%s2673 + $0x40] sm:$0xf]
      %v2691 = vld [vmem:[%s2673 + $0x44] sm:$0xf]
      %v2692 = vld [vmem:[%s2673 + $0x48] sm:$0xf]
      %v2693 = vld [vmem:[%s2673 + $0x4c] sm:$0xf]
      %v2694 = vld [vmem:[%s2673 + $0x50] sm:$0xf]
      %v2695 = vld [vmem:[%s2673 + $0x54] sm:$0xf]
      %v2696 = vld [vmem:[%s2673 + $0x58] sm:$0xf]
      %v2697 = vld [vmem:[%s2673 + $0x5c] sm:$0xf]
      %v2698 = vld [vmem:[%s2673 + $0x60] sm:$0xf]
      %v2699 = vld [vmem:[%s2673 + $0x64] sm:$0xf]
      %v2700 = vld [vmem:[%s2673 + $0x68] sm:$0xf]
      %v2701 = vld [vmem:[%s2673 + $0x6c] sm:$0xf]
      %v2702 = vld [vmem:[%s2673 + $0x70] sm:$0xf]
      %v2703 = vld [vmem:[%s2673 + $0x74] sm:$0xf]
      %v2704 = vld [vmem:[%s2673 + $0x78] sm:$0xf]
      %v2705 = vld [vmem:[%s2673 + $0x7c] sm:$0xf]
      %s2706 = scalar_lea.vmem %s4, 192
      %v2707 = vld [vmem:[%s2706] sm:$0xf]
      %v2708 = vld [vmem:[%s2706 + $0x4] sm:$0xf]
      %v2709 = vld [vmem:[%s2706 + $0x8] sm:$0xf]
      %v2710 = vld [vmem:[%s2706 + $0xc] sm:$0xf]
      %v2711 = vld [vmem:[%s2706 + $0x10] sm:$0xf]
      %v2712 = vld [vmem:[%s2706 + $0x14] sm:$0xf]
      %v2713 = vld [vmem:[%s2706 + $0x18] sm:$0xf]
      %v2714 = vld [vmem:[%s2706 + $0x1c] sm:$0xf]
      %v2715 = vld [vmem:[%s2706 + $0x20] sm:$0xf]
      %v2716 = vld [vmem:[%s2706 + $0x24] sm:$0xf]
      %v2717 = vld [vmem:[%s2706 + $0x28] sm:$0xf]
      %v2718 = vld [vmem:[%s2706 + $0x2c] sm:$0xf]
      %v2719 = vld [vmem:[%s2706 + $0x30] sm:$0xf]
      %v2720 = vld [vmem:[%s2706 + $0x34] sm:$0xf]
      %v2721 = vld [vmem:[%s2706 + $0x38] sm:$0xf]
      %v2722 = vld [vmem:[%s2706 + $0x3c] sm:$0xf]
      %v2755 = vunpack.c.l.b16 %v2674
      %v2756 = vunpack.c.l.b16 %v2675
      %v2757 = vunpack.c.l.b16 %v2676
      %v2758 = vunpack.c.l.b16 %v2677
      %v2759 = vunpack.c.l.b16 %v2678
      %v2760 = vunpack.c.l.b16 %v2679
      %v2761 = vunpack.c.l.b16 %v2680
      %v2762 = vunpack.c.l.b16 %v2681
      %v2763 = vunpack.c.l.b16 %v2682
      %v2764 = vunpack.c.l.b16 %v2683
      %v2765 = vunpack.c.l.b16 %v2684
      %v2766 = vunpack.c.l.b16 %v2685
      %v2767 = vunpack.c.l.b16 %v2686
      %v2768 = vunpack.c.l.b16 %v2687
      %v2769 = vunpack.c.l.b16 %v2688
      %v2770 = vunpack.c.l.b16 %v2689
      %v2771 = vunpack.c.l.b16 %v2690
      %v2772 = vunpack.c.l.b16 %v2691
      %v2773 = vunpack.c.l.b16 %v2692
      %v2774 = vunpack.c.l.b16 %v2693
      %v2775 = vunpack.c.l.b16 %v2694
      %v2776 = vunpack.c.l.b16 %v2695
      %v2777 = vunpack.c.l.b16 %v2696
      %v2778 = vunpack.c.l.b16 %v2697
      %v2779 = vunpack.c.l.b16 %v2698
      %v2780 = vunpack.c.l.b16 %v2699
      %v2781 = vunpack.c.l.b16 %v2700
      %v2782 = vunpack.c.l.b16 %v2701
      %v2783 = vunpack.c.l.b16 %v2702
      %v2784 = vunpack.c.l.b16 %v2703
      %v2785 = vunpack.c.l.b16 %v2704
      %v2786 = vunpack.c.l.b16 %v2705
      %v2787 = vpack.c.b16 %v2756, %v2755
      %v2788 = vpack.c.b16 %v2758, %v2757
      %v2789 = vpack.c.b16 %v2760, %v2759
      %v2790 = vpack.c.b16 %v2762, %v2761
      %v2791 = vpack.c.b16 %v2764, %v2763
      %v2792 = vpack.c.b16 %v2766, %v2765
      %v2793 = vpack.c.b16 %v2768, %v2767
      %v2794 = vpack.c.b16 %v2770, %v2769
      %v2795 = vpack.c.b16 %v2772, %v2771
      %v2796 = vpack.c.b16 %v2774, %v2773
      %v2797 = vpack.c.b16 %v2776, %v2775
      %v2798 = vpack.c.b16 %v2778, %v2777
      %v2799 = vpack.c.b16 %v2780, %v2779
      %v2800 = vpack.c.b16 %v2782, %v2781
      %v2801 = vpack.c.b16 %v2784, %v2783
      %v2802 = vpack.c.b16 %v2786, %v2785
      %v2835 = vunpack.c.l.b16 %v2707
      %v2836 = vunpack.c.l.b16 %v2708
      %v2837 = vunpack.c.l.b16 %v2709
      %v2838 = vunpack.c.l.b16 %v2710
      %v2839 = vunpack.c.l.b16 %v2711
      %v2840 = vunpack.c.l.b16 %v2712
      %v2841 = vunpack.c.l.b16 %v2713
      %v2842 = vunpack.c.l.b16 %v2714
      %v2843 = vunpack.c.l.b16 %v2715
      %v2844 = vunpack.c.l.b16 %v2716
      %v2845 = vunpack.c.l.b16 %v2717
      %v2846 = vunpack.c.l.b16 %v2718
      %v2847 = vunpack.c.l.b16 %v2719
      %v2848 = vunpack.c.l.b16 %v2720
      %v2849 = vunpack.c.l.b16 %v2721
      %v2850 = vunpack.c.l.b16 %v2722
      %v2851 = vpack.c.b16 %v2836, %v2835
      %v2852 = vpack.c.b16 %v2838, %v2837
      %v2853 = vpack.c.b16 %v2840, %v2839
      %v2854 = vpack.c.b16 %v2842, %v2841
      %v2855 = vpack.c.b16 %v2844, %v2843
      %v2856 = vpack.c.b16 %v2846, %v2845
      %v2857 = vpack.c.b16 %v2848, %v2847
      %v2858 = vpack.c.b16 %v2850, %v2849
      %2867 = vmatprep.subr.bf16.mxu0 0
      %2868 = vmatpush1.bf16.msra.mxu0 %v2858
      %2869 = vmatprep.subr.bf16.mxu0 0
      %2870 = vmatpush1.bf16.msra.mxu0 %v2857
      %2871 = vmatprep.subr.bf16.mxu0 0
      %2872 = vmatpush1.bf16.msra.mxu0 %v2856
      %2873 = vmatprep.subr.bf16.mxu0 0
      %2874 = vmatpush1.bf16.msra.mxu0 %v2855
      %2875 = vmatprep.subr.bf16.mxu0 0
      %2876 = vmatpush1.bf16.msra.mxu0 %v2854
      %2877 = vmatprep.subr.bf16.mxu0 0
      %2878 = vmatpush1.bf16.msra.mxu0 %v2853
      %2879 = vmatprep.subr.bf16.mxu0 0
      %2880 = vmatpush1.bf16.msra.mxu0 %v2852
      %2881 = vmatprep.subr.bf16.mxu0 0
      %2882 = vmatpush1.bf16.msra.mxu0 %v2851
      %2883 = vmatprep.subr.bf16.mxu0 0
      %2884 = vmatpush2.bf16.msra.mxu0 0
      %2885 = vmatprep.subr.bf16.mxu0 0
      %2886 = vmatpush2.bf16.msra.mxu0 0
      %2887 = vmatprep.subr.bf16.mxu0 0
      %2888 = vmatpush2.bf16.msra.mxu0 0
      %2889 = vmatprep.subr.bf16.mxu0 0
      %2890 = vmatpush2.bf16.msra.mxu0 0
      %2891 = vmatprep.subr.bf16.mxu0 0
      %2892 = vmatpush2.bf16.msra.mxu0 0
      %2893 = vmatprep.subr.bf16.mxu0 0
      %2894 = vmatpush2.bf16.msra.mxu0 0
      %2895 = vmatprep.subr.bf16.mxu0 0
      %2896 = vmatpush2.bf16.msra.mxu0 0
      %2897 = vmatprep.subr.bf16.mxu0 0
      %2898 = vmatpush2.bf16.msra.mxu0 0
      %2899 = vmatprep.mubr.bf16.mxu0 0
      %2900 = vmatmul.mubr.bf16.gmra.mxu0 %v2787
      %v2901 = vpop.f32.mrf.mxu0
      %v2902 = vadd.f32 0.0, %v2901
      %v2903 = vpop.f32.mrf.mxu0
      %v2904 = vpop.f32.mrf.mxu0
      %v2905 = vadd.f32 0.0, %v2904
      %v2906 = vpop.f32.mrf.mxu0
      %2907 = vmatprep.mubr.bf16.mxu0 0
      %2908 = vmatmul.mubr.bf16.gmra.mxu0 %v2788
      %v2909 = vpop.f32.mrf.mxu0
      %v2910 = vadd.f32 0.0, %v2909
      %v2911 = vpop.f32.mrf.mxu0
      %v2912 = vpop.f32.mrf.mxu0
      %v2913 = vadd.f32 0.0, %v2912
      %v2914 = vpop.f32.mrf.mxu0
      %2915 = vmatprep.mubr.bf16.mxu0 0
      %2916 = vmatmul.mubr.bf16.gmra.mxu0 %v2789
      %v2917 = vpop.f32.mrf.mxu0
      %v2918 = vadd.f32 0.0, %v2917
      %v2919 = vpop.f32.mrf.mxu0
      %v2920 = vpop.f32.mrf.mxu0
      %v2921 = vadd.f32 0.0, %v2920
      %v2922 = vpop.f32.mrf.mxu0
      %2923 = vmatprep.mubr.bf16.mxu0 0
      %2924 = vmatmul.mubr.bf16.gmra.mxu0 %v2790
      %v2925 = vpop.f32.mrf.mxu0
      %v2926 = vadd.f32 0.0, %v2925
      %v2927 = vpop.f32.mrf.mxu0
      %v2928 = vpop.f32.mrf.mxu0
      %v2929 = vadd.f32 0.0, %v2928
      %v2930 = vpop.f32.mrf.mxu0
      %2931 = vmatprep.mubr.bf16.mxu0 0
      %2932 = vmatmul.mubr.bf16.gmra.mxu0 %v2791
      %v2933 = vpop.f32.mrf.mxu0
      %v2934 = vadd.f32 0.0, %v2933
      %v2935 = vpop.f32.mrf.mxu0
      %v2936 = vpop.f32.mrf.mxu0
      %v2937 = vadd.f32 0.0, %v2936
      %v2938 = vpop.f32.mrf.mxu0
      %2939 = vmatprep.mubr.bf16.mxu0 0
      %2940 = vmatmul.mubr.bf16.gmra.mxu0 %v2792
      %v2941 = vpop.f32.mrf.mxu0
      %v2942 = vadd.f32 0.0, %v2941
      %v2943 = vpop.f32.mrf.mxu0
      %v2944 = vpop.f32.mrf.mxu0
      %v2945 = vadd.f32 0.0, %v2944
      %v2946 = vpop.f32.mrf.mxu0
      %2947 = vmatprep.mubr.bf16.mxu0 0
      %2948 = vmatmul.mubr.bf16.gmra.mxu0 %v2793
      %v2949 = vpop.f32.mrf.mxu0
      %v2950 = vadd.f32 0.0, %v2949
      %v2951 = vpop.f32.mrf.mxu0
      %v2952 = vpop.f32.mrf.mxu0
      %v2953 = vadd.f32 0.0, %v2952
      %v2954 = vpop.f32.mrf.mxu0
      %2955 = vmatprep.mubr.bf16.mxu0 0
      %2956 = vmatmul.mubr.bf16.gmra.mxu0 %v2794
      %v2957 = vpop.f32.mrf.mxu0
      %v2958 = vadd.f32 0.0, %v2957
      %v2959 = vpop.f32.mrf.mxu0
      %v2960 = vpop.f32.mrf.mxu0
      %v2961 = vadd.f32 0.0, %v2960
      %v2962 = vpop.f32.mrf.mxu0
      %2963 = vmatprep.mubr.bf16.mxu0 0
      %2964 = vmatmul.mubr.bf16.gmra.mxu0 %v2795
      %v2965 = vpop.f32.mrf.mxu0
      %v2966 = vadd.f32 0.0, %v2965
      %v2967 = vpop.f32.mrf.mxu0
      %v2968 = vpop.f32.mrf.mxu0
      %v2969 = vadd.f32 0.0, %v2968
      %v2970 = vpop.f32.mrf.mxu0
      %2971 = vmatprep.mubr.bf16.mxu0 0
      %2972 = vmatmul.mubr.bf16.gmra.mxu0 %v2796
      %v2973 = vpop.f32.mrf.mxu0
      %v2974 = vadd.f32 0.0, %v2973
      %v2975 = vpop.f32.mrf.mxu0
      %v2976 = vpop.f32.mrf.mxu0
      %v2977 = vadd.f32 0.0, %v2976
      %v2978 = vpop.f32.mrf.mxu0
      %2979 = vmatprep.mubr.bf16.mxu0 0
      %2980 = vmatmul.mubr.bf16.gmra.mxu0 %v2797
      %v2981 = vpop.f32.mrf.mxu0
      %v2982 = vadd.f32 0.0, %v2981
      %v2983 = vpop.f32.mrf.mxu0
      %v2984 = vpop.f32.mrf.mxu0
      %v2985 = vadd.f32 0.0, %v2984
      %v2986 = vpop.f32.mrf.mxu0
      %2987 = vmatprep.mubr.bf16.mxu0 0
      %2988 = vmatmul.mubr.bf16.gmra.mxu0 %v2798
      %v2989 = vpop.f32.mrf.mxu0
      %v2990 = vadd.f32 0.0, %v2989
      %v2991 = vpop.f32.mrf.mxu0
      %v2992 = vpop.f32.mrf.mxu0
      %v2993 = vadd.f32 0.0, %v2992
      %v2994 = vpop.f32.mrf.mxu0
      %2995 = vmatprep.mubr.bf16.mxu0 0
      %2996 = vmatmul.mubr.bf16.gmra.mxu0 %v2799
      %v2997 = vpop.f32.mrf.mxu0
      %v2998 = vadd.f32 0.0, %v2997
      %v2999 = vpop.f32.mrf.mxu0
      %v3000 = vpop.f32.mrf.mxu0
      %v3001 = vadd.f32 0.0, %v3000
      %v3002 = vpop.f32.mrf.mxu0
      %3003 = vmatprep.mubr.bf16.mxu0 0
      %3004 = vmatmul.mubr.bf16.gmra.mxu0 %v2800
      %v3005 = vpop.f32.mrf.mxu0
      %v3006 = vadd.f32 0.0, %v3005
      %v3007 = vpop.f32.mrf.mxu0
      %v3008 = vpop.f32.mrf.mxu0
      %v3009 = vadd.f32 0.0, %v3008
      %v3010 = vpop.f32.mrf.mxu0
      %3011 = vmatprep.mubr.bf16.mxu0 0
      %3012 = vmatmul.mubr.bf16.gmra.mxu0 %v2801
      %v3013 = vpop.f32.mrf.mxu0
      %v3014 = vadd.f32 0.0, %v3013
      %v3015 = vpop.f32.mrf.mxu0
      %v3016 = vpop.f32.mrf.mxu0
      %v3017 = vadd.f32 0.0, %v3016
      %v3018 = vpop.f32.mrf.mxu0
      %3019 = vmatprep.mubr.bf16.mxu0 0
      %3020 = vmatmul.mubr.bf16.gmra.mxu0 %v2802
      %v3021 = vpop.f32.mrf.mxu0
      %v3022 = vadd.f32 0.0, %v3021
      %v3023 = vpop.f32.mrf.mxu0
      %v3024 = vpop.f32.mrf.mxu0
      %v3025 = vadd.f32 0.0, %v3024
      %v3026 = vpop.f32.mrf.mxu0
      %3027 = vdwg.mxu0
      %v3028 = vadd.f32 %v2641, %v2902
      %v3029 = vadd.f32 %v2642, %v2905
      %v3030 = vadd.f32 %v2643, %v2910
      %v3031 = vadd.f32 %v2644, %v2913
      %v3032 = vadd.f32 %v2645, %v2918
      %v3033 = vadd.f32 %v2646, %v2921
      %v3034 = vadd.f32 %v2647, %v2926
      %v3035 = vadd.f32 %v2648, %v2929
      %v3036 = vadd.f32 %v2649, %v2934
      %v3037 = vadd.f32 %v2650, %v2937
      %v3038 = vadd.f32 %v2651, %v2942
      %v3039 = vadd.f32 %v2652, %v2945
      %v3040 = vadd.f32 %v2653, %v2950
      %v3041 = vadd.f32 %v2654, %v2953
      %v3042 = vadd.f32 %v2655, %v2958
      %v3043 = vadd.f32 %v2656, %v2961
      %v3044 = vadd.f32 %v2657, %v2966
      %v3045 = vadd.f32 %v2658, %v2969
      %v3046 = vadd.f32 %v2659, %v2974
      %v3047 = vadd.f32 %v2660, %v2977
      %v3048 = vadd.f32 %v2661, %v2982
      %v3049 = vadd.f32 %v2662, %v2985
      %v3050 = vadd.f32 %v2663, %v2990
      %v3051 = vadd.f32 %v2664, %v2993
      %v3052 = vadd.f32 %v2665, %v2998
      %v3053 = vadd.f32 %v2666, %v3001
      %v3054 = vadd.f32 %v2667, %v3006
      %v3055 = vadd.f32 %v2668, %v3009
      %v3056 = vadd.f32 %v2669, %v3014
      %v3057 = vadd.f32 %v2670, %v3017
      %v3058 = vadd.f32 %v2671, %v3022
      %v3059 = vadd.f32 %v2672, %v3025
      %s3060 = scalar_lea.vmem [#allocation2], 152
      %v3061 = vld [vmem:[%s3060] sm:$0xf]
      %v3062 = vld [vmem:[%s3060 + $0x4] sm:$0xf]
      %v3063 = vld [vmem:[%s3060 + $0x8] sm:$0xf]
      %v3064 = vld [vmem:[%s3060 + $0xc] sm:$0xf]
      %v3065 = vld [vmem:[%s3060 + $0x10] sm:$0xf]
      %v3066 = vld [vmem:[%s3060 + $0x14] sm:$0xf]
      %v3067 = vld [vmem:[%s3060 + $0x18] sm:$0xf]
      %v3068 = vld [vmem:[%s3060 + $0x1c] sm:$0xf]
      %v3069 = vld [vmem:[%s3060 + $0x20] sm:$0xf]
      %v3070 = vld [vmem:[%s3060 + $0x24] sm:$0xf]
      %v3071 = vld [vmem:[%s3060 + $0x28] sm:$0xf]
      %v3072 = vld [vmem:[%s3060 + $0x2c] sm:$0xf]
      %v3073 = vld [vmem:[%s3060 + $0x30] sm:$0xf]
      %v3074 = vld [vmem:[%s3060 + $0x34] sm:$0xf]
      %v3075 = vld [vmem:[%s3060 + $0x38] sm:$0xf]
      %v3076 = vld [vmem:[%s3060 + $0x3c] sm:$0xf]
      %v3077 = vld [vmem:[%s3060 + $0x40] sm:$0xf]
      %v3078 = vld [vmem:[%s3060 + $0x44] sm:$0xf]
      %v3079 = vld [vmem:[%s3060 + $0x48] sm:$0xf]
      %v3080 = vld [vmem:[%s3060 + $0x4c] sm:$0xf]
      %v3081 = vld [vmem:[%s3060 + $0x50] sm:$0xf]
      %v3082 = vld [vmem:[%s3060 + $0x54] sm:$0xf]
      %v3083 = vld [vmem:[%s3060 + $0x58] sm:$0xf]
      %v3084 = vld [vmem:[%s3060 + $0x5c] sm:$0xf]
      %v3085 = vld [vmem:[%s3060 + $0x60] sm:$0xf]
      %v3086 = vld [vmem:[%s3060 + $0x64] sm:$0xf]
      %v3087 = vld [vmem:[%s3060 + $0x68] sm:$0xf]
      %v3088 = vld [vmem:[%s3060 + $0x6c] sm:$0xf]
      %v3089 = vld [vmem:[%s3060 + $0x70] sm:$0xf]
      %v3090 = vld [vmem:[%s3060 + $0x74] sm:$0xf]
      %v3091 = vld [vmem:[%s3060 + $0x78] sm:$0xf]
      %v3092 = vld [vmem:[%s3060 + $0x7c] sm:$0xf]
      %s3093 = scalar_lea.vmem %s4, 256
      %v3094 = vld [vmem:[%s3093] sm:$0xf]
      %v3095 = vld [vmem:[%s3093 + $0x4] sm:$0xf]
      %v3096 = vld [vmem:[%s3093 + $0x8] sm:$0xf]
      %v3097 = vld [vmem:[%s3093 + $0xc] sm:$0xf]
      %v3098 = vld [vmem:[%s3093 + $0x10] sm:$0xf]
      %v3099 = vld [vmem:[%s3093 + $0x14] sm:$0xf]
      %v3100 = vld [vmem:[%s3093 + $0x18] sm:$0xf]
      %v3101 = vld [vmem:[%s3093 + $0x1c] sm:$0xf]
      %v3102 = vld [vmem:[%s3093 + $0x20] sm:$0xf]
      %v3103 = vld [vmem:[%s3093 + $0x24] sm:$0xf]
      %v3104 = vld [vmem:[%s3093 + $0x28] sm:$0xf]
      %v3105 = vld [vmem:[%s3093 + $0x2c] sm:$0xf]
      %v3106 = vld [vmem:[%s3093 + $0x30] sm:$0xf]
      %v3107 = vld [vmem:[%s3093 + $0x34] sm:$0xf]
      %v3108 = vld [vmem:[%s3093 + $0x38] sm:$0xf]
      %v3109 = vld [vmem:[%s3093 + $0x3c] sm:$0xf]
      %v3142 = vunpack.c.l.b16 %v3061
      %v3143 = vunpack.c.l.b16 %v3062
      %v3144 = vunpack.c.l.b16 %v3063
      %v3145 = vunpack.c.l.b16 %v3064
      %v3146 = vunpack.c.l.b16 %v3065
      %v3147 = vunpack.c.l.b16 %v3066
      %v3148 = vunpack.c.l.b16 %v3067
      %v3149 = vunpack.c.l.b16 %v3068
      %v3150 = vunpack.c.l.b16 %v3069
      %v3151 = vunpack.c.l.b16 %v3070
      %v3152 = vunpack.c.l.b16 %v3071
      %v3153 = vunpack.c.l.b16 %v3072
      %v3154 = vunpack.c.l.b16 %v3073
      %v3155 = vunpack.c.l.b16 %v3074
      %v3156 = vunpack.c.l.b16 %v3075
      %v3157 = vunpack.c.l.b16 %v3076
      %v3158 = vunpack.c.l.b16 %v3077
      %v3159 = vunpack.c.l.b16 %v3078
      %v3160 = vunpack.c.l.b16 %v3079
      %v3161 = vunpack.c.l.b16 %v3080
      %v3162 = vunpack.c.l.b16 %v3081
      %v3163 = vunpack.c.l.b16 %v3082
      %v3164 = vunpack.c.l.b16 %v3083
      %v3165 = vunpack.c.l.b16 %v3084
      %v3166 = vunpack.c.l.b16 %v3085
      %v3167 = vunpack.c.l.b16 %v3086
      %v3168 = vunpack.c.l.b16 %v3087
      %v3169 = vunpack.c.l.b16 %v3088
      %v3170 = vunpack.c.l.b16 %v3089
      %v3171 = vunpack.c.l.b16 %v3090
      %v3172 = vunpack.c.l.b16 %v3091
      %v3173 = vunpack.c.l.b16 %v3092
      %v3174 = vpack.c.b16 %v3143, %v3142
      %v3175 = vpack.c.b16 %v3145, %v3144
      %v3176 = vpack.c.b16 %v3147, %v3146
      %v3177 = vpack.c.b16 %v3149, %v3148
      %v3178 = vpack.c.b16 %v3151, %v3150
      %v3179 = vpack.c.b16 %v3153, %v3152
      %v3180 = vpack.c.b16 %v3155, %v3154
      %v3181 = vpack.c.b16 %v3157, %v3156
      %v3182 = vpack.c.b16 %v3159, %v3158
      %v3183 = vpack.c.b16 %v3161, %v3160
      %v3184 = vpack.c.b16 %v3163, %v3162
      %v3185 = vpack.c.b16 %v3165, %v3164
      %v3186 = vpack.c.b16 %v3167, %v3166
      %v3187 = vpack.c.b16 %v3169, %v3168
      %v3188 = vpack.c.b16 %v3171, %v3170
      %v3189 = vpack.c.b16 %v3173, %v3172
      %v3222 = vunpack.c.l.b16 %v3094
      %v3223 = vunpack.c.l.b16 %v3095
      %v3224 = vunpack.c.l.b16 %v3096
      %v3225 = vunpack.c.l.b16 %v3097
      %v3226 = vunpack.c.l.b16 %v3098
      %v3227 = vunpack.c.l.b16 %v3099
      %v3228 = vunpack.c.l.b16 %v3100
      %v3229 = vunpack.c.l.b16 %v3101
      %v3230 = vunpack.c.l.b16 %v3102
      %v3231 = vunpack.c.l.b16 %v3103
      %v3232 = vunpack.c.l.b16 %v3104
      %v3233 = vunpack.c.l.b16 %v3105
      %v3234 = vunpack.c.l.b16 %v3106
      %v3235 = vunpack.c.l.b16 %v3107
      %v3236 = vunpack.c.l.b16 %v3108
      %v3237 = vunpack.c.l.b16 %v3109
      %v3238 = vpack.c.b16 %v3223, %v3222
      %v3239 = vpack.c.b16 %v3225, %v3224
      %v3240 = vpack.c.b16 %v3227, %v3226
      %v3241 = vpack.c.b16 %v3229, %v3228
      %v3242 = vpack.c.b16 %v3231, %v3230
      %v3243 = vpack.c.b16 %v3233, %v3232
      %v3244 = vpack.c.b16 %v3235, %v3234
      %v3245 = vpack.c.b16 %v3237, %v3236
      %3254 = vmatprep.subr.bf16.mxu0 0
      %3255 = vmatpush1.bf16.msra.mxu0 %v3245
      %3256 = vmatprep.subr.bf16.mxu0 0
      %3257 = vmatpush1.bf16.msra.mxu0 %v3244
      %3258 = vmatprep.subr.bf16.mxu0 0
      %3259 = vmatpush1.bf16.msra.mxu0 %v3243
      %3260 = vmatprep.subr.bf16.mxu0 0
      %3261 = vmatpush1.bf16.msra.mxu0 %v3242
      %3262 = vmatprep.subr.bf16.mxu0 0
      %3263 = vmatpush1.bf16.msra.mxu0 %v3241
      %3264 = vmatprep.subr.bf16.mxu0 0
      %3265 = vmatpush1.bf16.msra.mxu0 %v3240
      %3266 = vmatprep.subr.bf16.mxu0 0
      %3267 = vmatpush1.bf16.msra.mxu0 %v3239
      %3268 = vmatprep.subr.bf16.mxu0 0
      %3269 = vmatpush1.bf16.msra.mxu0 %v3238
      %3270 = vmatprep.subr.bf16.mxu0 0
      %3271 = vmatpush2.bf16.msra.mxu0 0
      %3272 = vmatprep.subr.bf16.mxu0 0
      %3273 = vmatpush2.bf16.msra.mxu0 0
      %3274 = vmatprep.subr.bf16.mxu0 0
      %3275 = vmatpush2.bf16.msra.mxu0 0
      %3276 = vmatprep.subr.bf16.mxu0 0
      %3277 = vmatpush2.bf16.msra.mxu0 0
      %3278 = vmatprep.subr.bf16.mxu0 0
      %3279 = vmatpush2.bf16.msra.mxu0 0
      %3280 = vmatprep.subr.bf16.mxu0 0
      %3281 = vmatpush2.bf16.msra.mxu0 0
      %3282 = vmatprep.subr.bf16.mxu0 0
      %3283 = vmatpush2.bf16.msra.mxu0 0
      %3284 = vmatprep.subr.bf16.mxu0 0
      %3285 = vmatpush2.bf16.msra.mxu0 0
      %3286 = vmatprep.mubr.bf16.mxu0 0
      %3287 = vmatmul.mubr.bf16.gmra.mxu0 %v3174
      %v3288 = vpop.f32.mrf.mxu0
      %v3289 = vadd.f32 0.0, %v3288
      %v3290 = vpop.f32.mrf.mxu0
      %v3291 = vpop.f32.mrf.mxu0
      %v3292 = vadd.f32 0.0, %v3291
      %v3293 = vpop.f32.mrf.mxu0
      %3294 = vmatprep.mubr.bf16.mxu0 0
      %3295 = vmatmul.mubr.bf16.gmra.mxu0 %v3175
      %v3296 = vpop.f32.mrf.mxu0
      %v3297 = vadd.f32 0.0, %v3296
      %v3298 = vpop.f32.mrf.mxu0
      %v3299 = vpop.f32.mrf.mxu0
      %v3300 = vadd.f32 0.0, %v3299
      %v3301 = vpop.f32.mrf.mxu0
      %3302 = vmatprep.mubr.bf16.mxu0 0
      %3303 = vmatmul.mubr.bf16.gmra.mxu0 %v3176
      %v3304 = vpop.f32.mrf.mxu0
      %v3305 = vadd.f32 0.0, %v3304
      %v3306 = vpop.f32.mrf.mxu0
      %v3307 = vpop.f32.mrf.mxu0
      %v3308 = vadd.f32 0.0, %v3307
      %v3309 = vpop.f32.mrf.mxu0
      %3310 = vmatprep.mubr.bf16.mxu0 0
      %3311 = vmatmul.mubr.bf16.gmra.mxu0 %v3177
      %v3312 = vpop.f32.mrf.mxu0
      %v3313 = vadd.f32 0.0, %v3312
      %v3314 = vpop.f32.mrf.mxu0
      %v3315 = vpop.f32.mrf.mxu0
      %v3316 = vadd.f32 0.0, %v3315
      %v3317 = vpop.f32.mrf.mxu0
      %3318 = vmatprep.mubr.bf16.mxu0 0
      %3319 = vmatmul.mubr.bf16.gmra.mxu0 %v3178
      %v3320 = vpop.f32.mrf.mxu0
      %v3321 = vadd.f32 0.0, %v3320
      %v3322 = vpop.f32.mrf.mxu0
      %v3323 = vpop.f32.mrf.mxu0
      %v3324 = vadd.f32 0.0, %v3323
      %v3325 = vpop.f32.mrf.mxu0
      %3326 = vmatprep.mubr.bf16.mxu0 0
      %3327 = vmatmul.mubr.bf16.gmra.mxu0 %v3179
      %v3328 = vpop.f32.mrf.mxu0
      %v3329 = vadd.f32 0.0, %v3328
      %v3330 = vpop.f32.mrf.mxu0
      %v3331 = vpop.f32.mrf.mxu0
      %v3332 = vadd.f32 0.0, %v3331
      %v3333 = vpop.f32.mrf.mxu0
      %3334 = vmatprep.mubr.bf16.mxu0 0
      %3335 = vmatmul.mubr.bf16.gmra.mxu0 %v3180
      %v3336 = vpop.f32.mrf.mxu0
      %v3337 = vadd.f32 0.0, %v3336
      %v3338 = vpop.f32.mrf.mxu0
      %v3339 = vpop.f32.mrf.mxu0
      %v3340 = vadd.f32 0.0, %v3339
      %v3341 = vpop.f32.mrf.mxu0
      %3342 = vmatprep.mubr.bf16.mxu0 0
      %3343 = vmatmul.mubr.bf16.gmra.mxu0 %v3181
      %v3344 = vpop.f32.mrf.mxu0
      %v3345 = vadd.f32 0.0, %v3344
      %v3346 = vpop.f32.mrf.mxu0
      %v3347 = vpop.f32.mrf.mxu0
      %v3348 = vadd.f32 0.0, %v3347
      %v3349 = vpop.f32.mrf.mxu0
      %3350 = vmatprep.mubr.bf16.mxu0 0
      %3351 = vmatmul.mubr.bf16.gmra.mxu0 %v3182
      %v3352 = vpop.f32.mrf.mxu0
      %v3353 = vadd.f32 0.0, %v3352
      %v3354 = vpop.f32.mrf.mxu0
      %v3355 = vpop.f32.mrf.mxu0
      %v3356 = vadd.f32 0.0, %v3355
      %v3357 = vpop.f32.mrf.mxu0
      %3358 = vmatprep.mubr.bf16.mxu0 0
      %3359 = vmatmul.mubr.bf16.gmra.mxu0 %v3183
      %v3360 = vpop.f32.mrf.mxu0
      %v3361 = vadd.f32 0.0, %v3360
      %v3362 = vpop.f32.mrf.mxu0
      %v3363 = vpop.f32.mrf.mxu0
      %v3364 = vadd.f32 0.0, %v3363
      %v3365 = vpop.f32.mrf.mxu0
      %3366 = vmatprep.mubr.bf16.mxu0 0
      %3367 = vmatmul.mubr.bf16.gmra.mxu0 %v3184
      %v3368 = vpop.f32.mrf.mxu0
      %v3369 = vadd.f32 0.0, %v3368
      %v3370 = vpop.f32.mrf.mxu0
      %v3371 = vpop.f32.mrf.mxu0
      %v3372 = vadd.f32 0.0, %v3371
      %v3373 = vpop.f32.mrf.mxu0
      %3374 = vmatprep.mubr.bf16.mxu0 0
      %3375 = vmatmul.mubr.bf16.gmra.mxu0 %v3185
      %v3376 = vpop.f32.mrf.mxu0
      %v3377 = vadd.f32 0.0, %v3376
      %v3378 = vpop.f32.mrf.mxu0
      %v3379 = vpop.f32.mrf.mxu0
      %v3380 = vadd.f32 0.0, %v3379
      %v3381 = vpop.f32.mrf.mxu0
      %3382 = vmatprep.mubr.bf16.mxu0 0
      %3383 = vmatmul.mubr.bf16.gmra.mxu0 %v3186
      %v3384 = vpop.f32.mrf.mxu0
      %v3385 = vadd.f32 0.0, %v3384
      %v3386 = vpop.f32.mrf.mxu0
      %v3387 = vpop.f32.mrf.mxu0
      %v3388 = vadd.f32 0.0, %v3387
      %v3389 = vpop.f32.mrf.mxu0
      %3390 = vmatprep.mubr.bf16.mxu0 0
      %3391 = vmatmul.mubr.bf16.gmra.mxu0 %v3187
      %v3392 = vpop.f32.mrf.mxu0
      %v3393 = vadd.f32 0.0, %v3392
      %v3394 = vpop.f32.mrf.mxu0
      %v3395 = vpop.f32.mrf.mxu0
      %v3396 = vadd.f32 0.0, %v3395
      %v3397 = vpop.f32.mrf.mxu0
      %3398 = vmatprep.mubr.bf16.mxu0 0
      %3399 = vmatmul.mubr.bf16.gmra.mxu0 %v3188
      %v3400 = vpop.f32.mrf.mxu0
      %v3401 = vadd.f32 0.0, %v3400
      %v3402 = vpop.f32.mrf.mxu0
      %v3403 = vpop.f32.mrf.mxu0
      %v3404 = vadd.f32 0.0, %v3403
      %v3405 = vpop.f32.mrf.mxu0
      %3406 = vmatprep.mubr.bf16.mxu0 0
      %3407 = vmatmul.mubr.bf16.gmra.mxu0 %v3189
      %v3408 = vpop.f32.mrf.mxu0
      %v3409 = vadd.f32 0.0, %v3408
      %v3410 = vpop.f32.mrf.mxu0
      %v3411 = vpop.f32.mrf.mxu0
      %v3412 = vadd.f32 0.0, %v3411
      %v3413 = vpop.f32.mrf.mxu0
      %3414 = vdwg.mxu0
      %v3415 = vadd.f32 %v3028, %v3289
      %v3416 = vadd.f32 %v3029, %v3292
      %v3417 = vadd.f32 %v3030, %v3297
      %v3418 = vadd.f32 %v3031, %v3300
      %v3419 = vadd.f32 %v3032, %v3305
      %v3420 = vadd.f32 %v3033, %v3308
      %v3421 = vadd.f32 %v3034, %v3313
      %v3422 = vadd.f32 %v3035, %v3316
      %v3423 = vadd.f32 %v3036, %v3321
      %v3424 = vadd.f32 %v3037, %v3324
      %v3425 = vadd.f32 %v3038, %v3329
      %v3426 = vadd.f32 %v3039, %v3332
      %v3427 = vadd.f32 %v3040, %v3337
      %v3428 = vadd.f32 %v3041, %v3340
      %v3429 = vadd.f32 %v3042, %v3345
      %v3430 = vadd.f32 %v3043, %v3348
      %v3431 = vadd.f32 %v3044, %v3353
      %v3432 = vadd.f32 %v3045, %v3356
      %v3433 = vadd.f32 %v3046, %v3361
      %v3434 = vadd.f32 %v3047, %v3364
      %v3435 = vadd.f32 %v3048, %v3369
      %v3436 = vadd.f32 %v3049, %v3372
      %v3437 = vadd.f32 %v3050, %v3377
      %v3438 = vadd.f32 %v3051, %v3380
      %v3439 = vadd.f32 %v3052, %v3385
      %v3440 = vadd.f32 %v3053, %v3388
      %v3441 = vadd.f32 %v3054, %v3393
      %v3442 = vadd.f32 %v3055, %v3396
      %v3443 = vadd.f32 %v3056, %v3401
      %v3444 = vadd.f32 %v3057, %v3404
      %v3445 = vadd.f32 %v3058, %v3409
      %v3446 = vadd.f32 %v3059, %v3412
      %s3447 = scalar_lea.vmem [#allocation2], 296
      %v3448 = vld [vmem:[%s3447] sm:$0xf]
      %v3449 = vld [vmem:[%s3447 + $0x4] sm:$0xf]
      %v3450 = vld [vmem:[%s3447 + $0x8] sm:$0xf]
      %v3451 = vld [vmem:[%s3447 + $0xc] sm:$0xf]
      %v3452 = vld [vmem:[%s3447 + $0x10] sm:$0xf]
      %v3453 = vld [vmem:[%s3447 + $0x14] sm:$0xf]
      %v3454 = vld [vmem:[%s3447 + $0x18] sm:$0xf]
      %v3455 = vld [vmem:[%s3447 + $0x1c] sm:$0xf]
      %v3456 = vld [vmem:[%s3447 + $0x20] sm:$0xf]
      %v3457 = vld [vmem:[%s3447 + $0x24] sm:$0xf]
      %v3458 = vld [vmem:[%s3447 + $0x28] sm:$0xf]
      %v3459 = vld [vmem:[%s3447 + $0x2c] sm:$0xf]
      %v3460 = vld [vmem:[%s3447 + $0x30] sm:$0xf]
      %v3461 = vld [vmem:[%s3447 + $0x34] sm:$0xf]
      %v3462 = vld [vmem:[%s3447 + $0x38] sm:$0xf]
      %v3463 = vld [vmem:[%s3447 + $0x3c] sm:$0xf]
      %v3464 = vld [vmem:[%s3447 + $0x40] sm:$0xf]
      %v3465 = vld [vmem:[%s3447 + $0x44] sm:$0xf]
      %v3466 = vld [vmem:[%s3447 + $0x48] sm:$0xf]
      %v3467 = vld [vmem:[%s3447 + $0x4c] sm:$0xf]
      %v3468 = vld [vmem:[%s3447 + $0x50] sm:$0xf]
      %v3469 = vld [vmem:[%s3447 + $0x54] sm:$0xf]
      %v3470 = vld [vmem:[%s3447 + $0x58] sm:$0xf]
      %v3471 = vld [vmem:[%s3447 + $0x5c] sm:$0xf]
      %v3472 = vld [vmem:[%s3447 + $0x60] sm:$0xf]
      %v3473 = vld [vmem:[%s3447 + $0x64] sm:$0xf]
      %v3474 = vld [vmem:[%s3447 + $0x68] sm:$0xf]
      %v3475 = vld [vmem:[%s3447 + $0x6c] sm:$0xf]
      %v3476 = vld [vmem:[%s3447 + $0x70] sm:$0xf]
      %v3477 = vld [vmem:[%s3447 + $0x74] sm:$0xf]
      %v3478 = vld [vmem:[%s3447 + $0x78] sm:$0xf]
      %v3479 = vld [vmem:[%s3447 + $0x7c] sm:$0xf]
      %s3480 = scalar_lea.vmem %s4, 320
      %v3481 = vld [vmem:[%s3480] sm:$0xf]
      %v3482 = vld [vmem:[%s3480 + $0x4] sm:$0xf]
      %v3483 = vld [vmem:[%s3480 + $0x8] sm:$0xf]
      %v3484 = vld [vmem:[%s3480 + $0xc] sm:$0xf]
      %v3485 = vld [vmem:[%s3480 + $0x10] sm:$0xf]
      %v3486 = vld [vmem:[%s3480 + $0x14] sm:$0xf]
      %v3487 = vld [vmem:[%s3480 + $0x18] sm:$0xf]
      %v3488 = vld [vmem:[%s3480 + $0x1c] sm:$0xf]
      %v3489 = vld [vmem:[%s3480 + $0x20] sm:$0xf]
      %v3490 = vld [vmem:[%s3480 + $0x24] sm:$0xf]
      %v3491 = vld [vmem:[%s3480 + $0x28] sm:$0xf]
      %v3492 = vld [vmem:[%s3480 + $0x2c] sm:$0xf]
      %v3493 = vld [vmem:[%s3480 + $0x30] sm:$0xf]
      %v3494 = vld [vmem:[%s3480 + $0x34] sm:$0xf]
      %v3495 = vld [vmem:[%s3480 + $0x38] sm:$0xf]
      %v3496 = vld [vmem:[%s3480 + $0x3c] sm:$0xf]
      %v3529 = vunpack.c.l.b16 %v3448
      %v3530 = vunpack.c.l.b16 %v3449
      %v3531 = vunpack.c.l.b16 %v3450
      %v3532 = vunpack.c.l.b16 %v3451
      %v3533 = vunpack.c.l.b16 %v3452
      %v3534 = vunpack.c.l.b16 %v3453
      %v3535 = vunpack.c.l.b16 %v3454
      %v3536 = vunpack.c.l.b16 %v3455
      %v3537 = vunpack.c.l.b16 %v3456
      %v3538 = vunpack.c.l.b16 %v3457
      %v3539 = vunpack.c.l.b16 %v3458
      %v3540 = vunpack.c.l.b16 %v3459
      %v3541 = vunpack.c.l.b16 %v3460
      %v3542 = vunpack.c.l.b16 %v3461
      %v3543 = vunpack.c.l.b16 %v3462
      %v3544 = vunpack.c.l.b16 %v3463
      %v3545 = vunpack.c.l.b16 %v3464
      %v3546 = vunpack.c.l.b16 %v3465
      %v3547 = vunpack.c.l.b16 %v3466
      %v3548 = vunpack.c.l.b16 %v3467
      %v3549 = vunpack.c.l.b16 %v3468
      %v3550 = vunpack.c.l.b16 %v3469
      %v3551 = vunpack.c.l.b16 %v3470
      %v3552 = vunpack.c.l.b16 %v3471
      %v3553 = vunpack.c.l.b16 %v3472
      %v3554 = vunpack.c.l.b16 %v3473
      %v3555 = vunpack.c.l.b16 %v3474
      %v3556 = vunpack.c.l.b16 %v3475
      %v3557 = vunpack.c.l.b16 %v3476
      %v3558 = vunpack.c.l.b16 %v3477
      %v3559 = vunpack.c.l.b16 %v3478
      %v3560 = vunpack.c.l.b16 %v3479
      %v3561 = vpack.c.b16 %v3530, %v3529
      %v3562 = vpack.c.b16 %v3532, %v3531
      %v3563 = vpack.c.b16 %v3534, %v3533
      %v3564 = vpack.c.b16 %v3536, %v3535
      %v3565 = vpack.c.b16 %v3538, %v3537
      %v3566 = vpack.c.b16 %v3540, %v3539
      %v3567 = vpack.c.b16 %v3542, %v3541
      %v3568 = vpack.c.b16 %v3544, %v3543
      %v3569 = vpack.c.b16 %v3546, %v3545
      %v3570 = vpack.c.b16 %v3548, %v3547
      %v3571 = vpack.c.b16 %v3550, %v3549
      %v3572 = vpack.c.b16 %v3552, %v3551
      %v3573 = vpack.c.b16 %v3554, %v3553
      %v3574 = vpack.c.b16 %v3556, %v3555
      %v3575 = vpack.c.b16 %v3558, %v3557
      %v3576 = vpack.c.b16 %v3560, %v3559
      %v3609 = vunpack.c.l.b16 %v3481
      %v3610 = vunpack.c.l.b16 %v3482
      %v3611 = vunpack.c.l.b16 %v3483
      %v3612 = vunpack.c.l.b16 %v3484
      %v3613 = vunpack.c.l.b16 %v3485
      %v3614 = vunpack.c.l.b16 %v3486
      %v3615 = vunpack.c.l.b16 %v3487
      %v3616 = vunpack.c.l.b16 %v3488
      %v3617 = vunpack.c.l.b16 %v3489
      %v3618 = vunpack.c.l.b16 %v3490
      %v3619 = vunpack.c.l.b16 %v3491
      %v3620 = vunpack.c.l.b16 %v3492
      %v3621 = vunpack.c.l.b16 %v3493
      %v3622 = vunpack.c.l.b16 %v3494
      %v3623 = vunpack.c.l.b16 %v3495
      %v3624 = vunpack.c.l.b16 %v3496
      %v3625 = vpack.c.b16 %v3610, %v3609
      %v3626 = vpack.c.b16 %v3612, %v3611
      %v3627 = vpack.c.b16 %v3614, %v3613
      %v3628 = vpack.c.b16 %v3616, %v3615
      %v3629 = vpack.c.b16 %v3618, %v3617
      %v3630 = vpack.c.b16 %v3620, %v3619
      %v3631 = vpack.c.b16 %v3622, %v3621
      %v3632 = vpack.c.b16 %v3624, %v3623
      %3641 = vmatprep.subr.bf16.mxu0 0
      %3642 = vmatpush1.bf16.msra.mxu0 %v3632
      %3643 = vmatprep.subr.bf16.mxu0 0
      %3644 = vmatpush1.bf16.msra.mxu0 %v3631
      %3645 = vmatprep.subr.bf16.mxu0 0
      %3646 = vmatpush1.bf16.msra.mxu0 %v3630
      %3647 = vmatprep.subr.bf16.mxu0 0
      %3648 = vmatpush1.bf16.msra.mxu0 %v3629
      %3649 = vmatprep.subr.bf16.mxu0 0
      %3650 = vmatpush1.bf16.msra.mxu0 %v3628
      %3651 = vmatprep.subr.bf16.mxu0 0
      %3652 = vmatpush1.bf16.msra.mxu0 %v3627
      %3653 = vmatprep.subr.bf16.mxu0 0
      %3654 = vmatpush1.bf16.msra.mxu0 %v3626
      %3655 = vmatprep.subr.bf16.mxu0 0
      %3656 = vmatpush1.bf16.msra.mxu0 %v3625
      %3657 = vmatprep.subr.bf16.mxu0 0
      %3658 = vmatpush2.bf16.msra.mxu0 0
      %3659 = vmatprep.subr.bf16.mxu0 0
      %3660 = vmatpush2.bf16.msra.mxu0 0
      %3661 = vmatprep.subr.bf16.mxu0 0
      %3662 = vmatpush2.bf16.msra.mxu0 0
      %3663 = vmatprep.subr.bf16.mxu0 0
      %3664 = vmatpush2.bf16.msra.mxu0 0
      %3665 = vmatprep.subr.bf16.mxu0 0
      %3666 = vmatpush2.bf16.msra.mxu0 0
      %3667 = vmatprep.subr.bf16.mxu0 0
      %3668 = vmatpush2.bf16.msra.mxu0 0
      %3669 = vmatprep.subr.bf16.mxu0 0
      %3670 = vmatpush2.bf16.msra.mxu0 0
      %3671 = vmatprep.subr.bf16.mxu0 0
      %3672 = vmatpush2.bf16.msra.mxu0 0
      %3673 = vmatprep.mubr.bf16.mxu0 0
      %3674 = vmatmul.mubr.bf16.gmra.mxu0 %v3561
      %v3675 = vpop.f32.mrf.mxu0
      %v3676 = vadd.f32 0.0, %v3675
      %v3677 = vpop.f32.mrf.mxu0
      %v3678 = vpop.f32.mrf.mxu0
      %v3679 = vadd.f32 0.0, %v3678
      %v3680 = vpop.f32.mrf.mxu0
      %3681 = vmatprep.mubr.bf16.mxu0 0
      %3682 = vmatmul.mubr.bf16.gmra.mxu0 %v3562
      %v3683 = vpop.f32.mrf.mxu0
      %v3684 = vadd.f32 0.0, %v3683
      %v3685 = vpop.f32.mrf.mxu0
      %v3686 = vpop.f32.mrf.mxu0
      %v3687 = vadd.f32 0.0, %v3686
      %v3688 = vpop.f32.mrf.mxu0
      %3689 = vmatprep.mubr.bf16.mxu0 0
      %3690 = vmatmul.mubr.bf16.gmra.mxu0 %v3563
      %v3691 = vpop.f32.mrf.mxu0
      %v3692 = vadd.f32 0.0, %v3691
      %v3693 = vpop.f32.mrf.mxu0
      %v3694 = vpop.f32.mrf.mxu0
      %v3695 = vadd.f32 0.0, %v3694
      %v3696 = vpop.f32.mrf.mxu0
      %3697 = vmatprep.mubr.bf16.mxu0 0
      %3698 = vmatmul.mubr.bf16.gmra.mxu0 %v3564
      %v3699 = vpop.f32.mrf.mxu0
      %v3700 = vadd.f32 0.0, %v3699
      %v3701 = vpop.f32.mrf.mxu0
      %v3702 = vpop.f32.mrf.mxu0
      %v3703 = vadd.f32 0.0, %v3702
      %v3704 = vpop.f32.mrf.mxu0
      %3705 = vmatprep.mubr.bf16.mxu0 0
      %3706 = vmatmul.mubr.bf16.gmra.mxu0 %v3565
      %v3707 = vpop.f32.mrf.mxu0
      %v3708 = vadd.f32 0.0, %v3707
      %v3709 = vpop.f32.mrf.mxu0
      %v3710 = vpop.f32.mrf.mxu0
      %v3711 = vadd.f32 0.0, %v3710
      %v3712 = vpop.f32.mrf.mxu0
      %3713 = vmatprep.mubr.bf16.mxu0 0
      %3714 = vmatmul.mubr.bf16.gmra.mxu0 %v3566
      %v3715 = vpop.f32.mrf.mxu0
      %v3716 = vadd.f32 0.0, %v3715
      %v3717 = vpop.f32.mrf.mxu0
      %v3718 = vpop.f32.mrf.mxu0
      %v3719 = vadd.f32 0.0, %v3718
      %v3720 = vpop.f32.mrf.mxu0
      %3721 = vmatprep.mubr.bf16.mxu0 0
      %3722 = vmatmul.mubr.bf16.gmra.mxu0 %v3567
      %v3723 = vpop.f32.mrf.mxu0
      %v3724 = vadd.f32 0.0, %v3723
      %v3725 = vpop.f32.mrf.mxu0
      %v3726 = vpop.f32.mrf.mxu0
      %v3727 = vadd.f32 0.0, %v3726
      %v3728 = vpop.f32.mrf.mxu0
      %3729 = vmatprep.mubr.bf16.mxu0 0
      %3730 = vmatmul.mubr.bf16.gmra.mxu0 %v3568
      %v3731 = vpop.f32.mrf.mxu0
      %v3732 = vadd.f32 0.0, %v3731
      %v3733 = vpop.f32.mrf.mxu0
      %v3734 = vpop.f32.mrf.mxu0
      %v3735 = vadd.f32 0.0, %v3734
      %v3736 = vpop.f32.mrf.mxu0
      %3737 = vmatprep.mubr.bf16.mxu0 0
      %3738 = vmatmul.mubr.bf16.gmra.mxu0 %v3569
      %v3739 = vpop.f32.mrf.mxu0
      %v3740 = vadd.f32 0.0, %v3739
      %v3741 = vpop.f32.mrf.mxu0
      %v3742 = vpop.f32.mrf.mxu0
      %v3743 = vadd.f32 0.0, %v3742
      %v3744 = vpop.f32.mrf.mxu0
      %3745 = vmatprep.mubr.bf16.mxu0 0
      %3746 = vmatmul.mubr.bf16.gmra.mxu0 %v3570
      %v3747 = vpop.f32.mrf.mxu0
      %v3748 = vadd.f32 0.0, %v3747
      %v3749 = vpop.f32.mrf.mxu0
      %v3750 = vpop.f32.mrf.mxu0
      %v3751 = vadd.f32 0.0, %v3750
      %v3752 = vpop.f32.mrf.mxu0
      %3753 = vmatprep.mubr.bf16.mxu0 0
      %3754 = vmatmul.mubr.bf16.gmra.mxu0 %v3571
      %v3755 = vpop.f32.mrf.mxu0
      %v3756 = vadd.f32 0.0, %v3755
      %v3757 = vpop.f32.mrf.mxu0
      %v3758 = vpop.f32.mrf.mxu0
      %v3759 = vadd.f32 0.0, %v3758
      %v3760 = vpop.f32.mrf.mxu0
      %3761 = vmatprep.mubr.bf16.mxu0 0
      %3762 = vmatmul.mubr.bf16.gmra.mxu0 %v3572
      %v3763 = vpop.f32.mrf.mxu0
      %v3764 = vadd.f32 0.0, %v3763
      %v3765 = vpop.f32.mrf.mxu0
      %v3766 = vpop.f32.mrf.mxu0
      %v3767 = vadd.f32 0.0, %v3766
      %v3768 = vpop.f32.mrf.mxu0
      %3769 = vmatprep.mubr.bf16.mxu0 0
      %3770 = vmatmul.mubr.bf16.gmra.mxu0 %v3573
      %v3771 = vpop.f32.mrf.mxu0
      %v3772 = vadd.f32 0.0, %v3771
      %v3773 = vpop.f32.mrf.mxu0
      %v3774 = vpop.f32.mrf.mxu0
      %v3775 = vadd.f32 0.0, %v3774
      %v3776 = vpop.f32.mrf.mxu0
      %3777 = vmatprep.mubr.bf16.mxu0 0
      %3778 = vmatmul.mubr.bf16.gmra.mxu0 %v3574
      %v3779 = vpop.f32.mrf.mxu0
      %v3780 = vadd.f32 0.0, %v3779
      %v3781 = vpop.f32.mrf.mxu0
      %v3782 = vpop.f32.mrf.mxu0
      %v3783 = vadd.f32 0.0, %v3782
      %v3784 = vpop.f32.mrf.mxu0
      %3785 = vmatprep.mubr.bf16.mxu0 0
      %3786 = vmatmul.mubr.bf16.gmra.mxu0 %v3575
      %v3787 = vpop.f32.mrf.mxu0
      %v3788 = vadd.f32 0.0, %v3787
      %v3789 = vpop.f32.mrf.mxu0
      %v3790 = vpop.f32.mrf.mxu0
      %v3791 = vadd.f32 0.0, %v3790
      %v3792 = vpop.f32.mrf.mxu0
      %3793 = vmatprep.mubr.bf16.mxu0 0
      %3794 = vmatmul.mubr.bf16.gmra.mxu0 %v3576
      %v3795 = vpop.f32.mrf.mxu0
      %v3796 = vadd.f32 0.0, %v3795
      %v3797 = vpop.f32.mrf.mxu0
      %v3798 = vpop.f32.mrf.mxu0
      %v3799 = vadd.f32 0.0, %v3798
      %v3800 = vpop.f32.mrf.mxu0
      %3801 = vdwg.mxu0
      %v3802 = vadd.f32 %v3415, %v3676
      %v3803 = vadd.f32 %v3416, %v3679
      %v3804 = vadd.f32 %v3417, %v3684
      %v3805 = vadd.f32 %v3418, %v3687
      %v3806 = vadd.f32 %v3419, %v3692
      %v3807 = vadd.f32 %v3420, %v3695
      %v3808 = vadd.f32 %v3421, %v3700
      %v3809 = vadd.f32 %v3422, %v3703
      %v3810 = vadd.f32 %v3423, %v3708
      %v3811 = vadd.f32 %v3424, %v3711
      %v3812 = vadd.f32 %v3425, %v3716
      %v3813 = vadd.f32 %v3426, %v3719
      %v3814 = vadd.f32 %v3427, %v3724
      %v3815 = vadd.f32 %v3428, %v3727
      %v3816 = vadd.f32 %v3429, %v3732
      %v3817 = vadd.f32 %v3430, %v3735
      %v3818 = vadd.f32 %v3431, %v3740
      %v3819 = vadd.f32 %v3432, %v3743
      %v3820 = vadd.f32 %v3433, %v3748
      %v3821 = vadd.f32 %v3434, %v3751
      %v3822 = vadd.f32 %v3435, %v3756
      %v3823 = vadd.f32 %v3436, %v3759
      %v3824 = vadd.f32 %v3437, %v3764
      %v3825 = vadd.f32 %v3438, %v3767
      %v3826 = vadd.f32 %v3439, %v3772
      %v3827 = vadd.f32 %v3440, %v3775
      %v3828 = vadd.f32 %v3441, %v3780
      %v3829 = vadd.f32 %v3442, %v3783
      %v3830 = vadd.f32 %v3443, %v3788
      %v3831 = vadd.f32 %v3444, %v3791
      %v3832 = vadd.f32 %v3445, %v3796
      %v3833 = vadd.f32 %v3446, %v3799
      %s3834 = scalar_lea.vmem [#allocation2], 16
      %v3835 = vld [vmem:[%s3834] sm:$0xf]
      %v3836 = vld [vmem:[%s3834 + $0x4] sm:$0xf]
      %v3837 = vld [vmem:[%s3834 + $0x8] sm:$0xf]
      %v3838 = vld [vmem:[%s3834 + $0xc] sm:$0xf]
      %v3839 = vld [vmem:[%s3834 + $0x10] sm:$0xf]
      %v3840 = vld [vmem:[%s3834 + $0x14] sm:$0xf]
      %v3841 = vld [vmem:[%s3834 + $0x18] sm:$0xf]
      %v3842 = vld [vmem:[%s3834 + $0x1c] sm:$0xf]
      %v3843 = vld [vmem:[%s3834 + $0x20] sm:$0xf]
      %v3844 = vld [vmem:[%s3834 + $0x24] sm:$0xf]
      %v3845 = vld [vmem:[%s3834 + $0x28] sm:$0xf]
      %v3846 = vld [vmem:[%s3834 + $0x2c] sm:$0xf]
      %v3847 = vld [vmem:[%s3834 + $0x30] sm:$0xf]
      %v3848 = vld [vmem:[%s3834 + $0x34] sm:$0xf]
      %v3849 = vld [vmem:[%s3834 + $0x38] sm:$0xf]
      %v3850 = vld [vmem:[%s3834 + $0x3c] sm:$0xf]
      %v3851 = vld [vmem:[%s3834 + $0x40] sm:$0xf]
      %v3852 = vld [vmem:[%s3834 + $0x44] sm:$0xf]
      %v3853 = vld [vmem:[%s3834 + $0x48] sm:$0xf]
      %v3854 = vld [vmem:[%s3834 + $0x4c] sm:$0xf]
      %v3855 = vld [vmem:[%s3834 + $0x50] sm:$0xf]
      %v3856 = vld [vmem:[%s3834 + $0x54] sm:$0xf]
      %v3857 = vld [vmem:[%s3834 + $0x58] sm:$0xf]
      %v3858 = vld [vmem:[%s3834 + $0x5c] sm:$0xf]
      %v3859 = vld [vmem:[%s3834 + $0x60] sm:$0xf]
      %v3860 = vld [vmem:[%s3834 + $0x64] sm:$0xf]
      %v3861 = vld [vmem:[%s3834 + $0x68] sm:$0xf]
      %v3862 = vld [vmem:[%s3834 + $0x6c] sm:$0xf]
      %v3863 = vld [vmem:[%s3834 + $0x70] sm:$0xf]
      %v3864 = vld [vmem:[%s3834 + $0x74] sm:$0xf]
      %v3865 = vld [vmem:[%s3834 + $0x78] sm:$0xf]
      %v3866 = vld [vmem:[%s3834 + $0x7c] sm:$0xf]
      %s3867 = scalar_lea.vmem %s4, 384
      %v3868 = vld [vmem:[%s3867] sm:$0xf]
      %v3869 = vld [vmem:[%s3867 + $0x4] sm:$0xf]
      %v3870 = vld [vmem:[%s3867 + $0x8] sm:$0xf]
      %v3871 = vld [vmem:[%s3867 + $0xc] sm:$0xf]
      %v3872 = vld [vmem:[%s3867 + $0x10] sm:$0xf]
      %v3873 = vld [vmem:[%s3867 + $0x14] sm:$0xf]
      %v3874 = vld [vmem:[%s3867 + $0x18] sm:$0xf]
      %v3875 = vld [vmem:[%s3867 + $0x1c] sm:$0xf]
      %v3876 = vld [vmem:[%s3867 + $0x20] sm:$0xf]
      %v3877 = vld [vmem:[%s3867 + $0x24] sm:$0xf]
      %v3878 = vld [vmem:[%s3867 + $0x28] sm:$0xf]
      %v3879 = vld [vmem:[%s3867 + $0x2c] sm:$0xf]
      %v3880 = vld [vmem:[%s3867 + $0x30] sm:$0xf]
      %v3881 = vld [vmem:[%s3867 + $0x34] sm:$0xf]
      %v3882 = vld [vmem:[%s3867 + $0x38] sm:$0xf]
      %v3883 = vld [vmem:[%s3867 + $0x3c] sm:$0xf]
      %v3916 = vunpack.c.l.b16 %v3835
      %v3917 = vunpack.c.l.b16 %v3836
      %v3918 = vunpack.c.l.b16 %v3837
      %v3919 = vunpack.c.l.b16 %v3838
      %v3920 = vunpack.c.l.b16 %v3839
      %v3921 = vunpack.c.l.b16 %v3840
      %v3922 = vunpack.c.l.b16 %v3841
      %v3923 = vunpack.c.l.b16 %v3842
      %v3924 = vunpack.c.l.b16 %v3843
      %v3925 = vunpack.c.l.b16 %v3844
      %v3926 = vunpack.c.l.b16 %v3845
      %v3927 = vunpack.c.l.b16 %v3846
      %v3928 = vunpack.c.l.b16 %v3847
      %v3929 = vunpack.c.l.b16 %v3848
      %v3930 = vunpack.c.l.b16 %v3849
      %v3931 = vunpack.c.l.b16 %v3850
      %v3932 = vunpack.c.l.b16 %v3851
      %v3933 = vunpack.c.l.b16 %v3852
      %v3934 = vunpack.c.l.b16 %v3853
      %v3935 = vunpack.c.l.b16 %v3854
      %v3936 = vunpack.c.l.b16 %v3855
      %v3937 = vunpack.c.l.b16 %v3856
      %v3938 = vunpack.c.l.b16 %v3857
      %v3939 = vunpack.c.l.b16 %v3858
      %v3940 = vunpack.c.l.b16 %v3859
      %v3941 = vunpack.c.l.b16 %v3860
      %v3942 = vunpack.c.l.b16 %v3861
      %v3943 = vunpack.c.l.b16 %v3862
      %v3944 = vunpack.c.l.b16 %v3863
      %v3945 = vunpack.c.l.b16 %v3864
      %v3946 = vunpack.c.l.b16 %v3865
      %v3947 = vunpack.c.l.b16 %v3866
      %v3948 = vpack.c.b16 %v3917, %v3916
      %v3949 = vpack.c.b16 %v3919, %v3918
      %v3950 = vpack.c.b16 %v3921, %v3920
      %v3951 = vpack.c.b16 %v3923, %v3922
      %v3952 = vpack.c.b16 %v3925, %v3924
      %v3953 = vpack.c.b16 %v3927, %v3926
      %v3954 = vpack.c.b16 %v3929, %v3928
      %v3955 = vpack.c.b16 %v3931, %v3930
      %v3956 = vpack.c.b16 %v3933, %v3932
      %v3957 = vpack.c.b16 %v3935, %v3934
      %v3958 = vpack.c.b16 %v3937, %v3936
      %v3959 = vpack.c.b16 %v3939, %v3938
      %v3960 = vpack.c.b16 %v3941, %v3940
      %v3961 = vpack.c.b16 %v3943, %v3942
      %v3962 = vpack.c.b16 %v3945, %v3944
      %v3963 = vpack.c.b16 %v3947, %v3946
      %v3996 = vunpack.c.l.b16 %v3868
      %v3997 = vunpack.c.l.b16 %v3869
      %v3998 = vunpack.c.l.b16 %v3870
      %v3999 = vunpack.c.l.b16 %v3871
      %v4000 = vunpack.c.l.b16 %v3872
      %v4001 = vunpack.c.l.b16 %v3873
      %v4002 = vunpack.c.l.b16 %v3874
      %v4003 = vunpack.c.l.b16 %v3875
      %v4004 = vunpack.c.l.b16 %v3876
      %v4005 = vunpack.c.l.b16 %v3877
      %v4006 = vunpack.c.l.b16 %v3878
      %v4007 = vunpack.c.l.b16 %v3879
      %v4008 = vunpack.c.l.b16 %v3880
      %v4009 = vunpack.c.l.b16 %v3881
      %v4010 = vunpack.c.l.b16 %v3882
      %v4011 = vunpack.c.l.b16 %v3883
      %v4012 = vpack.c.b16 %v3997, %v3996
      %v4013 = vpack.c.b16 %v3999, %v3998
      %v4014 = vpack.c.b16 %v4001, %v4000
      %v4015 = vpack.c.b16 %v4003, %v4002
      %v4016 = vpack.c.b16 %v4005, %v4004
      %v4017 = vpack.c.b16 %v4007, %v4006
      %v4018 = vpack.c.b16 %v4009, %v4008
      %v4019 = vpack.c.b16 %v4011, %v4010
      %4028 = vmatprep.subr.bf16.mxu0 0
      %4029 = vmatpush1.bf16.msra.mxu0 %v4019
      %4030 = vmatprep.subr.bf16.mxu0 0
      %4031 = vmatpush1.bf16.msra.mxu0 %v4018
      %4032 = vmatprep.subr.bf16.mxu0 0
      %4033 = vmatpush1.bf16.msra.mxu0 %v4017
      %4034 = vmatprep.subr.bf16.mxu0 0
      %4035 = vmatpush1.bf16.msra.mxu0 %v4016
      %4036 = vmatprep.subr.bf16.mxu0 0
      %4037 = vmatpush1.bf16.msra.mxu0 %v4015
      %4038 = vmatprep.subr.bf16.mxu0 0
      %4039 = vmatpush1.bf16.msra.mxu0 %v4014
      %4040 = vmatprep.subr.bf16.mxu0 0
      %4041 = vmatpush1.bf16.msra.mxu0 %v4013
      %4042 = vmatprep.subr.bf16.mxu0 0
      %4043 = vmatpush1.bf16.msra.mxu0 %v4012
      %4044 = vmatprep.subr.bf16.mxu0 0
      %4045 = vmatpush2.bf16.msra.mxu0 0
      %4046 = vmatprep.subr.bf16.mxu0 0
      %4047 = vmatpush2.bf16.msra.mxu0 0
      %4048 = vmatprep.subr.bf16.mxu0 0
      %4049 = vmatpush2.bf16.msra.mxu0 0
      %4050 = vmatprep.subr.bf16.mxu0 0
      %4051 = vmatpush2.bf16.msra.mxu0 0
      %4052 = vmatprep.subr.bf16.mxu0 0
      %4053 = vmatpush2.bf16.msra.mxu0 0
      %4054 = vmatprep.subr.bf16.mxu0 0
      %4055 = vmatpush2.bf16.msra.mxu0 0
      %4056 = vmatprep.subr.bf16.mxu0 0
      %4057 = vmatpush2.bf16.msra.mxu0 0
      %4058 = vmatprep.subr.bf16.mxu0 0
      %4059 = vmatpush2.bf16.msra.mxu0 0
      %4060 = vmatprep.mubr.bf16.mxu0 0
      %4061 = vmatmul.mubr.bf16.gmra.mxu0 %v3948
      %v4062 = vpop.f32.mrf.mxu0
      %v4063 = vadd.f32 0.0, %v4062
      %v4064 = vpop.f32.mrf.mxu0
      %v4065 = vpop.f32.mrf.mxu0
      %v4066 = vadd.f32 0.0, %v4065
      %v4067 = vpop.f32.mrf.mxu0
      %4068 = vmatprep.mubr.bf16.mxu0 0
      %4069 = vmatmul.mubr.bf16.gmra.mxu0 %v3949
      %v4070 = vpop.f32.mrf.mxu0
      %v4071 = vadd.f32 0.0, %v4070
      %v4072 = vpop.f32.mrf.mxu0
      %v4073 = vpop.f32.mrf.mxu0
      %v4074 = vadd.f32 0.0, %v4073
      %v4075 = vpop.f32.mrf.mxu0
      %4076 = vmatprep.mubr.bf16.mxu0 0
      %4077 = vmatmul.mubr.bf16.gmra.mxu0 %v3950
      %v4078 = vpop.f32.mrf.mxu0
      %v4079 = vadd.f32 0.0, %v4078
      %v4080 = vpop.f32.mrf.mxu0
      %v4081 = vpop.f32.mrf.mxu0
      %v4082 = vadd.f32 0.0, %v4081
      %v4083 = vpop.f32.mrf.mxu0
      %4084 = vmatprep.mubr.bf16.mxu0 0
      %4085 = vmatmul.mubr.bf16.gmra.mxu0 %v3951
      %v4086 = vpop.f32.mrf.mxu0
      %v4087 = vadd.f32 0.0, %v4086
      %v4088 = vpop.f32.mrf.mxu0
      %v4089 = vpop.f32.mrf.mxu0
      %v4090 = vadd.f32 0.0, %v4089
      %v4091 = vpop.f32.mrf.mxu0
      %4092 = vmatprep.mubr.bf16.mxu0 0
      %4093 = vmatmul.mubr.bf16.gmra.mxu0 %v3952
      %v4094 = vpop.f32.mrf.mxu0
      %v4095 = vadd.f32 0.0, %v4094
      %v4096 = vpop.f32.mrf.mxu0
      %v4097 = vpop.f32.mrf.mxu0
      %v4098 = vadd.f32 0.0, %v4097
      %v4099 = vpop.f32.mrf.mxu0
      %4100 = vmatprep.mubr.bf16.mxu0 0
      %4101 = vmatmul.mubr.bf16.gmra.mxu0 %v3953
      %v4102 = vpop.f32.mrf.mxu0
      %v4103 = vadd.f32 0.0, %v4102
      %v4104 = vpop.f32.mrf.mxu0
      %v4105 = vpop.f32.mrf.mxu0
      %v4106 = vadd.f32 0.0, %v4105
      %v4107 = vpop.f32.mrf.mxu0
      %4108 = vmatprep.mubr.bf16.mxu0 0
      %4109 = vmatmul.mubr.bf16.gmra.mxu0 %v3954
      %v4110 = vpop.f32.mrf.mxu0
      %v4111 = vadd.f32 0.0, %v4110
      %v4112 = vpop.f32.mrf.mxu0
      %v4113 = vpop.f32.mrf.mxu0
      %v4114 = vadd.f32 0.0, %v4113
      %v4115 = vpop.f32.mrf.mxu0
      %4116 = vmatprep.mubr.bf16.mxu0 0
      %4117 = vmatmul.mubr.bf16.gmra.mxu0 %v3955
      %v4118 = vpop.f32.mrf.mxu0
      %v4119 = vadd.f32 0.0, %v4118
      %v4120 = vpop.f32.mrf.mxu0
      %v4121 = vpop.f32.mrf.mxu0
      %v4122 = vadd.f32 0.0, %v4121
      %v4123 = vpop.f32.mrf.mxu0
      %4124 = vmatprep.mubr.bf16.mxu0 0
      %4125 = vmatmul.mubr.bf16.gmra.mxu0 %v3956
      %v4126 = vpop.f32.mrf.mxu0
      %v4127 = vadd.f32 0.0, %v4126
      %v4128 = vpop.f32.mrf.mxu0
      %v4129 = vpop.f32.mrf.mxu0
      %v4130 = vadd.f32 0.0, %v4129
      %v4131 = vpop.f32.mrf.mxu0
      %4132 = vmatprep.mubr.bf16.mxu0 0
      %4133 = vmatmul.mubr.bf16.gmra.mxu0 %v3957
      %v4134 = vpop.f32.mrf.mxu0
      %v4135 = vadd.f32 0.0, %v4134
      %v4136 = vpop.f32.mrf.mxu0
      %v4137 = vpop.f32.mrf.mxu0
      %v4138 = vadd.f32 0.0, %v4137
      %v4139 = vpop.f32.mrf.mxu0
      %4140 = vmatprep.mubr.bf16.mxu0 0
      %4141 = vmatmul.mubr.bf16.gmra.mxu0 %v3958
      %v4142 = vpop.f32.mrf.mxu0
      %v4143 = vadd.f32 0.0, %v4142
      %v4144 = vpop.f32.mrf.mxu0
      %v4145 = vpop.f32.mrf.mxu0
      %v4146 = vadd.f32 0.0, %v4145
      %v4147 = vpop.f32.mrf.mxu0
      %4148 = vmatprep.mubr.bf16.mxu0 0
      %4149 = vmatmul.mubr.bf16.gmra.mxu0 %v3959
      %v4150 = vpop.f32.mrf.mxu0
      %v4151 = vadd.f32 0.0, %v4150
      %v4152 = vpop.f32.mrf.mxu0
      %v4153 = vpop.f32.mrf.mxu0
      %v4154 = vadd.f32 0.0, %v4153
      %v4155 = vpop.f32.mrf.mxu0
      %4156 = vmatprep.mubr.bf16.mxu0 0
      %4157 = vmatmul.mubr.bf16.gmra.mxu0 %v3960
      %v4158 = vpop.f32.mrf.mxu0
      %v4159 = vadd.f32 0.0, %v4158
      %v4160 = vpop.f32.mrf.mxu0
      %v4161 = vpop.f32.mrf.mxu0
      %v4162 = vadd.f32 0.0, %v4161
      %v4163 = vpop.f32.mrf.mxu0
      %4164 = vmatprep.mubr.bf16.mxu0 0
      %4165 = vmatmul.mubr.bf16.gmra.mxu0 %v3961
      %v4166 = vpop.f32.mrf.mxu0
      %v4167 = vadd.f32 0.0, %v4166
      %v4168 = vpop.f32.mrf.mxu0
      %v4169 = vpop.f32.mrf.mxu0
      %v4170 = vadd.f32 0.0, %v4169
      %v4171 = vpop.f32.mrf.mxu0
      %4172 = vmatprep.mubr.bf16.mxu0 0
      %4173 = vmatmul.mubr.bf16.gmra.mxu0 %v3962
      %v4174 = vpop.f32.mrf.mxu0
      %v4175 = vadd.f32 0.0, %v4174
      %v4176 = vpop.f32.mrf.mxu0
      %v4177 = vpop.f32.mrf.mxu0
      %v4178 = vadd.f32 0.0, %v4177
      %v4179 = vpop.f32.mrf.mxu0
      %4180 = vmatprep.mubr.bf16.mxu0 0
      %4181 = vmatmul.mubr.bf16.gmra.mxu0 %v3963
      %v4182 = vpop.f32.mrf.mxu0
      %v4183 = vadd.f32 0.0, %v4182
      %v4184 = vpop.f32.mrf.mxu0
      %v4185 = vpop.f32.mrf.mxu0
      %v4186 = vadd.f32 0.0, %v4185
      %v4187 = vpop.f32.mrf.mxu0
      %4188 = vdwg.mxu0
      %v4189 = vadd.f32 %v3802, %v4063
      %v4190 = vadd.f32 %v3803, %v4066
      %v4191 = vadd.f32 %v3804, %v4071
      %v4192 = vadd.f32 %v3805, %v4074
      %v4193 = vadd.f32 %v3806, %v4079
      %v4194 = vadd.f32 %v3807, %v4082
      %v4195 = vadd.f32 %v3808, %v4087
      %v4196 = vadd.f32 %v3809, %v4090
      %v4197 = vadd.f32 %v3810, %v4095
      %v4198 = vadd.f32 %v3811, %v4098
      %v4199 = vadd.f32 %v3812, %v4103
      %v4200 = vadd.f32 %v3813, %v4106
      %v4201 = vadd.f32 %v3814, %v4111
      %v4202 = vadd.f32 %v3815, %v4114
      %v4203 = vadd.f32 %v3816, %v4119
      %v4204 = vadd.f32 %v3817, %v4122
      %v4205 = vadd.f32 %v3818, %v4127
      %v4206 = vadd.f32 %v3819, %v4130
      %v4207 = vadd.f32 %v3820, %v4135
      %v4208 = vadd.f32 %v3821, %v4138
      %v4209 = vadd.f32 %v3822, %v4143
      %v4210 = vadd.f32 %v3823, %v4146
      %v4211 = vadd.f32 %v3824, %v4151
      %v4212 = vadd.f32 %v3825, %v4154
      %v4213 = vadd.f32 %v3826, %v4159
      %v4214 = vadd.f32 %v3827, %v4162
      %v4215 = vadd.f32 %v3828, %v4167
      %v4216 = vadd.f32 %v3829, %v4170
      %v4217 = vadd.f32 %v3830, %v4175
      %v4218 = vadd.f32 %v3831, %v4178
      %v4219 = vadd.f32 %v3832, %v4183
      %v4220 = vadd.f32 %v3833, %v4186
      %s4221 = scalar_lea.vmem [#allocation2], 160
      %v4222 = vld [vmem:[%s4221] sm:$0xf]
      %v4223 = vld [vmem:[%s4221 + $0x4] sm:$0xf]
      %v4224 = vld [vmem:[%s4221 + $0x8] sm:$0xf]
      %v4225 = vld [vmem:[%s4221 + $0xc] sm:$0xf]
      %v4226 = vld [vmem:[%s4221 + $0x10] sm:$0xf]
      %v4227 = vld [vmem:[%s4221 + $0x14] sm:$0xf]
      %v4228 = vld [vmem:[%s4221 + $0x18] sm:$0xf]
      %v4229 = vld [vmem:[%s4221 + $0x1c] sm:$0xf]
      %v4230 = vld [vmem:[%s4221 + $0x20] sm:$0xf]
      %v4231 = vld [vmem:[%s4221 + $0x24] sm:$0xf]
      %v4232 = vld [vmem:[%s4221 + $0x28] sm:$0xf]
      %v4233 = vld [vmem:[%s4221 + $0x2c] sm:$0xf]
      %v4234 = vld [vmem:[%s4221 + $0x30] sm:$0xf]
      %v4235 = vld [vmem:[%s4221 + $0x34] sm:$0xf]
      %v4236 = vld [vmem:[%s4221 + $0x38] sm:$0xf]
      %v4237 = vld [vmem:[%s4221 + $0x3c] sm:$0xf]
      %v4238 = vld [vmem:[%s4221 + $0x40] sm:$0xf]
      %v4239 = vld [vmem:[%s4221 + $0x44] sm:$0xf]
      %v4240 = vld [vmem:[%s4221 + $0x48] sm:$0xf]
      %v4241 = vld [vmem:[%s4221 + $0x4c] sm:$0xf]
      %v4242 = vld [vmem:[%s4221 + $0x50] sm:$0xf]
      %v4243 = vld [vmem:[%s4221 + $0x54] sm:$0xf]
      %v4244 = vld [vmem:[%s4221 + $0x58] sm:$0xf]
      %v4245 = vld [vmem:[%s4221 + $0x5c] sm:$0xf]
      %v4246 = vld [vmem:[%s4221 + $0x60] sm:$0xf]
      %v4247 = vld [vmem:[%s4221 + $0x64] sm:$0xf]
      %v4248 = vld [vmem:[%s4221 + $0x68] sm:$0xf]
      %v4249 = vld [vmem:[%s4221 + $0x6c] sm:$0xf]
      %v4250 = vld [vmem:[%s4221 + $0x70] sm:$0xf]
      %v4251 = vld [vmem:[%s4221 + $0x74] sm:$0xf]
      %v4252 = vld [vmem:[%s4221 + $0x78] sm:$0xf]
      %v4253 = vld [vmem:[%s4221 + $0x7c] sm:$0xf]
      %s4254 = scalar_lea.vmem %s4, 448
      %v4255 = vld [vmem:[%s4254] sm:$0xf]
      %v4256 = vld [vmem:[%s4254 + $0x4] sm:$0xf]
      %v4257 = vld [vmem:[%s4254 + $0x8] sm:$0xf]
      %v4258 = vld [vmem:[%s4254 + $0xc] sm:$0xf]
      %v4259 = vld [vmem:[%s4254 + $0x10] sm:$0xf]
      %v4260 = vld [vmem:[%s4254 + $0x14] sm:$0xf]
      %v4261 = vld [vmem:[%s4254 + $0x18] sm:$0xf]
      %v4262 = vld [vmem:[%s4254 + $0x1c] sm:$0xf]
      %v4263 = vld [vmem:[%s4254 + $0x20] sm:$0xf]
      %v4264 = vld [vmem:[%s4254 + $0x24] sm:$0xf]
      %v4265 = vld [vmem:[%s4254 + $0x28] sm:$0xf]
      %v4266 = vld [vmem:[%s4254 + $0x2c] sm:$0xf]
      %v4267 = vld [vmem:[%s4254 + $0x30] sm:$0xf]
      %v4268 = vld [vmem:[%s4254 + $0x34] sm:$0xf]
      %v4269 = vld [vmem:[%s4254 + $0x38] sm:$0xf]
      %v4270 = vld [vmem:[%s4254 + $0x3c] sm:$0xf]
      %v4303 = vunpack.c.l.b16 %v4222
      %v4304 = vunpack.c.l.b16 %v4223
      %v4305 = vunpack.c.l.b16 %v4224
      %v4306 = vunpack.c.l.b16 %v4225
      %v4307 = vunpack.c.l.b16 %v4226
      %v4308 = vunpack.c.l.b16 %v4227
      %v4309 = vunpack.c.l.b16 %v4228
      %v4310 = vunpack.c.l.b16 %v4229
      %v4311 = vunpack.c.l.b16 %v4230
      %v4312 = vunpack.c.l.b16 %v4231
      %v4313 = vunpack.c.l.b16 %v4232
      %v4314 = vunpack.c.l.b16 %v4233
      %v4315 = vunpack.c.l.b16 %v4234
      %v4316 = vunpack.c.l.b16 %v4235
      %v4317 = vunpack.c.l.b16 %v4236
      %v4318 = vunpack.c.l.b16 %v4237
      %v4319 = vunpack.c.l.b16 %v4238
      %v4320 = vunpack.c.l.b16 %v4239
      %v4321 = vunpack.c.l.b16 %v4240
      %v4322 = vunpack.c.l.b16 %v4241
      %v4323 = vunpack.c.l.b16 %v4242
      %v4324 = vunpack.c.l.b16 %v4243
      %v4325 = vunpack.c.l.b16 %v4244
      %v4326 = vunpack.c.l.b16 %v4245
      %v4327 = vunpack.c.l.b16 %v4246
      %v4328 = vunpack.c.l.b16 %v4247
      %v4329 = vunpack.c.l.b16 %v4248
      %v4330 = vunpack.c.l.b16 %v4249
      %v4331 = vunpack.c.l.b16 %v4250
      %v4332 = vunpack.c.l.b16 %v4251
      %v4333 = vunpack.c.l.b16 %v4252
      %v4334 = vunpack.c.l.b16 %v4253
      %v4335 = vpack.c.b16 %v4304, %v4303
      %v4336 = vpack.c.b16 %v4306, %v4305
      %v4337 = vpack.c.b16 %v4308, %v4307
      %v4338 = vpack.c.b16 %v4310, %v4309
      %v4339 = vpack.c.b16 %v4312, %v4311
      %v4340 = vpack.c.b16 %v4314, %v4313
      %v4341 = vpack.c.b16 %v4316, %v4315
      %v4342 = vpack.c.b16 %v4318, %v4317
      %v4343 = vpack.c.b16 %v4320, %v4319
      %v4344 = vpack.c.b16 %v4322, %v4321
      %v4345 = vpack.c.b16 %v4324, %v4323
      %v4346 = vpack.c.b16 %v4326, %v4325
      %v4347 = vpack.c.b16 %v4328, %v4327
      %v4348 = vpack.c.b16 %v4330, %v4329
      %v4349 = vpack.c.b16 %v4332, %v4331
      %v4350 = vpack.c.b16 %v4334, %v4333
      %v4383 = vunpack.c.l.b16 %v4255
      %v4384 = vunpack.c.l.b16 %v4256
      %v4385 = vunpack.c.l.b16 %v4257
      %v4386 = vunpack.c.l.b16 %v4258
      %v4387 = vunpack.c.l.b16 %v4259
      %v4388 = vunpack.c.l.b16 %v4260
      %v4389 = vunpack.c.l.b16 %v4261
      %v4390 = vunpack.c.l.b16 %v4262
      %v4391 = vunpack.c.l.b16 %v4263
      %v4392 = vunpack.c.l.b16 %v4264
      %v4393 = vunpack.c.l.b16 %v4265
      %v4394 = vunpack.c.l.b16 %v4266
      %v4395 = vunpack.c.l.b16 %v4267
      %v4396 = vunpack.c.l.b16 %v4268
      %v4397 = vunpack.c.l.b16 %v4269
      %v4398 = vunpack.c.l.b16 %v4270
      %v4399 = vpack.c.b16 %v4384, %v4383
      %v4400 = vpack.c.b16 %v4386, %v4385
      %v4401 = vpack.c.b16 %v4388, %v4387
      %v4402 = vpack.c.b16 %v4390, %v4389
      %v4403 = vpack.c.b16 %v4392, %v4391
      %v4404 = vpack.c.b16 %v4394, %v4393
      %v4405 = vpack.c.b16 %v4396, %v4395
      %v4406 = vpack.c.b16 %v4398, %v4397
      %4415 = vmatprep.subr.bf16.mxu0 0
      %4416 = vmatpush1.bf16.msra.mxu0 %v4406
      %4417 = vmatprep.subr.bf16.mxu0 0
      %4418 = vmatpush1.bf16.msra.mxu0 %v4405
      %4419 = vmatprep.subr.bf16.mxu0 0
      %4420 = vmatpush1.bf16.msra.mxu0 %v4404
      %4421 = vmatprep.subr.bf16.mxu0 0
      %4422 = vmatpush1.bf16.msra.mxu0 %v4403
      %4423 = vmatprep.subr.bf16.mxu0 0
      %4424 = vmatpush1.bf16.msra.mxu0 %v4402
      %4425 = vmatprep.subr.bf16.mxu0 0
      %4426 = vmatpush1.bf16.msra.mxu0 %v4401
      %4427 = vmatprep.subr.bf16.mxu0 0
      %4428 = vmatpush1.bf16.msra.mxu0 %v4400
      %4429 = vmatprep.subr.bf16.mxu0 0
      %4430 = vmatpush1.bf16.msra.mxu0 %v4399
      %4431 = vmatprep.subr.bf16.mxu0 0
      %4432 = vmatpush2.bf16.msra.mxu0 0
      %4433 = vmatprep.subr.bf16.mxu0 0
      %4434 = vmatpush2.bf16.msra.mxu0 0
      %4435 = vmatprep.subr.bf16.mxu0 0
      %4436 = vmatpush2.bf16.msra.mxu0 0
      %4437 = vmatprep.subr.bf16.mxu0 0
      %4438 = vmatpush2.bf16.msra.mxu0 0
      %4439 = vmatprep.subr.bf16.mxu0 0
      %4440 = vmatpush2.bf16.msra.mxu0 0
      %4441 = vmatprep.subr.bf16.mxu0 0
      %4442 = vmatpush2.bf16.msra.mxu0 0
      %4443 = vmatprep.subr.bf16.mxu0 0
      %4444 = vmatpush2.bf16.msra.mxu0 0
      %4445 = vmatprep.subr.bf16.mxu0 0
      %4446 = vmatpush2.bf16.msra.mxu0 0
      %4447 = vmatprep.mubr.bf16.mxu0 0
      %4448 = vmatmul.mubr.bf16.gmra.mxu0 %v4335
      %v4449 = vpop.f32.mrf.mxu0
      %v4450 = vadd.f32 0.0, %v4449
      %v4451 = vpop.f32.mrf.mxu0
      %v4452 = vpop.f32.mrf.mxu0
      %v4453 = vadd.f32 0.0, %v4452
      %v4454 = vpop.f32.mrf.mxu0
      %4455 = vmatprep.mubr.bf16.mxu0 0
      %4456 = vmatmul.mubr.bf16.gmra.mxu0 %v4336
      %v4457 = vpop.f32.mrf.mxu0
      %v4458 = vadd.f32 0.0, %v4457
      %v4459 = vpop.f32.mrf.mxu0
      %v4460 = vpop.f32.mrf.mxu0
      %v4461 = vadd.f32 0.0, %v4460
      %v4462 = vpop.f32.mrf.mxu0
      %4463 = vmatprep.mubr.bf16.mxu0 0
      %4464 = vmatmul.mubr.bf16.gmra.mxu0 %v4337
      %v4465 = vpop.f32.mrf.mxu0
      %v4466 = vadd.f32 0.0, %v4465
      %v4467 = vpop.f32.mrf.mxu0
      %v4468 = vpop.f32.mrf.mxu0
      %v4469 = vadd.f32 0.0, %v4468
      %v4470 = vpop.f32.mrf.mxu0
      %4471 = vmatprep.mubr.bf16.mxu0 0
      %4472 = vmatmul.mubr.bf16.gmra.mxu0 %v4338
      %v4473 = vpop.f32.mrf.mxu0
      %v4474 = vadd.f32 0.0, %v4473
      %v4475 = vpop.f32.mrf.mxu0
      %v4476 = vpop.f32.mrf.mxu0
      %v4477 = vadd.f32 0.0, %v4476
      %v4478 = vpop.f32.mrf.mxu0
      %4479 = vmatprep.mubr.bf16.mxu0 0
      %4480 = vmatmul.mubr.bf16.gmra.mxu0 %v4339
      %v4481 = vpop.f32.mrf.mxu0
      %v4482 = vadd.f32 0.0, %v4481
      %v4483 = vpop.f32.mrf.mxu0
      %v4484 = vpop.f32.mrf.mxu0
      %v4485 = vadd.f32 0.0, %v4484
      %v4486 = vpop.f32.mrf.mxu0
      %4487 = vmatprep.mubr.bf16.mxu0 0
      %4488 = vmatmul.mubr.bf16.gmra.mxu0 %v4340
      %v4489 = vpop.f32.mrf.mxu0
      %v4490 = vadd.f32 0.0, %v4489
      %v4491 = vpop.f32.mrf.mxu0
      %v4492 = vpop.f32.mrf.mxu0
      %v4493 = vadd.f32 0.0, %v4492
      %v4494 = vpop.f32.mrf.mxu0
      %4495 = vmatprep.mubr.bf16.mxu0 0
      %4496 = vmatmul.mubr.bf16.gmra.mxu0 %v4341
      %v4497 = vpop.f32.mrf.mxu0
      %v4498 = vadd.f32 0.0, %v4497
      %v4499 = vpop.f32.mrf.mxu0
      %v4500 = vpop.f32.mrf.mxu0
      %v4501 = vadd.f32 0.0, %v4500
      %v4502 = vpop.f32.mrf.mxu0
      %4503 = vmatprep.mubr.bf16.mxu0 0
      %4504 = vmatmul.mubr.bf16.gmra.mxu0 %v4342
      %v4505 = vpop.f32.mrf.mxu0
      %v4506 = vadd.f32 0.0, %v4505
      %v4507 = vpop.f32.mrf.mxu0
      %v4508 = vpop.f32.mrf.mxu0
      %v4509 = vadd.f32 0.0, %v4508
      %v4510 = vpop.f32.mrf.mxu0
      %4511 = vmatprep.mubr.bf16.mxu0 0
      %4512 = vmatmul.mubr.bf16.gmra.mxu0 %v4343
      %v4513 = vpop.f32.mrf.mxu0
      %v4514 = vadd.f32 0.0, %v4513
      %v4515 = vpop.f32.mrf.mxu0
      %v4516 = vpop.f32.mrf.mxu0
      %v4517 = vadd.f32 0.0, %v4516
      %v4518 = vpop.f32.mrf.mxu0
      %4519 = vmatprep.mubr.bf16.mxu0 0
      %4520 = vmatmul.mubr.bf16.gmra.mxu0 %v4344
      %v4521 = vpop.f32.mrf.mxu0
      %v4522 = vadd.f32 0.0, %v4521
      %v4523 = vpop.f32.mrf.mxu0
      %v4524 = vpop.f32.mrf.mxu0
      %v4525 = vadd.f32 0.0, %v4524
      %v4526 = vpop.f32.mrf.mxu0
      %4527 = vmatprep.mubr.bf16.mxu0 0
      %4528 = vmatmul.mubr.bf16.gmra.mxu0 %v4345
      %v4529 = vpop.f32.mrf.mxu0
      %v4530 = vadd.f32 0.0, %v4529
      %v4531 = vpop.f32.mrf.mxu0
      %v4532 = vpop.f32.mrf.mxu0
      %v4533 = vadd.f32 0.0, %v4532
      %v4534 = vpop.f32.mrf.mxu0
      %4535 = vmatprep.mubr.bf16.mxu0 0
      %4536 = vmatmul.mubr.bf16.gmra.mxu0 %v4346
      %v4537 = vpop.f32.mrf.mxu0
      %v4538 = vadd.f32 0.0, %v4537
      %v4539 = vpop.f32.mrf.mxu0
      %v4540 = vpop.f32.mrf.mxu0
      %v4541 = vadd.f32 0.0, %v4540
      %v4542 = vpop.f32.mrf.mxu0
      %4543 = vmatprep.mubr.bf16.mxu0 0
      %4544 = vmatmul.mubr.bf16.gmra.mxu0 %v4347
      %v4545 = vpop.f32.mrf.mxu0
      %v4546 = vadd.f32 0.0, %v4545
      %v4547 = vpop.f32.mrf.mxu0
      %v4548 = vpop.f32.mrf.mxu0
      %v4549 = vadd.f32 0.0, %v4548
      %v4550 = vpop.f32.mrf.mxu0
      %4551 = vmatprep.mubr.bf16.mxu0 0
      %4552 = vmatmul.mubr.bf16.gmra.mxu0 %v4348
      %v4553 = vpop.f32.mrf.mxu0
      %v4554 = vadd.f32 0.0, %v4553
      %v4555 = vpop.f32.mrf.mxu0
      %v4556 = vpop.f32.mrf.mxu0
      %v4557 = vadd.f32 0.0, %v4556
      %v4558 = vpop.f32.mrf.mxu0
      %4559 = vmatprep.mubr.bf16.mxu0 0
      %4560 = vmatmul.mubr.bf16.gmra.mxu0 %v4349
      %v4561 = vpop.f32.mrf.mxu0
      %v4562 = vadd.f32 0.0, %v4561
      %v4563 = vpop.f32.mrf.mxu0
      %v4564 = vpop.f32.mrf.mxu0
      %v4565 = vadd.f32 0.0, %v4564
      %v4566 = vpop.f32.mrf.mxu0
      %4567 = vmatprep.mubr.bf16.mxu0 0
      %4568 = vmatmul.mubr.bf16.gmra.mxu0 %v4350
      %v4569 = vpop.f32.mrf.mxu0
      %v4570 = vadd.f32 0.0, %v4569
      %v4571 = vpop.f32.mrf.mxu0
      %v4572 = vpop.f32.mrf.mxu0
      %v4573 = vadd.f32 0.0, %v4572
      %v4574 = vpop.f32.mrf.mxu0
      %4575 = vdwg.mxu0
      %v4576 = vadd.f32 %v4189, %v4450
      %v4577 = vadd.f32 %v4190, %v4453
      %v4578 = vadd.f32 %v4191, %v4458
      %v4579 = vadd.f32 %v4192, %v4461
      %v4580 = vadd.f32 %v4193, %v4466
      %v4581 = vadd.f32 %v4194, %v4469
      %v4582 = vadd.f32 %v4195, %v4474
      %v4583 = vadd.f32 %v4196, %v4477
      %v4584 = vadd.f32 %v4197, %v4482
      %v4585 = vadd.f32 %v4198, %v4485
      %v4586 = vadd.f32 %v4199, %v4490
      %v4587 = vadd.f32 %v4200, %v4493
      %v4588 = vadd.f32 %v4201, %v4498
      %v4589 = vadd.f32 %v4202, %v4501
      %v4590 = vadd.f32 %v4203, %v4506
      %v4591 = vadd.f32 %v4204, %v4509
      %v4592 = vadd.f32 %v4205, %v4514
      %v4593 = vadd.f32 %v4206, %v4517
      %v4594 = vadd.f32 %v4207, %v4522
      %v4595 = vadd.f32 %v4208, %v4525
      %v4596 = vadd.f32 %v4209, %v4530
      %v4597 = vadd.f32 %v4210, %v4533
      %v4598 = vadd.f32 %v4211, %v4538
      %v4599 = vadd.f32 %v4212, %v4541
      %v4600 = vadd.f32 %v4213, %v4546
      %v4601 = vadd.f32 %v4214, %v4549
      %v4602 = vadd.f32 %v4215, %v4554
      %v4603 = vadd.f32 %v4216, %v4557
      %v4604 = vadd.f32 %v4217, %v4562
      %v4605 = vadd.f32 %v4218, %v4565
      %v4606 = vadd.f32 %v4219, %v4570
      %v4607 = vadd.f32 %v4220, %v4573
      %s4608 = scalar_lea.vmem [#allocation2], 304
      %v4609 = vld [vmem:[%s4608] sm:$0xf]
      %v4610 = vld [vmem:[%s4608 + $0x4] sm:$0xf]
      %v4611 = vld [vmem:[%s4608 + $0x8] sm:$0xf]
      %v4612 = vld [vmem:[%s4608 + $0xc] sm:$0xf]
      %v4613 = vld [vmem:[%s4608 + $0x10] sm:$0xf]
      %v4614 = vld [vmem:[%s4608 + $0x14] sm:$0xf]
      %v4615 = vld [vmem:[%s4608 + $0x18] sm:$0xf]
      %v4616 = vld [vmem:[%s4608 + $0x1c] sm:$0xf]
      %v4617 = vld [vmem:[%s4608 + $0x20] sm:$0xf]
      %v4618 = vld [vmem:[%s4608 + $0x24] sm:$0xf]
      %v4619 = vld [vmem:[%s4608 + $0x28] sm:$0xf]
      %v4620 = vld [vmem:[%s4608 + $0x2c] sm:$0xf]
      %v4621 = vld [vmem:[%s4608 + $0x30] sm:$0xf]
      %v4622 = vld [vmem:[%s4608 + $0x34] sm:$0xf]
      %v4623 = vld [vmem:[%s4608 + $0x38] sm:$0xf]
      %v4624 = vld [vmem:[%s4608 + $0x3c] sm:$0xf]
      %v4625 = vld [vmem:[%s4608 + $0x40] sm:$0xf]
      %v4626 = vld [vmem:[%s4608 + $0x44] sm:$0xf]
      %v4627 = vld [vmem:[%s4608 + $0x48] sm:$0xf]
      %v4628 = vld [vmem:[%s4608 + $0x4c] sm:$0xf]
      %v4629 = vld [vmem:[%s4608 + $0x50] sm:$0xf]
      %v4630 = vld [vmem:[%s4608 + $0x54] sm:$0xf]
      %v4631 = vld [vmem:[%s4608 + $0x58] sm:$0xf]
      %v4632 = vld [vmem:[%s4608 + $0x5c] sm:$0xf]
      %v4633 = vld [vmem:[%s4608 + $0x60] sm:$0xf]
      %v4634 = vld [vmem:[%s4608 + $0x64] sm:$0xf]
      %v4635 = vld [vmem:[%s4608 + $0x68] sm:$0xf]
      %v4636 = vld [vmem:[%s4608 + $0x6c] sm:$0xf]
      %v4637 = vld [vmem:[%s4608 + $0x70] sm:$0xf]
      %v4638 = vld [vmem:[%s4608 + $0x74] sm:$0xf]
      %v4639 = vld [vmem:[%s4608 + $0x78] sm:$0xf]
      %v4640 = vld [vmem:[%s4608 + $0x7c] sm:$0xf]
      %s4641 = scalar_lea.vmem %s4, 512
      %v4642 = vld [vmem:[%s4641] sm:$0xf]
      %v4643 = vld [vmem:[%s4641 + $0x4] sm:$0xf]
      %v4644 = vld [vmem:[%s4641 + $0x8] sm:$0xf]
      %v4645 = vld [vmem:[%s4641 + $0xc] sm:$0xf]
      %v4646 = vld [vmem:[%s4641 + $0x10] sm:$0xf]
      %v4647 = vld [vmem:[%s4641 + $0x14] sm:$0xf]
      %v4648 = vld [vmem:[%s4641 + $0x18] sm:$0xf]
      %v4649 = vld [vmem:[%s4641 + $0x1c] sm:$0xf]
      %v4650 = vld [vmem:[%s4641 + $0x20] sm:$0xf]
      %v4651 = vld [vmem:[%s4641 + $0x24] sm:$0xf]
      %v4652 = vld [vmem:[%s4641 + $0x28] sm:$0xf]
      %v4653 = vld [vmem:[%s4641 + $0x2c] sm:$0xf]
      %v4654 = vld [vmem:[%s4641 + $0x30] sm:$0xf]
      %v4655 = vld [vmem:[%s4641 + $0x34] sm:$0xf]
      %v4656 = vld [vmem:[%s4641 + $0x38] sm:$0xf]
      %v4657 = vld [vmem:[%s4641 + $0x3c] sm:$0xf]
      %v4690 = vunpack.c.l.b16 %v4609
      %v4691 = vunpack.c.l.b16 %v4610
      %v4692 = vunpack.c.l.b16 %v4611
      %v4693 = vunpack.c.l.b16 %v4612
      %v4694 = vunpack.c.l.b16 %v4613
      %v4695 = vunpack.c.l.b16 %v4614
      %v4696 = vunpack.c.l.b16 %v4615
      %v4697 = vunpack.c.l.b16 %v4616
      %v4698 = vunpack.c.l.b16 %v4617
      %v4699 = vunpack.c.l.b16 %v4618
      %v4700 = vunpack.c.l.b16 %v4619
      %v4701 = vunpack.c.l.b16 %v4620
      %v4702 = vunpack.c.l.b16 %v4621
      %v4703 = vunpack.c.l.b16 %v4622
      %v4704 = vunpack.c.l.b16 %v4623
      %v4705 = vunpack.c.l.b16 %v4624
      %v4706 = vunpack.c.l.b16 %v4625
      %v4707 = vunpack.c.l.b16 %v4626
      %v4708 = vunpack.c.l.b16 %v4627
      %v4709 = vunpack.c.l.b16 %v4628
      %v4710 = vunpack.c.l.b16 %v4629
      %v4711 = vunpack.c.l.b16 %v4630
      %v4712 = vunpack.c.l.b16 %v4631
      %v4713 = vunpack.c.l.b16 %v4632
      %v4714 = vunpack.c.l.b16 %v4633
      %v4715 = vunpack.c.l.b16 %v4634
      %v4716 = vunpack.c.l.b16 %v4635
      %v4717 = vunpack.c.l.b16 %v4636
      %v4718 = vunpack.c.l.b16 %v4637
      %v4719 = vunpack.c.l.b16 %v4638
      %v4720 = vunpack.c.l.b16 %v4639
      %v4721 = vunpack.c.l.b16 %v4640
      %v4722 = vpack.c.b16 %v4691, %v4690
      %v4723 = vpack.c.b16 %v4693, %v4692
      %v4724 = vpack.c.b16 %v4695, %v4694
      %v4725 = vpack.c.b16 %v4697, %v4696
      %v4726 = vpack.c.b16 %v4699, %v4698
      %v4727 = vpack.c.b16 %v4701, %v4700
      %v4728 = vpack.c.b16 %v4703, %v4702
      %v4729 = vpack.c.b16 %v4705, %v4704
      %v4730 = vpack.c.b16 %v4707, %v4706
      %v4731 = vpack.c.b16 %v4709, %v4708
      %v4732 = vpack.c.b16 %v4711, %v4710
      %v4733 = vpack.c.b16 %v4713, %v4712
      %v4734 = vpack.c.b16 %v4715, %v4714
      %v4735 = vpack.c.b16 %v4717, %v4716
      %v4736 = vpack.c.b16 %v4719, %v4718
      %v4737 = vpack.c.b16 %v4721, %v4720
      %v4770 = vunpack.c.l.b16 %v4642
      %v4771 = vunpack.c.l.b16 %v4643
      %v4772 = vunpack.c.l.b16 %v4644
      %v4773 = vunpack.c.l.b16 %v4645
      %v4774 = vunpack.c.l.b16 %v4646
      %v4775 = vunpack.c.l.b16 %v4647
      %v4776 = vunpack.c.l.b16 %v4648
      %v4777 = vunpack.c.l.b16 %v4649
      %v4778 = vunpack.c.l.b16 %v4650
      %v4779 = vunpack.c.l.b16 %v4651
      %v4780 = vunpack.c.l.b16 %v4652
      %v4781 = vunpack.c.l.b16 %v4653
      %v4782 = vunpack.c.l.b16 %v4654
      %v4783 = vunpack.c.l.b16 %v4655
      %v4784 = vunpack.c.l.b16 %v4656
      %v4785 = vunpack.c.l.b16 %v4657
      %v4786 = vpack.c.b16 %v4771, %v4770
      %v4787 = vpack.c.b16 %v4773, %v4772
      %v4788 = vpack.c.b16 %v4775, %v4774
      %v4789 = vpack.c.b16 %v4777, %v4776
      %v4790 = vpack.c.b16 %v4779, %v4778
      %v4791 = vpack.c.b16 %v4781, %v4780
      %v4792 = vpack.c.b16 %v4783, %v4782
      %v4793 = vpack.c.b16 %v4785, %v4784
      %4802 = vmatprep.subr.bf16.mxu0 0
      %4803 = vmatpush1.bf16.msra.mxu0 %v4793
      %4804 = vmatprep.subr.bf16.mxu0 0
      %4805 = vmatpush1.bf16.msra.mxu0 %v4792
      %4806 = vmatprep.subr.bf16.mxu0 0
      %4807 = vmatpush1.bf16.msra.mxu0 %v4791
      %4808 = vmatprep.subr.bf16.mxu0 0
      %4809 = vmatpush1.bf16.msra.mxu0 %v4790
      %4810 = vmatprep.subr.bf16.mxu0 0
      %4811 = vmatpush1.bf16.msra.mxu0 %v4789
      %4812 = vmatprep.subr.bf16.mxu0 0
      %4813 = vmatpush1.bf16.msra.mxu0 %v4788
      %4814 = vmatprep.subr.bf16.mxu0 0
      %4815 = vmatpush1.bf16.msra.mxu0 %v4787
      %4816 = vmatprep.subr.bf16.mxu0 0
      %4817 = vmatpush1.bf16.msra.mxu0 %v4786
      %4818 = vmatprep.subr.bf16.mxu0 0
      %4819 = vmatpush2.bf16.msra.mxu0 0
      %4820 = vmatprep.subr.bf16.mxu0 0
      %4821 = vmatpush2.bf16.msra.mxu0 0
      %4822 = vmatprep.subr.bf16.mxu0 0
      %4823 = vmatpush2.bf16.msra.mxu0 0
      %4824 = vmatprep.subr.bf16.mxu0 0
      %4825 = vmatpush2.bf16.msra.mxu0 0
      %4826 = vmatprep.subr.bf16.mxu0 0
      %4827 = vmatpush2.bf16.msra.mxu0 0
      %4828 = vmatprep.subr.bf16.mxu0 0
      %4829 = vmatpush2.bf16.msra.mxu0 0
      %4830 = vmatprep.subr.bf16.mxu0 0
      %4831 = vmatpush2.bf16.msra.mxu0 0
      %4832 = vmatprep.subr.bf16.mxu0 0
      %4833 = vmatpush2.bf16.msra.mxu0 0
      %4834 = vmatprep.mubr.bf16.mxu0 0
      %4835 = vmatmul.mubr.bf16.gmra.mxu0 %v4722
      %v4836 = vpop.f32.mrf.mxu0
      %v4837 = vadd.f32 0.0, %v4836
      %v4838 = vpop.f32.mrf.mxu0
      %v4839 = vpop.f32.mrf.mxu0
      %v4840 = vadd.f32 0.0, %v4839
      %v4841 = vpop.f32.mrf.mxu0
      %4842 = vmatprep.mubr.bf16.mxu0 0
      %4843 = vmatmul.mubr.bf16.gmra.mxu0 %v4723
      %v4844 = vpop.f32.mrf.mxu0
      %v4845 = vadd.f32 0.0, %v4844
      %v4846 = vpop.f32.mrf.mxu0
      %v4847 = vpop.f32.mrf.mxu0
      %v4848 = vadd.f32 0.0, %v4847
      %v4849 = vpop.f32.mrf.mxu0
      %4850 = vmatprep.mubr.bf16.mxu0 0
      %4851 = vmatmul.mubr.bf16.gmra.mxu0 %v4724
      %v4852 = vpop.f32.mrf.mxu0
      %v4853 = vadd.f32 0.0, %v4852
      %v4854 = vpop.f32.mrf.mxu0
      %v4855 = vpop.f32.mrf.mxu0
      %v4856 = vadd.f32 0.0, %v4855
      %v4857 = vpop.f32.mrf.mxu0
      %4858 = vmatprep.mubr.bf16.mxu0 0
      %4859 = vmatmul.mubr.bf16.gmra.mxu0 %v4725
      %v4860 = vpop.f32.mrf.mxu0
      %v4861 = vadd.f32 0.0, %v4860
      %v4862 = vpop.f32.mrf.mxu0
      %v4863 = vpop.f32.mrf.mxu0
      %v4864 = vadd.f32 0.0, %v4863
      %v4865 = vpop.f32.mrf.mxu0
      %4866 = vmatprep.mubr.bf16.mxu0 0
      %4867 = vmatmul.mubr.bf16.gmra.mxu0 %v4726
      %v4868 = vpop.f32.mrf.mxu0
      %v4869 = vadd.f32 0.0, %v4868
      %v4870 = vpop.f32.mrf.mxu0
      %v4871 = vpop.f32.mrf.mxu0
      %v4872 = vadd.f32 0.0, %v4871
      %v4873 = vpop.f32.mrf.mxu0
      %4874 = vmatprep.mubr.bf16.mxu0 0
      %4875 = vmatmul.mubr.bf16.gmra.mxu0 %v4727
      %v4876 = vpop.f32.mrf.mxu0
      %v4877 = vadd.f32 0.0, %v4876
      %v4878 = vpop.f32.mrf.mxu0
      %v4879 = vpop.f32.mrf.mxu0
      %v4880 = vadd.f32 0.0, %v4879
      %v4881 = vpop.f32.mrf.mxu0
      %4882 = vmatprep.mubr.bf16.mxu0 0
      %4883 = vmatmul.mubr.bf16.gmra.mxu0 %v4728
      %v4884 = vpop.f32.mrf.mxu0
      %v4885 = vadd.f32 0.0, %v4884
      %v4886 = vpop.f32.mrf.mxu0
      %v4887 = vpop.f32.mrf.mxu0
      %v4888 = vadd.f32 0.0, %v4887
      %v4889 = vpop.f32.mrf.mxu0
      %4890 = vmatprep.mubr.bf16.mxu0 0
      %4891 = vmatmul.mubr.bf16.gmra.mxu0 %v4729
      %v4892 = vpop.f32.mrf.mxu0
      %v4893 = vadd.f32 0.0, %v4892
      %v4894 = vpop.f32.mrf.mxu0
      %v4895 = vpop.f32.mrf.mxu0
      %v4896 = vadd.f32 0.0, %v4895
      %v4897 = vpop.f32.mrf.mxu0
      %4898 = vmatprep.mubr.bf16.mxu0 0
      %4899 = vmatmul.mubr.bf16.gmra.mxu0 %v4730
      %v4900 = vpop.f32.mrf.mxu0
      %v4901 = vadd.f32 0.0, %v4900
      %v4902 = vpop.f32.mrf.mxu0
      %v4903 = vpop.f32.mrf.mxu0
      %v4904 = vadd.f32 0.0, %v4903
      %v4905 = vpop.f32.mrf.mxu0
      %4906 = vmatprep.mubr.bf16.mxu0 0
      %4907 = vmatmul.mubr.bf16.gmra.mxu0 %v4731
      %v4908 = vpop.f32.mrf.mxu0
      %v4909 = vadd.f32 0.0, %v4908
      %v4910 = vpop.f32.mrf.mxu0
      %v4911 = vpop.f32.mrf.mxu0
      %v4912 = vadd.f32 0.0, %v4911
      %v4913 = vpop.f32.mrf.mxu0
      %4914 = vmatprep.mubr.bf16.mxu0 0
      %4915 = vmatmul.mubr.bf16.gmra.mxu0 %v4732
      %v4916 = vpop.f32.mrf.mxu0
      %v4917 = vadd.f32 0.0, %v4916
      %v4918 = vpop.f32.mrf.mxu0
      %v4919 = vpop.f32.mrf.mxu0
      %v4920 = vadd.f32 0.0, %v4919
      %v4921 = vpop.f32.mrf.mxu0
      %4922 = vmatprep.mubr.bf16.mxu0 0
      %4923 = vmatmul.mubr.bf16.gmra.mxu0 %v4733
      %v4924 = vpop.f32.mrf.mxu0
      %v4925 = vadd.f32 0.0, %v4924
      %v4926 = vpop.f32.mrf.mxu0
      %v4927 = vpop.f32.mrf.mxu0
      %v4928 = vadd.f32 0.0, %v4927
      %v4929 = vpop.f32.mrf.mxu0
      %4930 = vmatprep.mubr.bf16.mxu0 0
      %4931 = vmatmul.mubr.bf16.gmra.mxu0 %v4734
      %v4932 = vpop.f32.mrf.mxu0
      %v4933 = vadd.f32 0.0, %v4932
      %v4934 = vpop.f32.mrf.mxu0
      %v4935 = vpop.f32.mrf.mxu0
      %v4936 = vadd.f32 0.0, %v4935
      %v4937 = vpop.f32.mrf.mxu0
      %4938 = vmatprep.mubr.bf16.mxu0 0
      %4939 = vmatmul.mubr.bf16.gmra.mxu0 %v4735
      %v4940 = vpop.f32.mrf.mxu0
      %v4941 = vadd.f32 0.0, %v4940
      %v4942 = vpop.f32.mrf.mxu0
      %v4943 = vpop.f32.mrf.mxu0
      %v4944 = vadd.f32 0.0, %v4943
      %v4945 = vpop.f32.mrf.mxu0
      %4946 = vmatprep.mubr.bf16.mxu0 0
      %4947 = vmatmul.mubr.bf16.gmra.mxu0 %v4736
      %v4948 = vpop.f32.mrf.mxu0
      %v4949 = vadd.f32 0.0, %v4948
      %v4950 = vpop.f32.mrf.mxu0
      %v4951 = vpop.f32.mrf.mxu0
      %v4952 = vadd.f32 0.0, %v4951
      %v4953 = vpop.f32.mrf.mxu0
      %4954 = vmatprep.mubr.bf16.mxu0 0
      %4955 = vmatmul.mubr.bf16.gmra.mxu0 %v4737
      %v4956 = vpop.f32.mrf.mxu0
      %v4957 = vadd.f32 0.0, %v4956
      %v4958 = vpop.f32.mrf.mxu0
      %v4959 = vpop.f32.mrf.mxu0
      %v4960 = vadd.f32 0.0, %v4959
      %v4961 = vpop.f32.mrf.mxu0
      %4962 = vdwg.mxu0
      %v4963 = vadd.f32 %v4576, %v4837
      %v4964 = vadd.f32 %v4577, %v4840
      %v4965 = vadd.f32 %v4578, %v4845
      %v4966 = vadd.f32 %v4579, %v4848
      %v4967 = vadd.f32 %v4580, %v4853
      %v4968 = vadd.f32 %v4581, %v4856
      %v4969 = vadd.f32 %v4582, %v4861
      %v4970 = vadd.f32 %v4583, %v4864
      %v4971 = vadd.f32 %v4584, %v4869
      %v4972 = vadd.f32 %v4585, %v4872
      %v4973 = vadd.f32 %v4586, %v4877
      %v4974 = vadd.f32 %v4587, %v4880
      %v4975 = vadd.f32 %v4588, %v4885
      %v4976 = vadd.f32 %v4589, %v4888
      %v4977 = vadd.f32 %v4590, %v4893
      %v4978 = vadd.f32 %v4591, %v4896
      %v4979 = vadd.f32 %v4592, %v4901
      %v4980 = vadd.f32 %v4593, %v4904
      %v4981 = vadd.f32 %v4594, %v4909
      %v4982 = vadd.f32 %v4595, %v4912
      %v4983 = vadd.f32 %v4596, %v4917
      %v4984 = vadd.f32 %v4597, %v4920
      %v4985 = vadd.f32 %v4598, %v4925
      %v4986 = vadd.f32 %v4599, %v4928
      %v4987 = vadd.f32 %v4600, %v4933
      %v4988 = vadd.f32 %v4601, %v4936
      %v4989 = vadd.f32 %v4602, %v4941
      %v4990 = vadd.f32 %v4603, %v4944
      %v4991 = vadd.f32 %v4604, %v4949
      %v4992 = vadd.f32 %v4605, %v4952
      %v4993 = vadd.f32 %v4606, %v4957
      %v4994 = vadd.f32 %v4607, %v4960
      %v4995 = vlaneseq
      %v4996 = vshrl.u32 %v4995, 7
      %v4997 = vsub.s32 0, %v4996
      %v4998 = vrot.slane %v465, %v4997
      %v4999 = vadd.f32 %v4963, %v4998
      %v5000 = vadd.f32 %v4964, %v4998
      %v5001 = vadd.f32 %v4965, %v4998
      %v5002 = vadd.f32 %v4966, %v4998
      %v5003 = vadd.f32 %v4967, %v4998
      %v5004 = vadd.f32 %v4968, %v4998
      %v5005 = vadd.f32 %v4969, %v4998
      %v5006 = vadd.f32 %v4970, %v4998
      %v5007 = vadd.f32 %v4971, %v4998
      %v5008 = vadd.f32 %v4972, %v4998
      %v5009 = vadd.f32 %v4973, %v4998
      %v5010 = vadd.f32 %v4974, %v4998
      %v5011 = vadd.f32 %v4975, %v4998
      %v5012 = vadd.f32 %v4976, %v4998
      %v5013 = vadd.f32 %v4977, %v4998
      %v5014 = vadd.f32 %v4978, %v4998
      %v5015 = vadd.f32 %v4979, %v4998
      %v5016 = vadd.f32 %v4980, %v4998
      %v5017 = vadd.f32 %v4981, %v4998
      %v5018 = vadd.f32 %v4982, %v4998
      %v5019 = vadd.f32 %v4983, %v4998
      %v5020 = vadd.f32 %v4984, %v4998
      %v5021 = vadd.f32 %v4985, %v4998
      %v5022 = vadd.f32 %v4986, %v4998
      %v5023 = vadd.f32 %v4987, %v4998
      %v5024 = vadd.f32 %v4988, %v4998
      %v5025 = vadd.f32 %v4989, %v4998
      %v5026 = vadd.f32 %v4990, %v4998
      %v5027 = vadd.f32 %v4991, %v4998
      %v5028 = vadd.f32 %v4992, %v4998
      %v5029 = vadd.f32 %v4993, %v4998
      %v5030 = vadd.f32 %v4994, %v4998
      %v5031 = vmax.f32 %v4999, 0.0
      %v5032 = vmax.f32 %v5000, 0.0
      %v5033 = vmax.f32 %v5001, 0.0
      %v5034 = vmax.f32 %v5002, 0.0
      %v5035 = vmax.f32 %v5003, 0.0
      %v5036 = vmax.f32 %v5004, 0.0
      %v5037 = vmax.f32 %v5005, 0.0
      %v5038 = vmax.f32 %v5006, 0.0
      %v5039 = vmax.f32 %v5007, 0.0
      %v5040 = vmax.f32 %v5008, 0.0
      %v5041 = vmax.f32 %v5009, 0.0
      %v5042 = vmax.f32 %v5010, 0.0
      %v5043 = vmax.f32 %v5011, 0.0
      %v5044 = vmax.f32 %v5012, 0.0
      %v5045 = vmax.f32 %v5013, 0.0
      %v5046 = vmax.f32 %v5014, 0.0
      %v5047 = vmax.f32 %v5015, 0.0
      %v5048 = vmax.f32 %v5016, 0.0
      %v5049 = vmax.f32 %v5017, 0.0
      %v5050 = vmax.f32 %v5018, 0.0
      %v5051 = vmax.f32 %v5019, 0.0
      %v5052 = vmax.f32 %v5020, 0.0
      %v5053 = vmax.f32 %v5021, 0.0
      %v5054 = vmax.f32 %v5022, 0.0
      %v5055 = vmax.f32 %v5023, 0.0
      %v5056 = vmax.f32 %v5024, 0.0
      %v5057 = vmax.f32 %v5025, 0.0
      %v5058 = vmax.f32 %v5026, 0.0
      %v5059 = vmax.f32 %v5027, 0.0
      %v5060 = vmax.f32 %v5028, 0.0
      %v5061 = vmax.f32 %v5029, 0.0
      %v5062 = vmax.f32 %v5030, 0.0
      %v5063 = vpack.c.bf16 %v5032, %v5031
      %v5064 = vpack.c.bf16 %v5034, %v5033
      %v5065 = vpack.c.bf16 %v5036, %v5035
      %v5066 = vpack.c.bf16 %v5038, %v5037
      %v5067 = vpack.c.bf16 %v5040, %v5039
      %v5068 = vpack.c.bf16 %v5042, %v5041
      %v5069 = vpack.c.bf16 %v5044, %v5043
      %v5070 = vpack.c.bf16 %v5046, %v5045
      %v5071 = vpack.c.bf16 %v5048, %v5047
      %v5072 = vpack.c.bf16 %v5050, %v5049
      %v5073 = vpack.c.bf16 %v5052, %v5051
      %v5074 = vpack.c.bf16 %v5054, %v5053
      %v5075 = vpack.c.bf16 %v5056, %v5055
      %v5076 = vpack.c.bf16 %v5058, %v5057
      %v5077 = vpack.c.bf16 %v5060, %v5059
      %v5078 = vpack.c.bf16 %v5062, %v5061
      %v5079 = vld [vmem:[%s5] sm:$0xf]
      %v5080 = vld [vmem:[%s5 + $0x4] sm:$0xf]
      %v5081 = vld [vmem:[%s5 + $0x8] sm:$0xf]
      %v5082 = vld [vmem:[%s5 + $0xc] sm:$0xf]
      %v5083 = vld [vmem:[%s5 + $0x10] sm:$0xf]
      %v5084 = vld [vmem:[%s5 + $0x14] sm:$0xf]
      %v5085 = vld [vmem:[%s5 + $0x18] sm:$0xf]
      %v5086 = vld [vmem:[%s5 + $0x1c] sm:$0xf]
      %v5087 = vld [vmem:[%s5 + $0x20] sm:$0xf]
      %v5088 = vld [vmem:[%s5 + $0x24] sm:$0xf]
      %v5089 = vld [vmem:[%s5 + $0x28] sm:$0xf]
      %v5090 = vld [vmem:[%s5 + $0x2c] sm:$0xf]
      %v5091 = vld [vmem:[%s5 + $0x30] sm:$0xf]
      %v5092 = vld [vmem:[%s5 + $0x34] sm:$0xf]
      %v5093 = vld [vmem:[%s5 + $0x38] sm:$0xf]
      %v5094 = vld [vmem:[%s5 + $0x3c] sm:$0xf]
      %v5095 = vlaneseq
      %v5096 = vshrl.u32 %v5095, 7
      %v5097 = vsub.s32 0, %v5096
      %v5098 = vrot.slane %v466, %v5097
      %v5115 = vunpack.c.l.b16 %v5079
      %v5116 = vunpack.c.l.b16 %v5080
      %v5117 = vunpack.c.l.b16 %v5081
      %v5118 = vunpack.c.l.b16 %v5082
      %v5119 = vunpack.c.l.b16 %v5083
      %v5120 = vunpack.c.l.b16 %v5084
      %v5121 = vunpack.c.l.b16 %v5085
      %v5122 = vunpack.c.l.b16 %v5086
      %v5123 = vunpack.c.l.b16 %v5087
      %v5124 = vunpack.c.l.b16 %v5088
      %v5125 = vunpack.c.l.b16 %v5089
      %v5126 = vunpack.c.l.b16 %v5090
      %v5127 = vunpack.c.l.b16 %v5091
      %v5128 = vunpack.c.l.b16 %v5092
      %v5129 = vunpack.c.l.b16 %v5093
      %v5130 = vunpack.c.l.b16 %v5094
      %v5131 = vpack.c.b16 %v5116, %v5115
      %v5132 = vpack.c.b16 %v5118, %v5117
      %v5133 = vpack.c.b16 %v5120, %v5119
      %v5134 = vpack.c.b16 %v5122, %v5121
      %v5135 = vpack.c.b16 %v5124, %v5123
      %v5136 = vpack.c.b16 %v5126, %v5125
      %v5137 = vpack.c.b16 %v5128, %v5127
      %v5138 = vpack.c.b16 %v5130, %v5129
      %5147 = vmatprep.subr.bf16.mxu0 0
      %5148 = vmatpush1.bf16.msra.mxu0 %v5138
      %5149 = vmatprep.subr.bf16.mxu0 0
      %5150 = vmatpush1.bf16.msra.mxu0 %v5137
      %5151 = vmatprep.subr.bf16.mxu0 0
      %5152 = vmatpush1.bf16.msra.mxu0 %v5136
      %5153 = vmatprep.subr.bf16.mxu0 0
      %5154 = vmatpush1.bf16.msra.mxu0 %v5135
      %5155 = vmatprep.subr.bf16.mxu0 0
      %5156 = vmatpush1.bf16.msra.mxu0 %v5134
      %5157 = vmatprep.subr.bf16.mxu0 0
      %5158 = vmatpush1.bf16.msra.mxu0 %v5133
      %5159 = vmatprep.subr.bf16.mxu0 0
      %5160 = vmatpush1.bf16.msra.mxu0 %v5132
      %5161 = vmatprep.subr.bf16.mxu0 0
      %5162 = vmatpush1.bf16.msra.mxu0 %v5131
      %5163 = vmatprep.subr.bf16.mxu0 0
      %5164 = vmatpush2.bf16.msra.mxu0 0
      %5165 = vmatprep.subr.bf16.mxu0 0
      %5166 = vmatpush2.bf16.msra.mxu0 0
      %5167 = vmatprep.subr.bf16.mxu0 0
      %5168 = vmatpush2.bf16.msra.mxu0 0
      %5169 = vmatprep.subr.bf16.mxu0 0
      %5170 = vmatpush2.bf16.msra.mxu0 0
      %5171 = vmatprep.subr.bf16.mxu0 0
      %5172 = vmatpush2.bf16.msra.mxu0 0
      %5173 = vmatprep.subr.bf16.mxu0 0
      %5174 = vmatpush2.bf16.msra.mxu0 0
      %5175 = vmatprep.subr.bf16.mxu0 0
      %5176 = vmatpush2.bf16.msra.mxu0 0
      %5177 = vmatprep.subr.bf16.mxu0 0
      %5178 = vmatpush2.bf16.msra.mxu0 0
      %5179 = vmatprep.mubr.bf16.mxu0 0
      %5180 = vmatmul.mubr.bf16.gmra.mxu0 %v5063
      %v5181 = vpop.f32.mrf.mxu0
      %v5182 = vadd.f32 %v5098, %v5181
      %v5183 = vpop.f32.mrf.mxu0
      %v5184 = vpop.f32.mrf.mxu0
      %v5185 = vadd.f32 %v5098, %v5184
      %v5186 = vpop.f32.mrf.mxu0
      %5187 = vmatprep.mubr.bf16.mxu0 0
      %5188 = vmatmul.mubr.bf16.gmra.mxu0 %v5064
      %v5189 = vpop.f32.mrf.mxu0
      %v5190 = vadd.f32 %v5098, %v5189
      %v5191 = vpop.f32.mrf.mxu0
      %v5192 = vpop.f32.mrf.mxu0
      %v5193 = vadd.f32 %v5098, %v5192
      %v5194 = vpop.f32.mrf.mxu0
      %5195 = vmatprep.mubr.bf16.mxu0 0
      %5196 = vmatmul.mubr.bf16.gmra.mxu0 %v5065
      %v5197 = vpop.f32.mrf.mxu0
      %v5198 = vadd.f32 %v5098, %v5197
      %v5199 = vpop.f32.mrf.mxu0
      %v5200 = vpop.f32.mrf.mxu0
      %v5201 = vadd.f32 %v5098, %v5200
      %v5202 = vpop.f32.mrf.mxu0
      %5203 = vmatprep.mubr.bf16.mxu0 0
      %5204 = vmatmul.mubr.bf16.gmra.mxu0 %v5066
      %v5205 = vpop.f32.mrf.mxu0
      %v5206 = vadd.f32 %v5098, %v5205
      %v5207 = vpop.f32.mrf.mxu0
      %v5208 = vpop.f32.mrf.mxu0
      %v5209 = vadd.f32 %v5098, %v5208
      %v5210 = vpop.f32.mrf.mxu0
      %5211 = vmatprep.mubr.bf16.mxu0 0
      %5212 = vmatmul.mubr.bf16.gmra.mxu0 %v5067
      %v5213 = vpop.f32.mrf.mxu0
      %v5214 = vadd.f32 %v5098, %v5213
      %v5215 = vpop.f32.mrf.mxu0
      %v5216 = vpop.f32.mrf.mxu0
      %v5217 = vadd.f32 %v5098, %v5216
      %v5218 = vpop.f32.mrf.mxu0
      %5219 = vmatprep.mubr.bf16.mxu0 0
      %5220 = vmatmul.mubr.bf16.gmra.mxu0 %v5068
      %v5221 = vpop.f32.mrf.mxu0
      %v5222 = vadd.f32 %v5098, %v5221
      %v5223 = vpop.f32.mrf.mxu0
      %v5224 = vpop.f32.mrf.mxu0
      %v5225 = vadd.f32 %v5098, %v5224
      %v5226 = vpop.f32.mrf.mxu0
      %5227 = vmatprep.mubr.bf16.mxu0 0
      %5228 = vmatmul.mubr.bf16.gmra.mxu0 %v5069
      %v5229 = vpop.f32.mrf.mxu0
      %v5230 = vadd.f32 %v5098, %v5229
      %v5231 = vpop.f32.mrf.mxu0
      %v5232 = vpop.f32.mrf.mxu0
      %v5233 = vadd.f32 %v5098, %v5232
      %v5234 = vpop.f32.mrf.mxu0
      %5235 = vmatprep.mubr.bf16.mxu0 0
      %5236 = vmatmul.mubr.bf16.gmra.mxu0 %v5070
      %v5237 = vpop.f32.mrf.mxu0
      %v5238 = vadd.f32 %v5098, %v5237
      %v5239 = vpop.f32.mrf.mxu0
      %v5240 = vpop.f32.mrf.mxu0
      %v5241 = vadd.f32 %v5098, %v5240
      %v5242 = vpop.f32.mrf.mxu0
      %5243 = vmatprep.mubr.bf16.mxu0 0
      %5244 = vmatmul.mubr.bf16.gmra.mxu0 %v5071
      %v5245 = vpop.f32.mrf.mxu0
      %v5246 = vadd.f32 %v5098, %v5245
      %v5247 = vpop.f32.mrf.mxu0
      %v5248 = vpop.f32.mrf.mxu0
      %v5249 = vadd.f32 %v5098, %v5248
      %v5250 = vpop.f32.mrf.mxu0
      %5251 = vmatprep.mubr.bf16.mxu0 0
      %5252 = vmatmul.mubr.bf16.gmra.mxu0 %v5072
      %v5253 = vpop.f32.mrf.mxu0
      %v5254 = vadd.f32 %v5098, %v5253
      %v5255 = vpop.f32.mrf.mxu0
      %v5256 = vpop.f32.mrf.mxu0
      %v5257 = vadd.f32 %v5098, %v5256
      %v5258 = vpop.f32.mrf.mxu0
      %5259 = vmatprep.mubr.bf16.mxu0 0
      %5260 = vmatmul.mubr.bf16.gmra.mxu0 %v5073
      %v5261 = vpop.f32.mrf.mxu0
      %v5262 = vadd.f32 %v5098, %v5261
      %v5263 = vpop.f32.mrf.mxu0
      %v5264 = vpop.f32.mrf.mxu0
      %v5265 = vadd.f32 %v5098, %v5264
      %v5266 = vpop.f32.mrf.mxu0
      %5267 = vmatprep.mubr.bf16.mxu0 0
      %5268 = vmatmul.mubr.bf16.gmra.mxu0 %v5074
      %v5269 = vpop.f32.mrf.mxu0
      %v5270 = vadd.f32 %v5098, %v5269
      %v5271 = vpop.f32.mrf.mxu0
      %v5272 = vpop.f32.mrf.mxu0
      %v5273 = vadd.f32 %v5098, %v5272
      %v5274 = vpop.f32.mrf.mxu0
      %5275 = vmatprep.mubr.bf16.mxu0 0
      %5276 = vmatmul.mubr.bf16.gmra.mxu0 %v5075
      %v5277 = vpop.f32.mrf.mxu0
      %v5278 = vadd.f32 %v5098, %v5277
      %v5279 = vpop.f32.mrf.mxu0
      %v5280 = vpop.f32.mrf.mxu0
      %v5281 = vadd.f32 %v5098, %v5280
      %v5282 = vpop.f32.mrf.mxu0
      %5283 = vmatprep.mubr.bf16.mxu0 0
      %5284 = vmatmul.mubr.bf16.gmra.mxu0 %v5076
      %v5285 = vpop.f32.mrf.mxu0
      %v5286 = vadd.f32 %v5098, %v5285
      %v5287 = vpop.f32.mrf.mxu0
      %v5288 = vpop.f32.mrf.mxu0
      %v5289 = vadd.f32 %v5098, %v5288
      %v5290 = vpop.f32.mrf.mxu0
      %5291 = vmatprep.mubr.bf16.mxu0 0
      %5292 = vmatmul.mubr.bf16.gmra.mxu0 %v5077
      %v5293 = vpop.f32.mrf.mxu0
      %v5294 = vadd.f32 %v5098, %v5293
      %v5295 = vpop.f32.mrf.mxu0
      %v5296 = vpop.f32.mrf.mxu0
      %v5297 = vadd.f32 %v5098, %v5296
      %v5298 = vpop.f32.mrf.mxu0
      %5299 = vmatprep.mubr.bf16.mxu0 0
      %5300 = vmatmul.mubr.bf16.gmra.mxu0 %v5078
      %v5301 = vpop.f32.mrf.mxu0
      %v5302 = vadd.f32 %v5098, %v5301
      %v5303 = vpop.f32.mrf.mxu0
      %v5304 = vpop.f32.mrf.mxu0
      %v5305 = vadd.f32 %v5098, %v5304
      %v5306 = vpop.f32.mrf.mxu0
      %5307 = vdwg.mxu0
      %v5308 = vld [vmem:[%s400] sm:$0xff]
      %v5309 = vld [vmem:[%s400 + $0x8] sm:$0xff]
      %v5310 = vld [vmem:[%s400 + $0x10] sm:$0xff]
      %v5311 = vld [vmem:[%s400 + $0x18] sm:$0xff]
      %v5312 = vld [vmem:[%s400 + $0x20] sm:$0xff]
      %v5313 = vld [vmem:[%s400 + $0x28] sm:$0xff]
      %v5314 = vld [vmem:[%s400 + $0x30] sm:$0xff]
      %v5315 = vld [vmem:[%s400 + $0x38] sm:$0xff]
      %v5316 = vld [vmem:[%s400 + $0x40] sm:$0xff]
      %v5317 = vld [vmem:[%s400 + $0x48] sm:$0xff]
      %v5318 = vld [vmem:[%s400 + $0x50] sm:$0xff]
      %v5319 = vld [vmem:[%s400 + $0x58] sm:$0xff]
      %v5320 = vld [vmem:[%s400 + $0x60] sm:$0xff]
      %v5321 = vld [vmem:[%s400 + $0x68] sm:$0xff]
      %v5322 = vld [vmem:[%s400 + $0x70] sm:$0xff]
      %v5323 = vld [vmem:[%s400 + $0x78] sm:$0xff]
      %v5324 = vld [vmem:[%s400 + $0x80] sm:$0xff]
      %v5325 = vld [vmem:[%s400 + $0x88] sm:$0xff]
      %v5326 = vld [vmem:[%s400 + $0x90] sm:$0xff]
      %v5327 = vld [vmem:[%s400 + $0x98] sm:$0xff]
      %v5328 = vld [vmem:[%s400 + $0xa0] sm:$0xff]
      %v5329 = vld [vmem:[%s400 + $0xa8] sm:$0xff]
      %v5330 = vld [vmem:[%s400 + $0xb0] sm:$0xff]
      %v5331 = vld [vmem:[%s400 + $0xb8] sm:$0xff]
      %v5332 = vld [vmem:[%s400 + $0xc0] sm:$0xff]
      %v5333 = vld [vmem:[%s400 + $0xc8] sm:$0xff]
      %v5334 = vld [vmem:[%s400 + $0xd0] sm:$0xff]
      %v5335 = vld [vmem:[%s400 + $0xd8] sm:$0xff]
      %v5336 = vld [vmem:[%s400 + $0xe0] sm:$0xff]
      %v5337 = vld [vmem:[%s400 + $0xe8] sm:$0xff]
      %v5338 = vld [vmem:[%s400 + $0xf0] sm:$0xff]
      %v5339 = vld [vmem:[%s400 + $0xf8] sm:$0xff]
      %v5340 = vadd.f32 %v5308, %v5182
      %v5341 = vadd.f32 %v5309, %v5185
      %v5342 = vadd.f32 %v5310, %v5190
      %v5343 = vadd.f32 %v5311, %v5193
      %v5344 = vadd.f32 %v5312, %v5198
      %v5345 = vadd.f32 %v5313, %v5201
      %v5346 = vadd.f32 %v5314, %v5206
      %v5347 = vadd.f32 %v5315, %v5209
      %v5348 = vadd.f32 %v5316, %v5214
      %v5349 = vadd.f32 %v5317, %v5217
      %v5350 = vadd.f32 %v5318, %v5222
      %v5351 = vadd.f32 %v5319, %v5225
      %v5352 = vadd.f32 %v5320, %v5230
      %v5353 = vadd.f32 %v5321, %v5233
      %v5354 = vadd.f32 %v5322, %v5238
      %v5355 = vadd.f32 %v5323, %v5241
      %v5356 = vadd.f32 %v5324, %v5246
      %v5357 = vadd.f32 %v5325, %v5249
      %v5358 = vadd.f32 %v5326, %v5254
      %v5359 = vadd.f32 %v5327, %v5257
      %v5360 = vadd.f32 %v5328, %v5262
      %v5361 = vadd.f32 %v5329, %v5265
      %v5362 = vadd.f32 %v5330, %v5270
      %v5363 = vadd.f32 %v5331, %v5273
      %v5364 = vadd.f32 %v5332, %v5278
      %v5365 = vadd.f32 %v5333, %v5281
      %v5366 = vadd.f32 %v5334, %v5286
      %v5367 = vadd.f32 %v5335, %v5289
      %v5368 = vadd.f32 %v5336, %v5294
      %v5369 = vadd.f32 %v5337, %v5297
      %v5370 = vadd.f32 %v5338, %v5302
      %v5371 = vadd.f32 %v5339, %v5305
      %v5372 = vmax.f32 %v5340, 0.0
      %v5373 = vmax.f32 %v5341, 0.0
      %v5374 = vmax.f32 %v5342, 0.0
      %v5375 = vmax.f32 %v5343, 0.0
      %v5376 = vmax.f32 %v5344, 0.0
      %v5377 = vmax.f32 %v5345, 0.0
      %v5378 = vmax.f32 %v5346, 0.0
      %v5379 = vmax.f32 %v5347, 0.0
      %v5380 = vmax.f32 %v5348, 0.0
      %v5381 = vmax.f32 %v5349, 0.0
      %v5382 = vmax.f32 %v5350, 0.0
      %v5383 = vmax.f32 %v5351, 0.0
      %v5384 = vmax.f32 %v5352, 0.0
      %v5385 = vmax.f32 %v5353, 0.0
      %v5386 = vmax.f32 %v5354, 0.0
      %v5387 = vmax.f32 %v5355, 0.0
      %v5388 = vmax.f32 %v5356, 0.0
      %v5389 = vmax.f32 %v5357, 0.0
      %v5390 = vmax.f32 %v5358, 0.0
      %v5391 = vmax.f32 %v5359, 0.0
      %v5392 = vmax.f32 %v5360, 0.0
      %v5393 = vmax.f32 %v5361, 0.0
      %v5394 = vmax.f32 %v5362, 0.0
      %v5395 = vmax.f32 %v5363, 0.0
      %v5396 = vmax.f32 %v5364, 0.0
      %v5397 = vmax.f32 %v5365, 0.0
      %v5398 = vmax.f32 %v5366, 0.0
      %v5399 = vmax.f32 %v5367, 0.0
      %v5400 = vmax.f32 %v5368, 0.0
      %v5401 = vmax.f32 %v5369, 0.0
      %v5402 = vmax.f32 %v5370, 0.0
      %v5403 = vmax.f32 %v5371, 0.0
      %5404 = vst [vmem:[%s445] sm:$0xff] %v5372
      %5405 = vst [vmem:[%s445 + $0x8] sm:$0xff] %v5373
      %5406 = vst [vmem:[%s445 + $0x10] sm:$0xff] %v5374
      %5407 = vst [vmem:[%s445 + $0x18] sm:$0xff] %v5375
      %5408 = vst [vmem:[%s445 + $0x20] sm:$0xff] %v5376
      %5409 = vst [vmem:[%s445 + $0x28] sm:$0xff] %v5377
      %5410 = vst [vmem:[%s445 + $0x30] sm:$0xff] %v5378
      %5411 = vst [vmem:[%s445 + $0x38] sm:$0xff] %v5379
      %5412 = vst [vmem:[%s445 + $0x40] sm:$0xff] %v5380
      %5413 = vst [vmem:[%s445 + $0x48] sm:$0xff] %v5381
      %5414 = vst [vmem:[%s445 + $0x50] sm:$0xff] %v5382
      %5415 = vst [vmem:[%s445 + $0x58] sm:$0xff] %v5383
      %5416 = vst [vmem:[%s445 + $0x60] sm:$0xff] %v5384
      %5417 = vst [vmem:[%s445 + $0x68] sm:$0xff] %v5385
      %5418 = vst [vmem:[%s445 + $0x70] sm:$0xff] %v5386
      %5419 = vst [vmem:[%s445 + $0x78] sm:$0xff] %v5387
      %5420 = vst [vmem:[%s445 + $0x80] sm:$0xff] %v5388
      %5421 = vst [vmem:[%s445 + $0x88] sm:$0xff] %v5389
      %5422 = vst [vmem:[%s445 + $0x90] sm:$0xff] %v5390
      %5423 = vst [vmem:[%s445 + $0x98] sm:$0xff] %v5391
      %5424 = vst [vmem:[%s445 + $0xa0] sm:$0xff] %v5392
      %5425 = vst [vmem:[%s445 + $0xa8] sm:$0xff] %v5393
      %5426 = vst [vmem:[%s445 + $0xb0] sm:$0xff] %v5394
      %5427 = vst [vmem:[%s445 + $0xb8] sm:$0xff] %v5395
      %5428 = vst [vmem:[%s445 + $0xc0] sm:$0xff] %v5396
      %5429 = vst [vmem:[%s445 + $0xc8] sm:$0xff] %v5397
      %5430 = vst [vmem:[%s445 + $0xd0] sm:$0xff] %v5398
      %5431 = vst [vmem:[%s445 + $0xd8] sm:$0xff] %v5399
      %5432 = vst [vmem:[%s445 + $0xe0] sm:$0xff] %v5400
      %5433 = vst [vmem:[%s445 + $0xe8] sm:$0xff] %v5401
      %5434 = vst [vmem:[%s445 + $0xf0] sm:$0xff] %v5402
      %5435 = vst [vmem:[%s445 + $0xf8] sm:$0xff] %v5403
      %s5436 = smul.u32 16, %s23
      %p5437 = scmp.lt.s32.totalorder %s22, 1
      %s5438 = scalar_select %p5437, %s22, 1
      %p5439 = scmp.lt.s32.totalorder %s5436, 15
      %s5440 = scalar_select %p5439, %s5436, 15
      %s5441 = smul.addr %s5440, 2
      %s5442 = smul.addr %s5438, 32
      %s5443 = sadd.s32 %s5441, %s5442
      %s5444 = smul.addr %s5443, 8
      %s5445 = scalar_lea.vmem %s7, %s5444
      // Predicated region
      $region49: #{res_horizon_pallas.1} parent=47 // pred_check
        %p5446 = pneg %p234
      $region50: #{res_horizon_pallas.1} parent=47 // pred_check_branch
        %5448 = sbr.rel (%p5446) target = $region52
      $region51: #{res_horizon_pallas.1} parent=47 // pred_region
        %s5449 = smul.u32 16, %s23
      $region52: #{res_horizon_pallas.1} parent=47 // pred_fallthru
        _
    $region48: #{res_horizon_pallas.1} parent=5 // pred_fallthru
      _
    %p5450 = scmp.le.s32.totalorder 2, %s13
    // Predicated region
    $region53: #{res_horizon_pallas.1} parent=5 // pred_check
      %p5451 = pneg %p5450
    $region54: #{res_horizon_pallas.1} parent=5 // pred_check_branch
      %5453 = sbr.rel (%p5451) target = $region56
    $region55: #{res_horizon_pallas.1} parent=5 // pred_region
      %s5454 = ssub.s32 %s13, 2
      // Predicated region
      $region57: #{res_horizon_pallas.1} parent=55 // pred_check
        %p5455 = pneg %p240
      $region58: #{res_horizon_pallas.1} parent=55 // pred_check_branch
        %5457 = sbr.rel (%p5455) target = $region60
      $region59: #{res_horizon_pallas.1} parent=55 // pred_region
        %s5458 = smul.u32 16, %s25
        %p5459 = scmp.lt.s32.totalorder %s24, 1
        %s5460 = scalar_select %p5459, %s24, 1
        %p5461 = scmp.lt.s32.totalorder %s5458, 15
        %s5462 = scalar_select %p5461, %s5458, 15
        %s5463 = smul.addr %s5462, 2
        %s5464 = smul.addr %s5460, 32
        %s5465 = sadd.s32 %s5463, %s5464
        %s5466 = smul.addr %s5465, 8
        %s5467 = scalar_lea.vmem %s7, %s5466
      $region60: #{res_horizon_pallas.1} parent=55 // pred_fallthru
        _
    $region56: #{res_horizon_pallas.1} parent=5 // pred_fallthru
      _
  $region6: #{res_horizon_pallas.1} parent=0 // loop_footer
    %s17 = sadd.s32 1, %s13
  $region7: #{res_horizon_pallas.1} parent=0 // loop_footer_branch
    %12 = sbr.rel target = $region3
  $region8: #{res_horizon_pallas.1} parent=0 // loop_exit
    _

</llo_original>
